<compile_context>
chip_gen: v5e
topology: v5e:2x2
jax: 0.10.0
libtpu: 0.0.40
codegen_flags: <defaults>
</compile_context>

<pallas_src>
import functools

import jax
import jax.numpy as jnp
from jax.experimental import pallas as pl
from jax.experimental.pallas import tpu as pltpu

_BN_EPS = 1e-5


def _round_up(x, m):
    return ((x + m - 1) // m) * m


# ----------------------------- Pallas kernel --------------------------------
def _fused_kernel(p_ref, w_ref, shift_ref, o_ref, *, act):
    # (TM, Kp) @ (Kp, Cp) on the MXU with f32 accumulation.
    acc = jnp.dot(p_ref[...], w_ref[...], preferred_element_type=jnp.float32)
    y = acc + shift_ref[...]                 # bias + eval-BN shift (scale pre-folded)
    if act == "leaky_relu":
        y = jnp.where(y > 0, y, 0.2 * y)
    elif act == "sigmoid":
        y = jax.nn.sigmoid(y)
    o_ref[...] = y.astype(o_ref.dtype)


def _choose_tm(m):
    """Bounded row tile; aim for >=2 grid steps (v7x 2-TC split) without VMEM risk."""
    if m >= 512:
        return 256
    if m >= 16:
        return _round_up((m + 1) // 2, 8)
    return _round_up(max(m, 1), 8)


def fused_matmul_shift_act(rows, w2d, shift, act, mxu_dtype=jnp.float32):
    """rows (M,K) @ w2d (K,Cout) + shift -> activation, with lane-aligned padding."""
    M, K = rows.shape
    Cout = w2d.shape[1]

    Kp = _round_up(K, 128)       # lane-dense LHS loads, aligned contraction
    Cp = _round_up(Cout, 128)    # lane-dense (unmasked) output stores, full MXU width
    TM = _choose_tm(M)
    Mp = _round_up(M, TM)

    p = jnp.pad(rows.astype(mxu_dtype), ((0, Mp - M), (0, Kp - K)))
    w = jnp.pad(w2d.astype(mxu_dtype), ((0, Kp - K), (0, Cp - Cout)))
    s = jnp.pad(shift.reshape(1, Cout).astype(jnp.float32), ((0, 0), (0, Cp - Cout)))

    out = pl.pallas_call(
        functools.partial(_fused_kernel, act=act),
        out_shape=jax.ShapeDtypeStruct((Mp, Cp), jnp.float32),
        grid=(Mp // TM,),
        in_specs=[
            pl.BlockSpec((TM, Kp), lambda i: (i, 0)),   # row tile, pipelined over M
            pl.BlockSpec((Kp, Cp), lambda i: (0, 0)),   # folded weight, resident
            pl.BlockSpec((1, Cp), lambda i: (0, 0)),    # per-channel shift
        ],
        out_specs=pl.BlockSpec((TM, Cp), lambda i: (i, 0)),
        compiler_params=pltpu.CompilerParams(dimension_semantics=("parallel",)),
    )(p, w, s)
    return out[:M, :Cout]


# ------------------------------ layer lowering -------------------------------
def _fold_bn(bias, bn, cout):
    """Fold conv bias + eval-mode BatchNorm into per-channel (scale, shift)."""
    if bn is None:
        return jnp.ones((cout,), jnp.float32), bias
    gamma, beta, mean, var = bn
    s = gamma * jax.lax.rsqrt(var + _BN_EPS)
    return s, (bias - mean) * s + beta


def im2col(x_nhwc, k, stride, pad):
    """k x k patches (order dy, dx, cin) -> ((N*Ho*Wo, k*k*C), Ho, Wo)."""
    xp = jnp.pad(x_nhwc, ((0, 0), (pad, pad), (pad, pad), (0, 0)))
    N, Hp, Wp, C = xp.shape
    Ho = (Hp - k) // stride + 1
    Wo = (Wp - k) // stride + 1
    cols = []
    for dy in range(k):
        for dx in range(k):
            cols.append(
                xp[:, dy:dy + stride * (Ho - 1) + 1:stride,
                   dx:dx + stride * (Wo - 1) + 1:stride, :]
            )
    patches = jnp.concatenate(cols, axis=-1)
    return patches.reshape(N * Ho * Wo, k * k * C), Ho, Wo


def conv_layer(x, w, b, bn, stride, pad, act, mxu_dtype):
    """Conv2d(k, stride, pad) + eval-BN + activation via one fused Pallas matmul."""
    N = x.shape[0]
    cout, cin, k, _ = w.shape
    patches, Ho, Wo = im2col(x, k, stride, pad)
    w2d = jnp.transpose(w, (2, 3, 1, 0)).reshape(k * k * cin, cout)
    scale, shift = _fold_bn(b, bn, cout)
    w2d = w2d * scale[None, :]          # fold BN scale into the weights (host side)
    y = fused_matmul_shift_act(patches, w2d, shift, act, mxu_dtype)
    return y.reshape(N, Ho, Wo, cout)


def deconv2x_phase(x, w_t, b, bn, act, mxu_dtype):
    """ConvTranspose2d(k=3, stride=2, padding=1, output_padding=1) via sub-pixel
    (phase) decomposition: one lane-dense matmul on the UNDILATED input.
        y[n, 2i+a, 2j+b, co] = sum_{dy,dx in {0,1}, ci}
            x[n, i+dy, j+dx, ci] * W_t[ci, co, a+1-2*dy, b+1-2*dx]   (taps in [0,3))
    """
    N, H, W, Cin = x.shape
    Cout = w_t.shape[1]

    # 2x2 neighborhood patches (hi-padded by 1 == output_padding rows/cols).
    xp = jnp.pad(x, ((0, 0), (0, 1), (0, 1), (0, 0)))
    patches = jnp.concatenate(
        [
            xp[:, 0:H, 0:W, :],        # (dy, dx) = (0, 0)
            xp[:, 0:H, 1:W + 1, :],    # (0, 1)
            xp[:, 1:H + 1, 0:W, :],    # (1, 0)
            xp[:, 1:H + 1, 1:W + 1, :],  # (1, 1)
        ],
        axis=-1,
    ).reshape(N * H * W, 4 * Cin)

    zeros = jnp.zeros((Cin, Cout), jnp.float32)

    def tap(kh, kw):
        if 0 <= kh < 3 and 0 <= kw < 3:
            return w_t[:, :, kh, kw]
        return zeros

    # Rows: neighbor (dy, dx); columns: phase (a, b) blocks of width Cout.
    w_blocks = []
    for dy in (0, 1):
        for dx in (0, 1):
            row = [tap(a + 1 - 2 * dy, b + 1 - 2 * dx)
                   for a in (0, 1) for b in (0, 1)]
            w_blocks.append(jnp.concatenate(row, axis=1))       # (Cin, 4*Cout)
    w_all = jnp.concatenate(w_blocks, axis=0)                   # (4*Cin, 4*Cout)

    scale, shift = _fold_bn(b, bn, Cout)
    w_all = w_all * jnp.tile(scale, 4)[None, :]
    shift_all = jnp.tile(shift, 4)

    y = fused_matmul_shift_act(patches, w_all, shift_all, act, mxu_dtype)
    y = y.reshape(N, H, W, 2, 2, Cout).transpose(0, 1, 3, 2, 4, 5)
    return y.reshape(N, 2 * H, 2 * W, Cout)


def autoencoder_forward(x_nchw, params, mxu_dtype=jnp.float32):
    x = jnp.transpose(x_nchw, (0, 2, 3, 1)).astype(jnp.float32)  # NCHW -> NHWC

    # encoder: Conv2d(k=3, pad=1) -> BN(eval) -> LeakyReLU(0.2)
    for layer in params["enc"]:
        x = conv_layer(x, layer["w"], layer["b"], layer["bn"], layer["stride"],
                       1, "leaky_relu", mxu_dtype)

    # decoder: ConvTranspose2d -> BN(eval)+LeakyReLU / Sigmoid
    for layer in params["dec"]:
        w_t, b, bn = layer["w"], layer["b"], layer["bn"]
        stride, op, act = layer["stride"], layer["op"], layer["act"]
        if stride == 2:
            assert op == 1 and w_t.shape[2] == 3
            x = deconv2x_phase(x, w_t, b, bn, act, mxu_dtype)
        else:
            # stride-1 deconv == conv with spatially-flipped, channel-swapped kernel
            w_c = jnp.transpose(jnp.flip(w_t, axis=(2, 3)), (1, 0, 2, 3))
            x = conv_layer(x, w_c, b, bn, 1, 1, act, mxu_dtype)

    return jnp.transpose(x, (0, 3, 1, 2))  # NHWC -> NCHW


# --------------------------- pure-JAX reference ------------------------------
def _bn_eval(y, bn):
    if bn is None:
        return y
    gamma, beta, mean, var = bn
    return (y - mean) * (gamma * jax.lax.rsqrt(var + _BN_EPS)) + beta


def autoencoder_reference(x_nchw, params):
    """Independent pure-JAX reference (lax.conv), PyTorch eval-mode semantics."""
    x = jnp.transpose(x_nchw, (0, 2, 3, 1)).astype(jnp.float32)
    dn = ("NHWC", "HWIO", "NHWC")
    hi = jax.lax.Precision.HIGHEST
    for layer in params["enc"]:
        w, b, bn, s = layer["w"], layer["b"], layer["bn"], layer["stride"]
        y = jax.lax.conv_general_dilated(
            x, jnp.transpose(w, (2, 3, 1, 0)), (s, s), ((1, 1), (1, 1)),
            dimension_numbers=dn, precision=hi) + b
        x = jax.nn.leaky_relu(_bn_eval(y, bn), 0.2)
    for layer in params["dec"]:
        w_t, b, bn = layer["w"], layer["b"], layer["bn"]
        s, op, act = layer["stride"], layer["op"], layer["act"]
        k = w_t.shape[2]
        w_hwio = jnp.transpose(jnp.flip(w_t, axis=(2, 3)), (2, 3, 0, 1))
        pad = ((k - 2, k - 2 + op), (k - 2, k - 2 + op))
        y = jax.lax.conv_general_dilated(
            x, w_hwio, (1, 1), pad, lhs_dilation=(s, s),
            dimension_numbers=dn, precision=hi) + b
        y = _bn_eval(y, bn)
        x = jax.nn.leaky_relu(y, 0.2) if act == "leaky_relu" else jax.nn.sigmoid(y)
    return jnp.transpose(x, (0, 3, 1, 2))


# --------------------------- deterministic params ----------------------------
def init_params(key):
    keys = iter(jax.random.split(key, 64))

    def conv_w(cout, cin, k):      # PyTorch Conv2d layout (Cout, Cin, k, k)
        return 0.1 * jax.random.normal(next(keys), (cout, cin, k, k), jnp.float32)

    def deconv_w(cin, cout, k):    # PyTorch ConvTranspose2d layout (Cin, Cout, k, k)
        return 0.1 * jax.random.normal(next(keys), (cin, cout, k, k), jnp.float32)

    def bias(c):
        return 0.05 * jax.random.normal(next(keys), (c,), jnp.float32)

    def bn(c):  # (gamma, beta, running_mean, running_var) -- eval-mode BatchNorm
        gamma = 1.0 + 0.1 * jax.random.normal(next(keys), (c,), jnp.float32)
        beta = 0.1 * jax.random.normal(next(keys), (c,), jnp.float32)
        mean = 0.1 * jax.random.normal(next(keys), (c,), jnp.float32)
        var = 1.0 + 0.5 * jax.random.uniform(next(keys), (c,), jnp.float32)
        return (gamma, beta, mean, var)

    return {
        "enc": [
            {"w": conv_w(32, 3, 3),  "b": bias(32), "bn": bn(32), "stride": 1},
            {"w": conv_w(64, 32, 3), "b": bias(64), "bn": bn(64), "stride": 2},
            {"w": conv_w(64, 64, 3), "b": bias(64), "bn": bn(64), "stride": 2},
        ],
        "dec": [
            {"w": deconv_w(64, 64, 3), "b": bias(64), "bn": bn(64), "stride": 2, "op": 1, "act": "leaky_relu"},
            {"w": deconv_w(64, 32, 3), "b": bias(32), "bn": bn(32), "stride": 2, "op": 1, "act": "leaky_relu"},
            {"w": deconv_w(32, 3, 3),  "b": bias(3),  "bn": None,   "stride": 1, "op": 0, "act": "sigmoid"},
        ],
    }


if __name__ == "__main__":
    key = jax.random.PRNGKey(0)
    kx, kp = jax.random.split(key)
    x = jax.random.uniform(kx, (2, 3, 16, 16), jnp.float32)   # NCHW, like PyTorch
    params = init_params(kp)

    fwd = jax.jit(lambda inp: autoencoder_forward(inp, params))
    ref_fn = jax.jit(lambda inp: autoencoder_reference(inp, params))

    out = jax.block_until_ready(fwd(x))
    ref = jax.block_until_ready(ref_fn(x))

    assert out.shape == (2, 3, 16, 16), out.shape
    assert out.dtype == jnp.float32
    assert bool(jnp.all(jnp.isfinite(out)))
    assert bool(jnp.allclose(out, ref, atol=2e-4, rtol=1e-3)), float(
        jnp.max(jnp.abs(out - ref)))
    print("KERNEL_OK")
</pallas_src>

<mosaic_0001>
module attributes {stable_mosaic.version = 11 : i64} {
  func.func @_fused_kernel(%arg0: i32, %arg1: memref<256x128xf32, #tpu.memory_space<vmem>>, %arg2: memref<128x128xf32, #tpu.memory_space<vmem>>, %arg3: memref<1x128xf32, #tpu.memory_space<vmem>>, %arg4: memref<256x128xf32, #tpu.memory_space<vmem>>) attributes {dimension_semantics = [#tpu.dimension_semantics<parallel>], iteration_bounds = array<i64: 2>, scalar_prefetch = 0 : i64, scratch_operands = 0 : i64, tpu.core_type = #tpu.core_type<tc>, window_params = [{transform_indices = @transform_0, window_bounds = array<i64: 256, 128>}, {pipeline_mode = #tpu.pipeline_mode<synchronous>, transform_indices = @transform_1, window_bounds = array<i64: 128, 128>}, {pipeline_mode = #tpu.pipeline_mode<synchronous>, transform_indices = @transform_2, window_bounds = array<i64: 1, 128>}, {transform_indices = @transform_3, window_bounds = array<i64: 256, 128>}]} {
    %c0 = arith.constant 0 : index
    %c0_0 = arith.constant 0 : index
    %0 = vector.load %arg1[%c0, %c0_0] : memref<256x128xf32, #tpu.memory_space<vmem>>, vector<256x128xf32>
    %c0_1 = arith.constant 0 : index
    %c0_2 = arith.constant 0 : index
    %1 = vector.load %arg2[%c0_1, %c0_2] : memref<128x128xf32, #tpu.memory_space<vmem>>, vector<128x128xf32>
    %cst = arith.constant dense<0.000000e+00> : vector<256x128xf32>
    %2 = tpu.matmul %0, %1, %cst {dimension_numbers = #tpu.dot_dimension_numbers<[1], [0], [0], [1], [0, 0, 1, 1], [], []>} : vector<256x128xf32>, vector<128x128xf32>, vector<256x128xf32> -> vector<256x128xf32>
    %c0_3 = arith.constant 0 : index
    %c0_4 = arith.constant 0 : index
    %3 = vector.load %arg3[%c0_3, %c0_4] : memref<1x128xf32, #tpu.memory_space<vmem>>, vector<1x128xf32>
    %4 = vector.broadcast %3 : vector<1x128xf32> to vector<256x128xf32>
    %5 = arith.addf %2, %4 : vector<256x128xf32>
    %cst_5 = arith.constant 0.000000e+00 : f32
    %6 = vector.broadcast %cst_5 : f32 to vector<256x128xf32>
    %7 = arith.cmpf ogt, %5, %6 : vector<256x128xf32>
    %cst_6 = arith.constant 2.000000e-01 : f32
    %8 = vector.broadcast %cst_6 : f32 to vector<256x128xf32>
    %9 = arith.mulf %8, %5 : vector<256x128xf32>
    %10 = arith.select %7, %5, %9 : vector<256x128xi1>, vector<256x128xf32>
    %c0_7 = arith.constant 0 : index
    %c0_8 = arith.constant 0 : index
    %11 = vector.load %arg4[%c0_7, %c0_8] : memref<256x128xf32, #tpu.memory_space<vmem>>, vector<256x128xf32>
    tpu.vector_store %arg4[%c0_7, %c0_8], %10 {strides = array<i32>} : memref<256x128xf32, #tpu.memory_space<vmem>>, vector<256x128xf32>,
    return
  }
  func.func @transform_0(%arg0: i32) -> (i32, i32) {
    %c0_i32 = arith.constant 0 : i32
    %c0_i32_0 = arith.constant 0 : i32
    return %arg0, %c0_i32 : i32, i32
  }
  func.func @transform_1(%arg0: i32) -> (i32, i32) {
    %c0_i32 = arith.constant 0 : i32
    %c0_i32_0 = arith.constant 0 : i32
    %c0_i32_1 = arith.constant 0 : i32
    return %c0_i32, %c0_i32_0 : i32, i32
  }
  func.func @transform_2(%arg0: i32) -> (i32, i32) {
    %c0_i32 = arith.constant 0 : i32
    %c0_i32_0 = arith.constant 0 : i32
    %c0_i32_1 = arith.constant 0 : i32
    return %c0_i32, %c0_i32_0 : i32, i32
  }
  func.func @transform_3(%arg0: i32) -> (i32, i32) {
    %c0_i32 = arith.constant 0 : i32
    %c0_i32_0 = arith.constant 0 : i32
    return %arg0, %c0_i32 : i32, i32
  }
}

module attributes {stable_mosaic.version = 11 : i64} {
  func.func @_fused_kernel(%arg0: i32, %arg1: memref<64x384xf32, #tpu.memory_space<vmem>>, %arg2: memref<384x128xf32, #tpu.memory_space<vmem>>, %arg3: memref<1x128xf32, #tpu.memory_space<vmem>>, %arg4: memref<64x128xf32, #tpu.memory_space<vmem>>) attributes {dimension_semantics = [#tpu.dimension_semantics<parallel>], iteration_bounds = array<i64: 2>, scalar_prefetch = 0 : i64, scratch_operands = 0 : i64, tpu.core_type = #tpu.core_type<tc>, window_params = [{transform_indices = @transform_0, window_bounds = array<i64: 64, 384>}, {pipeline_mode = #tpu.pipeline_mode<synchronous>, transform_indices = @transform_1, window_bounds = array<i64: 384, 128>}, {pipeline_mode = #tpu.pipeline_mode<synchronous>, transform_indices = @transform_2, window_bounds = array<i64: 1, 128>}, {transform_indices = @transform_3, window_bounds = array<i64: 64, 128>}]} {
    %c0 = arith.constant 0 : index
    %c0_0 = arith.constant 0 : index
    %0 = vector.load %arg1[%c0, %c0_0] : memref<64x384xf32, #tpu.memory_space<vmem>>, vector<64x384xf32>
    %c0_1 = arith.constant 0 : index
    %c0_2 = arith.constant 0 : index
    %1 = vector.load %arg2[%c0_1, %c0_2] : memref<384x128xf32, #tpu.memory_space<vmem>>, vector<384x128xf32>
    %cst = arith.constant dense<0.000000e+00> : vector<64x128xf32>
    %2 = tpu.matmul %0, %1, %cst {dimension_numbers = #tpu.dot_dimension_numbers<[1], [0], [0], [1], [0, 0, 1, 1], [], []>} : vector<64x384xf32>, vector<384x128xf32>, vector<64x128xf32> -> vector<64x128xf32>
    %c0_3 = arith.constant 0 : index
    %c0_4 = arith.constant 0 : index
    %3 = vector.load %arg3[%c0_3, %c0_4] : memref<1x128xf32, #tpu.memory_space<vmem>>, vector<1x128xf32>
    %4 = vector.broadcast %3 : vector<1x128xf32> to vector<64x128xf32>
    %5 = arith.addf %2, %4 : vector<64x128xf32>
    %cst_5 = arith.constant 0.000000e+00 : f32
    %6 = vector.broadcast %cst_5 : f32 to vector<64x128xf32>
    %7 = arith.cmpf ogt, %5, %6 : vector<64x128xf32>
    %cst_6 = arith.constant 2.000000e-01 : f32
    %8 = vector.broadcast %cst_6 : f32 to vector<64x128xf32>
    %9 = arith.mulf %8, %5 : vector<64x128xf32>
    %10 = arith.select %7, %5, %9 : vector<64x128xi1>, vector<64x128xf32>
    %c0_7 = arith.constant 0 : index
    %c0_8 = arith.constant 0 : index
    %11 = vector.load %arg4[%c0_7, %c0_8] : memref<64x128xf32, #tpu.memory_space<vmem>>, vector<64x128xf32>
    tpu.vector_store %arg4[%c0_7, %c0_8], %10 {strides = array<i32>} : memref<64x128xf32, #tpu.memory_space<vmem>>, vector<64x128xf32>,
    return
  }
  func.func @transform_0(%arg0: i32) -> (i32, i32) {
    %c0_i32 = arith.constant 0 : i32
    %c0_i32_0 = arith.constant 0 : i32
    return %arg0, %c0_i32 : i32, i32
  }
  func.func @transform_1(%arg0: i32) -> (i32, i32) {
    %c0_i32 = arith.constant 0 : i32
    %c0_i32_0 = arith.constant 0 : i32
    %c0_i32_1 = arith.constant 0 : i32
    return %c0_i32, %c0_i32_0 : i32, i32
  }
  func.func @transform_2(%arg0: i32) -> (i32, i32) {
    %c0_i32 = arith.constant 0 : i32
    %c0_i32_0 = arith.constant 0 : i32
    %c0_i32_1 = arith.constant 0 : i32
    return %c0_i32, %c0_i32_0 : i32, i32
  }
  func.func @transform_3(%arg0: i32) -> (i32, i32) {
    %c0_i32 = arith.constant 0 : i32
    %c0_i32_0 = arith.constant 0 : i32
    return %arg0, %c0_i32 : i32, i32
  }
}

module attributes {stable_mosaic.version = 11 : i64} {
  func.func @_fused_kernel(%arg0: i32, %arg1: memref<16x256xf32, #tpu.memory_space<vmem>>, %arg2: memref<256x256xf32, #tpu.memory_space<vmem>>, %arg3: memref<1x256xf32, #tpu.memory_space<vmem>>, %arg4: memref<16x256xf32, #tpu.memory_space<vmem>>) attributes {dimension_semantics = [#tpu.dimension_semantics<parallel>], iteration_bounds = array<i64: 2>, scalar_prefetch = 0 : i64, scratch_operands = 0 : i64, tpu.core_type = #tpu.core_type<tc>, window_params = [{transform_indices = @transform_0, window_bounds = array<i64: 16, 256>}, {pipeline_mode = #tpu.pipeline_mode<synchronous>, transform_indices = @transform_1, window_bounds = array<i64: 256, 256>}, {pipeline_mode = #tpu.pipeline_mode<synchronous>, transform_indices = @transform_2, window_bounds = array<i64: 1, 256>}, {transform_indices = @transform_3, window_bounds = array<i64: 16, 256>}]} {
    %c0 = arith.constant 0 : index
    %c0_0 = arith.constant 0 : index
    %0 = vector.load %arg1[%c0, %c0_0] : memref<16x256xf32, #tpu.memory_space<vmem>>, vector<16x256xf32>
    %c0_1 = arith.constant 0 : index
    %c0_2 = arith.constant 0 : index
    %1 = vector.load %arg2[%c0_1, %c0_2] : memref<256x256xf32, #tpu.memory_space<vmem>>, vector<256x256xf32>
    %cst = arith.constant dense<0.000000e+00> : vector<16x256xf32>
    %2 = tpu.matmul %0, %1, %cst {dimension_numbers = #tpu.dot_dimension_numbers<[1], [0], [0], [1], [0, 0, 1, 1], [], []>} : vector<16x256xf32>, vector<256x256xf32>, vector<16x256xf32> -> vector<16x256xf32>
    %c0_3 = arith.constant 0 : index
    %c0_4 = arith.constant 0 : index
    %3 = vector.load %arg3[%c0_3, %c0_4] : memref<1x256xf32, #tpu.memory_space<vmem>>, vector<1x256xf32>
    %4 = vector.broadcast %3 : vector<1x256xf32> to vector<16x256xf32>
    %5 = arith.addf %2, %4 : vector<16x256xf32>
    %cst_5 = arith.constant 0.000000e+00 : f32
    %6 = vector.broadcast %cst_5 : f32 to vector<16x256xf32>
    %7 = arith.cmpf ogt, %5, %6 : vector<16x256xf32>
    %cst_6 = arith.constant 2.000000e-01 : f32
    %8 = vector.broadcast %cst_6 : f32 to vector<16x256xf32>
    %9 = arith.mulf %8, %5 : vector<16x256xf32>
    %10 = arith.select %7, %5, %9 : vector<16x256xi1>, vector<16x256xf32>
    %c0_7 = arith.constant 0 : index
    %c0_8 = arith.constant 0 : index
    %11 = vector.load %arg4[%c0_7, %c0_8] : memref<16x256xf32, #tpu.memory_space<vmem>>, vector<16x256xf32>
    tpu.vector_store %arg4[%c0_7, %c0_8], %10 {strides = array<i32>} : memref<16x256xf32, #tpu.memory_space<vmem>>, vector<16x256xf32>,
    return
  }
  func.func @transform_0(%arg0: i32) -> (i32, i32) {
    %c0_i32 = arith.constant 0 : i32
    %c0_i32_0 = arith.constant 0 : i32
    return %arg0, %c0_i32 : i32, i32
  }
  func.func @transform_1(%arg0: i32) -> (i32, i32) {
    %c0_i32 = arith.constant 0 : i32
    %c0_i32_0 = arith.constant 0 : i32
    %c0_i32_1 = arith.constant 0 : i32
    return %c0_i32, %c0_i32_0 : i32, i32
  }
  func.func @transform_2(%arg0: i32) -> (i32, i32) {
    %c0_i32 = arith.constant 0 : i32
    %c0_i32_0 = arith.constant 0 : i32
    %c0_i32_1 = arith.constant 0 : i32
    return %c0_i32, %c0_i32_0 : i32, i32
  }
  func.func @transform_3(%arg0: i32) -> (i32, i32) {
    %c0_i32 = arith.constant 0 : i32
    %c0_i32_0 = arith.constant 0 : i32
    return %arg0, %c0_i32 : i32, i32
  }
}

module attributes {stable_mosaic.version = 11 : i64} {
  func.func @_fused_kernel(%arg0: i32, %arg1: memref<16x640xf32, #tpu.memory_space<vmem>>, %arg2: memref<640x128xf32, #tpu.memory_space<vmem>>, %arg3: memref<1x128xf32, #tpu.memory_space<vmem>>, %arg4: memref<16x128xf32, #tpu.memory_space<vmem>>) attributes {dimension_semantics = [#tpu.dimension_semantics<parallel>], iteration_bounds = array<i64: 2>, scalar_prefetch = 0 : i64, scratch_operands = 0 : i64, tpu.core_type = #tpu.core_type<tc>, window_params = [{transform_indices = @transform_0, window_bounds = array<i64: 16, 640>}, {pipeline_mode = #tpu.pipeline_mode<synchronous>, transform_indices = @transform_1, window_bounds = array<i64: 640, 128>}, {pipeline_mode = #tpu.pipeline_mode<synchronous>, transform_indices = @transform_2, window_bounds = array<i64: 1, 128>}, {transform_indices = @transform_3, window_bounds = array<i64: 16, 128>}]} {
    %c0 = arith.constant 0 : index
    %c0_0 = arith.constant 0 : index
    %0 = vector.load %arg1[%c0, %c0_0] : memref<16x640xf32, #tpu.memory_space<vmem>>, vector<16x640xf32>
    %c0_1 = arith.constant 0 : index
    %c0_2 = arith.constant 0 : index
    %1 = vector.load %arg2[%c0_1, %c0_2] : memref<640x128xf32, #tpu.memory_space<vmem>>, vector<640x128xf32>
    %cst = arith.constant dense<0.000000e+00> : vector<16x128xf32>
    %2 = tpu.matmul %0, %1, %cst {dimension_numbers = #tpu.dot_dimension_numbers<[1], [0], [0], [1], [0, 0, 1, 1], [], []>} : vector<16x640xf32>, vector<640x128xf32>, vector<16x128xf32> -> vector<16x128xf32>
    %c0_3 = arith.constant 0 : index
    %c0_4 = arith.constant 0 : index
    %3 = vector.load %arg3[%c0_3, %c0_4] : memref<1x128xf32, #tpu.memory_space<vmem>>, vector<1x128xf32>
    %4 = vector.broadcast %3 : vector<1x128xf32> to vector<16x128xf32>
    %5 = arith.addf %2, %4 : vector<16x128xf32>
    %cst_5 = arith.constant 0.000000e+00 : f32
    %6 = vector.broadcast %cst_5 : f32 to vector<16x128xf32>
    %7 = arith.cmpf ogt, %5, %6 : vector<16x128xf32>
    %cst_6 = arith.constant 2.000000e-01 : f32
    %8 = vector.broadcast %cst_6 : f32 to vector<16x128xf32>
    %9 = arith.mulf %8, %5 : vector<16x128xf32>
    %10 = arith.select %7, %5, %9 : vector<16x128xi1>, vector<16x128xf32>
    %c0_7 = arith.constant 0 : index
    %c0_8 = arith.constant 0 : index
    %11 = vector.load %arg4[%c0_7, %c0_8] : memref<16x128xf32, #tpu.memory_space<vmem>>, vector<16x128xf32>
    tpu.vector_store %arg4[%c0_7, %c0_8], %10 {strides = array<i32>} : memref<16x128xf32, #tpu.memory_space<vmem>>, vector<16x128xf32>,
    return
  }
  func.func @transform_0(%arg0: i32) -> (i32, i32) {
    %c0_i32 = arith.constant 0 : i32
    %c0_i32_0 = arith.constant 0 : i32
    return %arg0, %c0_i32 : i32, i32
  }
  func.func @transform_1(%arg0: i32) -> (i32, i32) {
    %c0_i32 = arith.constant 0 : i32
    %c0_i32_0 = arith.constant 0 : i32
    %c0_i32_1 = arith.constant 0 : i32
    return %c0_i32, %c0_i32_0 : i32, i32
  }
  func.func @transform_2(%arg0: i32) -> (i32, i32) {
    %c0_i32 = arith.constant 0 : i32
    %c0_i32_0 = arith.constant 0 : i32
    %c0_i32_1 = arith.constant 0 : i32
    return %c0_i32, %c0_i32_0 : i32, i32
  }
  func.func @transform_3(%arg0: i32) -> (i32, i32) {
    %c0_i32 = arith.constant 0 : i32
    %c0_i32_0 = arith.constant 0 : i32
    return %arg0, %c0_i32 : i32, i32
  }
}

module attributes {stable_mosaic.version = 11 : i64} {
  func.func @_fused_kernel(%arg0: i32, %arg1: memref<64x256xf32, #tpu.memory_space<vmem>>, %arg2: memref<256x128xf32, #tpu.memory_space<vmem>>, %arg3: memref<1x128xf32, #tpu.memory_space<vmem>>, %arg4: memref<64x128xf32, #tpu.memory_space<vmem>>) attributes {dimension_semantics = [#tpu.dimension_semantics<parallel>], iteration_bounds = array<i64: 2>, scalar_prefetch = 0 : i64, scratch_operands = 0 : i64, tpu.core_type = #tpu.core_type<tc>, window_params = [{transform_indices = @transform_0, window_bounds = array<i64: 64, 256>}, {pipeline_mode = #tpu.pipeline_mode<synchronous>, transform_indices = @transform_1, window_bounds = array<i64: 256, 128>}, {pipeline_mode = #tpu.pipeline_mode<synchronous>, transform_indices = @transform_2, window_bounds = array<i64: 1, 128>}, {transform_indices = @transform_3, window_bounds = array<i64: 64, 128>}]} {
    %c0 = arith.constant 0 : index
    %c0_0 = arith.constant 0 : index
    %0 = vector.load %arg1[%c0, %c0_0] : memref<64x256xf32, #tpu.memory_space<vmem>>, vector<64x256xf32>
    %c0_1 = arith.constant 0 : index
    %c0_2 = arith.constant 0 : index
    %1 = vector.load %arg2[%c0_1, %c0_2] : memref<256x128xf32, #tpu.memory_space<vmem>>, vector<256x128xf32>
    %cst = arith.constant dense<0.000000e+00> : vector<64x128xf32>
    %2 = tpu.matmul %0, %1, %cst {dimension_numbers = #tpu.dot_dimension_numbers<[1], [0], [0], [1], [0, 0, 1, 1], [], []>} : vector<64x256xf32>, vector<256x128xf32>, vector<64x128xf32> -> vector<64x128xf32>
    %c0_3 = arith.constant 0 : index
    %c0_4 = arith.constant 0 : index
    %3 = vector.load %arg3[%c0_3, %c0_4] : memref<1x128xf32, #tpu.memory_space<vmem>>, vector<1x128xf32>
    %4 = vector.broadcast %3 : vector<1x128xf32> to vector<64x128xf32>
    %5 = arith.addf %2, %4 : vector<64x128xf32>
    %cst_5 = arith.constant 0.000000e+00 : f32
    %6 = vector.broadcast %cst_5 : f32 to vector<64x128xf32>
    %7 = arith.cmpf ogt, %5, %6 : vector<64x128xf32>
    %cst_6 = arith.constant 2.000000e-01 : f32
    %8 = vector.broadcast %cst_6 : f32 to vector<64x128xf32>
    %9 = arith.mulf %8, %5 : vector<64x128xf32>
    %10 = arith.select %7, %5, %9 : vector<64x128xi1>, vector<64x128xf32>
    %c0_7 = arith.constant 0 : index
    %c0_8 = arith.constant 0 : index
    %11 = vector.load %arg4[%c0_7, %c0_8] : memref<64x128xf32, #tpu.memory_space<vmem>>, vector<64x128xf32>
    tpu.vector_store %arg4[%c0_7, %c0_8], %10 {strides = array<i32>} : memref<64x128xf32, #tpu.memory_space<vmem>>, vector<64x128xf32>,
    return
  }
  func.func @transform_0(%arg0: i32) -> (i32, i32) {
    %c0_i32 = arith.constant 0 : i32
    %c0_i32_0 = arith.constant 0 : i32
    return %arg0, %c0_i32 : i32, i32
  }
  func.func @transform_1(%arg0: i32) -> (i32, i32) {
    %c0_i32 = arith.constant 0 : i32
    %c0_i32_0 = arith.constant 0 : i32
    %c0_i32_1 = arith.constant 0 : i32
    return %c0_i32, %c0_i32_0 : i32, i32
  }
  func.func @transform_2(%arg0: i32) -> (i32, i32) {
    %c0_i32 = arith.constant 0 : i32
    %c0_i32_0 = arith.constant 0 : i32
    %c0_i32_1 = arith.constant 0 : i32
    return %c0_i32, %c0_i32_0 : i32, i32
  }
  func.func @transform_3(%arg0: i32) -> (i32, i32) {
    %c0_i32 = arith.constant 0 : i32
    %c0_i32_0 = arith.constant 0 : i32
    return %arg0, %c0_i32 : i32, i32
  }
}

module attributes {stable_mosaic.version = 11 : i64} {
  func.func @_fused_kernel(%arg0: i32, %arg1: memref<256x384xf32, #tpu.memory_space<vmem>>, %arg2: memref<384x128xf32, #tpu.memory_space<vmem>>, %arg3: memref<1x128xf32, #tpu.memory_space<vmem>>, %arg4: memref<256x128xf32, #tpu.memory_space<vmem>>) attributes {dimension_semantics = [#tpu.dimension_semantics<parallel>], iteration_bounds = array<i64: 2>, scalar_prefetch = 0 : i64, scratch_operands = 0 : i64, tpu.core_type = #tpu.core_type<tc>, window_params = [{transform_indices = @transform_0, window_bounds = array<i64: 256, 384>}, {pipeline_mode = #tpu.pipeline_mode<synchronous>, transform_indices = @transform_1, window_bounds = array<i64: 384, 128>}, {pipeline_mode = #tpu.pipeline_mode<synchronous>, transform_indices = @transform_2, window_bounds = array<i64: 1, 128>}, {transform_indices = @transform_3, window_bounds = array<i64: 256, 128>}]} {
    %c0 = arith.constant 0 : index
    %c0_0 = arith.constant 0 : index
    %0 = vector.load %arg1[%c0, %c0_0] : memref<256x384xf32, #tpu.memory_space<vmem>>, vector<256x384xf32>
    %c0_1 = arith.constant 0 : index
    %c0_2 = arith.constant 0 : index
    %1 = vector.load %arg2[%c0_1, %c0_2] : memref<384x128xf32, #tpu.memory_space<vmem>>, vector<384x128xf32>
    %cst = arith.constant dense<0.000000e+00> : vector<256x128xf32>
    %2 = tpu.matmul %0, %1, %cst {dimension_numbers = #tpu.dot_dimension_numbers<[1], [0], [0], [1], [0, 0, 1, 1], [], []>} : vector<256x384xf32>, vector<384x128xf32>, vector<256x128xf32> -> vector<256x128xf32>
    %c0_3 = arith.constant 0 : index
    %c0_4 = arith.constant 0 : index
    %3 = vector.load %arg3[%c0_3, %c0_4] : memref<1x128xf32, #tpu.memory_space<vmem>>, vector<1x128xf32>
    %4 = vector.broadcast %3 : vector<1x128xf32> to vector<256x128xf32>
    %5 = arith.addf %2, %4 : vector<256x128xf32>
    %6 = arith.negf %5 : vector<256x128xf32>
    %7 = math.exp %6 : vector<256x128xf32>
    %cst_5 = arith.constant 1.000000e+00 : f32
    %8 = vector.broadcast %cst_5 : f32 to vector<256x128xf32>
    %9 = arith.addf %8, %7 : vector<256x128xf32>
    %10 = arith.divf %8, %9 : vector<256x128xf32>
    %c0_6 = arith.constant 0 : index
    %c0_7 = arith.constant 0 : index
    %11 = vector.load %arg4[%c0_6, %c0_7] : memref<256x128xf32, #tpu.memory_space<vmem>>, vector<256x128xf32>
    tpu.vector_store %arg4[%c0_6, %c0_7], %10 {strides = array<i32>} : memref<256x128xf32, #tpu.memory_space<vmem>>, vector<256x128xf32>,
    return
  }
  func.func @transform_0(%arg0: i32) -> (i32, i32) {
    %c0_i32 = arith.constant 0 : i32
    %c0_i32_0 = arith.constant 0 : i32
    return %arg0, %c0_i32 : i32, i32
  }
  func.func @transform_1(%arg0: i32) -> (i32, i32) {
    %c0_i32 = arith.constant 0 : i32
    %c0_i32_0 = arith.constant 0 : i32
    %c0_i32_1 = arith.constant 0 : i32
    return %c0_i32, %c0_i32_0 : i32, i32
  }
  func.func @transform_2(%arg0: i32) -> (i32, i32) {
    %c0_i32 = arith.constant 0 : i32
    %c0_i32_0 = arith.constant 0 : i32
    %c0_i32_1 = arith.constant 0 : i32
    return %c0_i32, %c0_i32_0 : i32, i32
  }
  func.func @transform_3(%arg0: i32) -> (i32, i32) {
    %c0_i32 = arith.constant 0 : i32
    %c0_i32_0 = arith.constant 0 : i32
    return %arg0, %c0_i32 : i32, i32
  }
}

</mosaic_0001>

<llo_original>
// kernel: tile.23
$region0: #{tile.23}
  %s0 = inlined_call_operand.vmem [shape: f32[4,64], index: 0, kind: input, shape index: {}]
  %s1 = inlined_call_operand.vmem [shape: f32[1,256], index: 1, kind: output, shape index: {}]
  $region1: #{tile.23} parent=0
    #allocation0 [shape = 'u8[8192]{0}', space=vmem, size = 0x2000, scoped, tag = 'scoped mem for output reshape']
    #allocation1 [shape = 'u8[4096]{0}', space=vmem, size = 0x1000, scoped, tag = 'scoped mem for input reshape']
    %s3 = ssub.s32 16, 1
    %v4 = vld [vmem:[%s0] sm:%s3]
    %5 = vst [vmem:[#allocation1] sm:%s3] %v4
    %s6 = smov 3
    %v7 = vld [vmem:[#allocation1] ss:$2 sm:%s6]
    %vm8 = vcmask 523264
    %9 = vst.msk [vmem:[#allocation0] ss:$8 sm:$0x3] %vm8, %v7
    %s10 = scalar_lea.vmem [#allocation1], 1
    %s11 = smov 3
    %v12 = vld [vmem:[%s10] ss:$2 sm:%s11]
    %13 = vrot.lane.b32.xlu0 %v12, 64
    %v14 = vpop.permute.xlu0 %13
    %vm15 = vcmask 1048064
    %16 = vst.msk [vmem:[#allocation0] ss:$8 sm:$0x3] %vm15, %v14
    %s18 = ssub.s32 2, 1
    %v19 = vld [vmem:[#allocation0] sm:%s18]
    %s21 = ssub.s32 2, 1
    %22 = vst [vmem:[%s1] sm:%s21] %v19
    %s23 = scalar_lea.vmem [#allocation0], 8
    %v24 = vld [vmem:[%s23] sm:%s18]
    %s26 = ssub.s32 2, 1
    %s27 = scalar_lea.vmem %s1, 1
    %28 = vst [vmem:[%s27] sm:%s26] %v24

// kernel: tile.18
$region0: #{tile.18}
  #allocation0 [shape = 's32[1]{0}', space=sflag, size = 0x4, scoped, tag = 'scoped memory for tile.18']
  %s0 = inlined_call_operand.vmem [shape: f32[64], index: 0, kind: input, shape index: {}]
  %s1 = inlined_call_operand.vmem [shape: f32[4,64], index: 1, kind: output, shape index: {}]
  // Predicated region
  $region2: #{tile.18} parent=0 // pred_check
    _
  $region3: #{tile.18} parent=0 // pred_check_branch
    %3 = sbr.rel (0) target = $region5
  $region4: #{tile.18} parent=0 // pred_region
    _
  $region5: #{tile.18} parent=0 // pred_fallthru
    _
  %v4 = vld [vmem:[%s0] ss:$0 sm:$0xff]
  %5 = vst [vmem:[%s1] sm:$0xf] %v4

// kernel: tile.26
$region0: #{tile.26}
  #allocation0 [shape = 's32[1]{0}', space=sflag, size = 0x4, scoped, tag = 'scoped memory for tile.26']
  %s0 = inlined_call_operand.vmem [shape: f32[32], index: 0, kind: input, shape index: {}]
  %s1 = inlined_call_operand.vmem [shape: f32[4,32], index: 1, kind: output, shape index: {}]
  // Predicated region
  $region2: #{tile.26} parent=0 // pred_check
    _
  $region3: #{tile.26} parent=0 // pred_check_branch
    %3 = sbr.rel (0) target = $region5
  $region4: #{tile.26} parent=0 // pred_region
    _
  $region5: #{tile.26} parent=0 // pred_fallthru
    _
  %v4 = vld [vmem:[%s0] ss:$0 sm:$0xff]
  %5 = vst [vmem:[%s1] sm:$0xf] %v4

// kernel: mul.25
$region0: #{mul.25}
  %s0 = inlined_call_operand.vmem [shape: f32[4,64], index: 0, kind: input, shape index: {}]
  %s1 = inlined_call_operand.vmem [shape: f32[256], index: 1, kind: output, shape index: {}]
  $region1: #{mul.25} parent=0
    #allocation0 [shape = 'u8[4096]{0}', space=vmem, size = 0x1000, scoped, tag = 'scoped mem for output reshape']
    #allocation1 [shape = 'u8[4096]{0}', space=vmem, size = 0x1000, scoped, tag = 'scoped mem for input reshape']
    %s3 = ssub.s32 16, 1
    %v4 = vld [vmem:[%s0] sm:%s3]
    %5 = vst [vmem:[#allocation1] sm:%s3] %v4
    %s6 = smov 3
    %v7 = vld [vmem:[#allocation1] ss:$2 sm:%s6]
    %vm8 = vcmask 523264
    %9 = vst.msk [vmem:[#allocation0] sm:$0x3] %vm8, %v7
    %s10 = scalar_lea.vmem [#allocation1], 1
    %s11 = smov 3
    %v12 = vld [vmem:[%s10] ss:$2 sm:%s11]
    %13 = vrot.lane.b32.xlu0 %v12, 64
    %v14 = vpop.permute.xlu0 %13
    %vm15 = vcmask 1048064
    %16 = vst.msk [vmem:[#allocation0] sm:$0x3] %vm15, %v14
    %s18 = ssub.s32 4, 1
    %v19 = vld [vmem:[#allocation0] sm:%s18]
    %s21 = ssub.s32 4, 1
    %22 = vst [vmem:[%s1] sm:%s21] %v19

// kernel: tile.31
$region0: #{tile.31}
  %s0 = inlined_call_operand.vmem [shape: f32[4,32], index: 0, kind: input, shape index: {}]
  %s1 = inlined_call_operand.vmem [shape: f32[1,128], index: 1, kind: output, shape index: {}]
  $region1: #{tile.31} parent=0
    #allocation0 [shape = 'u8[4096]{0}', space=vmem, size = 0x1000, scoped, tag = 'scoped mem for output reshape']
    #allocation1 [shape = 'u8[4096]{0}', space=vmem, size = 0x1000, scoped, tag = 'scoped mem for input reshape']
    %s3 = ssub.s32 16, 1
    %v4 = vld [vmem:[%s0] sm:%s3]
    %5 = vst [vmem:[#allocation1] sm:%s3] %v4
    %v6 = vld [vmem:[#allocation1] sm:$0x1]
    %vm7 = vcmask 261120
    %8 = vst.msk [vmem:[#allocation0] sm:$0x1] %vm7, %v6
    %s9 = scalar_lea.vmem [#allocation1], 3
    %v10 = vld [vmem:[%s9] sm:$0x1]
    %11 = vrot.lane.b32.xlu0 %v10, 96
    %v12 = vpop.permute.xlu0 %11
    %vm13 = vcmask 1048320
    %14 = vst.msk [vmem:[#allocation0] sm:$0x1] %vm13, %v12
    %s15 = scalar_lea.vmem [#allocation1], 2
    %v16 = vld [vmem:[%s15] sm:$0x1]
    %17 = vrot.lane.b32.xlu0 %v16, 64
    %v18 = vpop.permute.xlu0 %17
    %vm19 = vcmask 785920
    %20 = vst.msk [vmem:[#allocation0] sm:$0x1] %vm19, %v18
    %s21 = scalar_lea.vmem [#allocation1], 1
    %v22 = vld [vmem:[%s21] sm:$0x1]
    %23 = vrot.lane.b32.xlu0 %v22, 32
    %v24 = vpop.permute.xlu0 %23
    %vm25 = vcmask 523520
    %26 = vst.msk [vmem:[#allocation0] sm:$0x1] %vm25, %v24
    %s28 = ssub.s32 2, 1
    %v29 = vld [vmem:[#allocation0] sm:%s28]
    %s31 = ssub.s32 2, 1
    %32 = vst [vmem:[%s1] sm:%s31] %v29

// kernel: mul.28
$region0: #{mul.28}
  %s0 = inlined_call_operand.vmem [shape: f32[4,32], index: 0, kind: input, shape index: {}]
  %s1 = inlined_call_operand.vmem [shape: f32[128], index: 1, kind: output, shape index: {}]
  $region1: #{mul.28} parent=0
    #allocation0 [shape = 'u8[4096]{0}', space=vmem, size = 0x1000, scoped, tag = 'scoped mem for output reshape']
    #allocation1 [shape = 'u8[4096]{0}', space=vmem, size = 0x1000, scoped, tag = 'scoped mem for input reshape']
    %s3 = ssub.s32 16, 1
    %v4 = vld [vmem:[%s0] sm:%s3]
    %5 = vst [vmem:[#allocation1] sm:%s3] %v4
    %v6 = vld [vmem:[#allocation1] sm:$0x1]
    %vm7 = vcmask 261120
    %8 = vst.msk [vmem:[#allocation0] sm:$0x1] %vm7, %v6
    %s9 = scalar_lea.vmem [#allocation1], 3
    %v10 = vld [vmem:[%s9] sm:$0x1]
    %11 = vrot.lane.b32.xlu0 %v10, 96
    %v12 = vpop.permute.xlu0 %11
    %vm13 = vcmask 1048320
    %14 = vst.msk [vmem:[#allocation0] sm:$0x1] %vm13, %v12
    %s15 = scalar_lea.vmem [#allocation1], 2
    %v16 = vld [vmem:[%s15] sm:$0x1]
    %17 = vrot.lane.b32.xlu0 %v16, 64
    %v18 = vpop.permute.xlu0 %17
    %vm19 = vcmask 785920
    %20 = vst.msk [vmem:[#allocation0] sm:$0x1] %vm19, %v18
    %s21 = scalar_lea.vmem [#allocation1], 1
    %v22 = vld [vmem:[%s21] sm:$0x1]
    %23 = vrot.lane.b32.xlu0 %v22, 32
    %v24 = vpop.permute.xlu0 %23
    %vm25 = vcmask 523520
    %26 = vst.msk [vmem:[#allocation0] sm:$0x1] %vm25, %v24
    %s28 = ssub.s32 2, 1
    %v29 = vld [vmem:[#allocation0] sm:%s28]
    %s31 = ssub.s32 2, 1
    %32 = vst [vmem:[%s1] sm:%s31] %v29

// kernel: _lambda_.6
$region0: #{_lambda_.6}
  #allocation0 [shape = 'u32[]', space=smem, size = 0x4, offset = 0x4, fixed_abs, tag = 'smem constant byte address 0x4 - core index']
  #allocation1 [shape = 'u32[72,128]{1,0:T(1,128)}', space=vmem, size = 0x9000, scoped, tag = 'internal scratch']
  %s0 = inlined_call_operand.vmem [shape: f32[512,128], index: 0, kind: input, shape index: {}]
  %s1 = inlined_call_operand.vmem [shape: f32[128,128], index: 1, kind: input, shape index: {}]
  %s2 = inlined_call_operand.vmem [shape: f32[1,128], index: 2, kind: input, shape index: {}]
  %s3 = inlined_call_operand.vmem [shape: f32[512,128], index: 3, kind: output, shape index: {}]
  %s4 = sld [smem:[#allocation0]]
  $region45: #{_lambda_.6} parent=0
    _
  %s6 = ssub.s32 1, %s4
  %s7 = scalar_select 0, %s6, %s4
  loop: start=0, step=1, limit=4
  $region2: #{_lambda_.6} parent=0 // loop_pre_header
    _
  $region3: #{_lambda_.6} parent=0 // loop_header
    %s9 = sphi 0, %s13
    %p10 = scmp.ge.s32.totalorder %s9, 4
    %s19 = sphi 0, %s21
    %s22 = sphi 0, %s19
    %s23 = sphi 0, %s22
    %s39 = sphi 0, %s23
    %s43 = sphi 0, %s43
    %s45 = sphi 0, %s43
    %s46 = sphi 0, %s45
    %s60 = sphi 0, %s46
    %s64 = sphi 0, %s64
    %s66 = sphi 0, %s64
    %s67 = sphi 0, %s66
    %s81 = sphi 0, %s67
    %s87 = sphi 0, %s89
    %s90 = sphi 0, %s87
    %s91 = sphi 0, %s90
    %s107 = sphi 0, %s91
  $region4: #{_lambda_.6} parent=0 // loop_header_branch
    %12 = sbr.rel (%p10) target = $region8
  $region5: #{_lambda_.6} parent=0 // loop_body
    %s14 = ssub.s32 %s9, 1
    %s15 = ssub.s32 %s9, 2
    %s16 = sadd.s32 %s9, 1
    %s17 = ssub.s32 %s9, %s16
    %p18 = scmp.eq.s32.totalorder %s17, 0
    %s20 = sadd.s32 %s19, 1
    %s21 = scalar_select %p18, %s19, %s20
    %p24 = pneg %p18
    %p25 = scmp.eq.s32.totalorder %s9, 1
    %p26 = por %p24, %p25
    %p27 = scmp.ne.s32.totalorder %s19, %s22
    %p28 = scmp.eq.s32.totalorder %s9, 0
    %p29 = por %p27, %p28
    %p30 = scmp.ne.s32.totalorder %s19, %s22
    %p31 = scmp.eq.s32.totalorder %s14, 1
    %p32 = por %p30, %p31
    %p33 = scmp.ne.s32.totalorder %s22, %s23
    %p34 = scmp.eq.s32.totalorder %s14, 0
    %p35 = por %p33, %p34
    %p36 = scmp.ne.s32.totalorder %s22, %s23
    %p37 = scmp.eq.s32.totalorder %s15, 1
    %p38 = por %p36, %p37
    %p40 = scmp.ne.s32.totalorder %s23, %s39
    %p41 = scmp.eq.s32.totalorder %s15, 0
    %p42 = por %p40, %p41
    %s44 = sadd.s32 %s43, 1
    %p47 = scmp.eq.s32.totalorder %s9, 1
    %p48 = scmp.ne.s32.totalorder %s43, %s45
    %p49 = scmp.eq.s32.totalorder %s9, 0
    %p50 = por %p48, %p49
    %p51 = scmp.ne.s32.totalorder %s43, %s45
    %p52 = scmp.eq.s32.totalorder %s14, 1
    %p53 = por %p51, %p52
    %p54 = scmp.ne.s32.totalorder %s45, %s46
    %p55 = scmp.eq.s32.totalorder %s14, 0
    %p56 = por %p54, %p55
    %p57 = scmp.ne.s32.totalorder %s45, %s46
    %p58 = scmp.eq.s32.totalorder %s15, 1
    %p59 = por %p57, %p58
    %p61 = scmp.ne.s32.totalorder %s46, %s60
    %p62 = scmp.eq.s32.totalorder %s15, 0
    %p63 = por %p61, %p62
    %s65 = sadd.s32 %s64, 1
    %p68 = scmp.eq.s32.totalorder %s9, 1
    %p69 = scmp.ne.s32.totalorder %s64, %s66
    %p70 = scmp.eq.s32.totalorder %s9, 0
    %p71 = por %p69, %p70
    %p72 = scmp.ne.s32.totalorder %s64, %s66
    %p73 = scmp.eq.s32.totalorder %s14, 1
    %p74 = por %p72, %p73
    %p75 = scmp.ne.s32.totalorder %s66, %s67
    %p76 = scmp.eq.s32.totalorder %s14, 0
    %p77 = por %p75, %p76
    %p78 = scmp.ne.s32.totalorder %s66, %s67
    %p79 = scmp.eq.s32.totalorder %s15, 1
    %p80 = por %p78, %p79
    %p82 = scmp.ne.s32.totalorder %s67, %s81
    %p83 = scmp.eq.s32.totalorder %s15, 0
    %p84 = por %p82, %p83
    %s85 = ssub.s32 %s9, %s16
    %p86 = scmp.eq.s32.totalorder %s85, 0
    %s88 = sadd.s32 %s87, 1
    %s89 = scalar_select %p86, %s87, %s88
    %p92 = pneg %p86
    %p93 = scmp.eq.s32.totalorder %s9, 1
    %p94 = por %p92, %p93
    %p95 = scmp.ne.s32.totalorder %s87, %s90
    %p96 = scmp.eq.s32.totalorder %s9, 0
    %p97 = por %p95, %p96
    %p98 = scmp.ne.s32.totalorder %s87, %s90
    %p99 = scmp.eq.s32.totalorder %s14, 1
    %p100 = por %p98, %p99
    %p101 = scmp.ne.s32.totalorder %s90, %s91
    %p102 = scmp.eq.s32.totalorder %s14, 0
    %p103 = por %p101, %p102
    %p104 = scmp.ne.s32.totalorder %s90, %s91
    %p105 = scmp.eq.s32.totalorder %s15, 1
    %p106 = por %p104, %p105
    %p108 = scmp.ne.s32.totalorder %s91, %s107
    %p109 = scmp.eq.s32.totalorder %s15, 0
    %p110 = por %p108, %p109
    %p111 = scmp.le.s32.totalorder 1, %s9
    %p112 = scmp.lt.s32.totalorder %s9, 3
    %p113 = pnand %p111, %p112
    %p114 = pneg %p113
    // Predicated region
    $region9: #{_lambda_.6} parent=5 // pred_check
      _
    $region10: #{_lambda_.6} parent=5 // pred_check_branch
      %116 = sbr.rel (%p113) target = $region12
    $region11: #{_lambda_.6} parent=5 // pred_region
      %s117 = ssub.s32 %s9, 1
      // Predicated region
      $region13: #{_lambda_.6} parent=11 // pred_check
        %p118 = pneg %p56
      $region14: #{_lambda_.6} parent=11 // pred_check_branch
        %120 = sbr.rel (%p118) target = $region16
      $region15: #{_lambda_.6} parent=11 // pred_region
        _
      $region16: #{_lambda_.6} parent=11 // pred_fallthru
        _
      // Predicated region
      $region17: #{_lambda_.6} parent=11 // pred_check
        %p121 = pneg %p77
      $region18: #{_lambda_.6} parent=11 // pred_check_branch
        %123 = sbr.rel (%p121) target = $region20
      $region19: #{_lambda_.6} parent=11 // pred_region
        _
      $region20: #{_lambda_.6} parent=11 // pred_fallthru
        _
    $region12: #{_lambda_.6} parent=5 // pred_fallthru
      _
    %p124 = scmp.lt.s32.totalorder %s9, 2
    // Predicated region
    $region21: #{_lambda_.6} parent=5 // pred_check
      %p125 = pneg %p124
    $region22: #{_lambda_.6} parent=5 // pred_check_branch
      %127 = sbr.rel (%p125) target = $region24
    $region23: #{_lambda_.6} parent=5 // pred_region
      // Predicated region
      $region25: #{_lambda_.6} parent=23 // pred_check
        %p128 = pneg %p29
      $region26: #{_lambda_.6} parent=23 // pred_check_branch
        %130 = sbr.rel (%p128) target = $region28
      $region27: #{_lambda_.6} parent=23 // pred_region
        %s131 = smul.u32 32, %s9
        %p132 = scmp.lt.s32.totalorder %s131, 63
        %s133 = scalar_select %p132, %s131, 63
        %s134 = smul.addr %s133, 8
        %s135 = scalar_lea.vmem %s0, %s134
        %s136 = smul.u32 32, %s9
      $region28: #{_lambda_.6} parent=23 // pred_fallthru
        _
    $region24: #{_lambda_.6} parent=5 // pred_fallthru
      _
    %p137 = scmp.le.s32.totalorder 1, %s9
    %p138 = scmp.lt.s32.totalorder %s9, 3
    %p139 = pnand %p137, %p138
    %p140 = pneg %p139
    // Predicated region
    $region29: #{_lambda_.6} parent=5 // pred_check
      _
    $region30: #{_lambda_.6} parent=5 // pred_check_branch
      %142 = sbr.rel (%p139) target = $region32
    $region31: #{_lambda_.6} parent=5 // pred_region
      %s143 = ssub.s32 %s9, 1
      %s144 = smul.u32 32, %s14
      %p145 = scmp.lt.s32.totalorder %s144, 63
      %s146 = scalar_select %p145, %s144, 63
      %s147 = smul.addr %s146, 8
      %s148 = scalar_lea.vmem %s0, %s147
      %p149 = pneg %p35
      %p150 = pneg %p32
      %p151 = pneg %p56
      %p152 = pneg %p53
      %p153 = pneg %p77
      %p154 = pneg %p74
      %p155 = pneg %p103
      %p156 = pneg %p100
      %s157 = smul.u32 32, %s14
      %p158 = scmp.lt.s32.totalorder %s157, 63
      %s159 = scalar_select %p158, %s157, 63
      %s160 = smul.addr %s159, 8
      %s161 = scalar_lea.vmem %s3, %s160
      %s162 = smul.u32 32, %s14
      %p163 = scmp.lt.s32.totalorder %s162, 63
      %s164 = scalar_select %p163, %s162, 63
      %s165 = smul.addr %s164, 8
      %s166 = scalar_lea.vmem %s0, %s165
      %s167 = smul.u32 32, %s14
      %s168 = smul.u32 32, %s14
      %p169 = scmp.lt.s32.totalorder %s168, 63
      %s170 = scalar_select %p169, %s168, 63
      %s171 = smul.addr %s170, 8
      %s172 = scalar_lea.vmem %s3, %s171
      %s173 = smul.u32 32, %s14
      %v174 = vld [vmem:[%s166] sm:$0xff]
      %v175 = vld [vmem:[%s166 + $0x8] sm:$0xff]
      %v176 = vld [vmem:[%s166 + $0x10] sm:$0xff]
      %v177 = vld [vmem:[%s166 + $0x18] sm:$0xff]
      %v178 = vld [vmem:[%s166 + $0x20] sm:$0xff]
      %v179 = vld [vmem:[%s166 + $0x28] sm:$0xff]
      %v180 = vld [vmem:[%s166 + $0x30] sm:$0xff]
      %v181 = vld [vmem:[%s166 + $0x38] sm:$0xff]
      %v182 = vld [vmem:[%s166 + $0x40] sm:$0xff]
      %v183 = vld [vmem:[%s166 + $0x48] sm:$0xff]
      %v184 = vld [vmem:[%s166 + $0x50] sm:$0xff]
      %v185 = vld [vmem:[%s166 + $0x58] sm:$0xff]
      %v186 = vld [vmem:[%s166 + $0x60] sm:$0xff]
      %v187 = vld [vmem:[%s166 + $0x68] sm:$0xff]
      %v188 = vld [vmem:[%s166 + $0x70] sm:$0xff]
      %v189 = vld [vmem:[%s166 + $0x78] sm:$0xff]
      %v190 = vld [vmem:[%s166 + $0x80] sm:$0xff]
      %v191 = vld [vmem:[%s166 + $0x88] sm:$0xff]
      %v192 = vld [vmem:[%s166 + $0x90] sm:$0xff]
      %v193 = vld [vmem:[%s166 + $0x98] sm:$0xff]
      %v194 = vld [vmem:[%s166 + $0xa0] sm:$0xff]
      %v195 = vld [vmem:[%s166 + $0xa8] sm:$0xff]
      %v196 = vld [vmem:[%s166 + $0xb0] sm:$0xff]
      %v197 = vld [vmem:[%s166 + $0xb8] sm:$0xff]
      %v198 = vld [vmem:[%s166 + $0xc0] sm:$0xff]
      %v199 = vld [vmem:[%s166 + $0xc8] sm:$0xff]
      %v200 = vld [vmem:[%s166 + $0xd0] sm:$0xff]
      %v201 = vld [vmem:[%s166 + $0xd8] sm:$0xff]
      %v202 = vld [vmem:[%s166 + $0xe0] sm:$0xff]
      %v203 = vld [vmem:[%s166 + $0xe8] sm:$0xff]
      %v204 = vld [vmem:[%s166 + $0xf0] sm:$0xff]
      %v205 = vld [vmem:[%s166 + $0xf8] sm:$0xff]
      %v206 = vld [vmem:[%s1] sm:$0xff]
      %v207 = vld [vmem:[%s1 + $0x8] sm:$0xff]
      %v208 = vld [vmem:[%s1 + $0x10] sm:$0xff]
      %v209 = vld [vmem:[%s1 + $0x18] sm:$0xff]
      %v210 = vld [vmem:[%s1 + $0x20] sm:$0xff]
      %v211 = vld [vmem:[%s1 + $0x28] sm:$0xff]
      %v212 = vld [vmem:[%s1 + $0x30] sm:$0xff]
      %v213 = vld [vmem:[%s1 + $0x38] sm:$0xff]
      %v214 = vld [vmem:[%s1 + $0x40] sm:$0xff]
      %v215 = vld [vmem:[%s1 + $0x48] sm:$0xff]
      %v216 = vld [vmem:[%s1 + $0x50] sm:$0xff]
      %v217 = vld [vmem:[%s1 + $0x58] sm:$0xff]
      %v218 = vld [vmem:[%s1 + $0x60] sm:$0xff]
      %v219 = vld [vmem:[%s1 + $0x68] sm:$0xff]
      %v220 = vld [vmem:[%s1 + $0x70] sm:$0xff]
      %v221 = vld [vmem:[%s1 + $0x78] sm:$0xff]
      %v222 = vld [vmem:[%s2] sm:$0x1]
      %v224 = vperm.slane %v222, 0
      %226 = vmatpush.msra.mxu0 %v221
      %227 = vmatpush.msra.mxu0 %v220
      %228 = vmatpush.msra.mxu0 %v219
      %229 = vmatpush.msra.mxu0 %v218
      %230 = vmatpush.msra.mxu0 %v217
      %231 = vmatpush.msra.mxu0 %v216
      %232 = vmatpush.msra.mxu0 %v215
      %233 = vmatpush.msra.mxu0 %v214
      %234 = vmatpush.msra.mxu0 %v213
      %235 = vmatpush.msra.mxu0 %v212
      %236 = vmatpush.msra.mxu0 %v211
      %237 = vmatpush.msra.mxu0 %v210
      %238 = vmatpush.msra.mxu0 %v209
      %239 = vmatpush.msra.mxu0 %v208
      %240 = vmatpush.msra.mxu0 %v207
      %241 = vmatpush.msra.mxu0 %v206
      %242 = vmatmul.f32.gmra.mxu0 %v174
      %v243 = vpop.f32.mrf.mxu0
      %v244 = vadd.f32 %v224, %v243
      %245 = vmatmul.f32.gmra.mxu0 %v175
      %v246 = vpop.f32.mrf.mxu0
      %v247 = vadd.f32 %v224, %v246
      %248 = vmatmul.f32.gmra.mxu0 %v176
      %v249 = vpop.f32.mrf.mxu0
      %v250 = vadd.f32 %v224, %v249
      %251 = vmatmul.f32.gmra.mxu0 %v177
      %v252 = vpop.f32.mrf.mxu0
      %v253 = vadd.f32 %v224, %v252
      %254 = vmatmul.f32.gmra.mxu0 %v178
      %v255 = vpop.f32.mrf.mxu0
      %v256 = vadd.f32 %v224, %v255
      %257 = vmatmul.f32.gmra.mxu0 %v179
      %v258 = vpop.f32.mrf.mxu0
      %v259 = vadd.f32 %v224, %v258
      %260 = vmatmul.f32.gmra.mxu0 %v180
      %v261 = vpop.f32.mrf.mxu0
      %v262 = vadd.f32 %v224, %v261
      %263 = vmatmul.f32.gmra.mxu0 %v181
      %v264 = vpop.f32.mrf.mxu0
      %v265 = vadd.f32 %v224, %v264
      %266 = vmatmul.f32.gmra.mxu0 %v182
      %v267 = vpop.f32.mrf.mxu0
      %v268 = vadd.f32 %v224, %v267
      %269 = vmatmul.f32.gmra.mxu0 %v183
      %v270 = vpop.f32.mrf.mxu0
      %v271 = vadd.f32 %v224, %v270
      %272 = vmatmul.f32.gmra.mxu0 %v184
      %v273 = vpop.f32.mrf.mxu0
      %v274 = vadd.f32 %v224, %v273
      %275 = vmatmul.f32.gmra.mxu0 %v185
      %v276 = vpop.f32.mrf.mxu0
      %v277 = vadd.f32 %v224, %v276
      %278 = vmatmul.f32.gmra.mxu0 %v186
      %v279 = vpop.f32.mrf.mxu0
      %v280 = vadd.f32 %v224, %v279
      %281 = vmatmul.f32.gmra.mxu0 %v187
      %v282 = vpop.f32.mrf.mxu0
      %v283 = vadd.f32 %v224, %v282
      %284 = vmatmul.f32.gmra.mxu0 %v188
      %v285 = vpop.f32.mrf.mxu0
      %v286 = vadd.f32 %v224, %v285
      %287 = vmatmul.f32.gmra.mxu0 %v189
      %v288 = vpop.f32.mrf.mxu0
      %v289 = vadd.f32 %v224, %v288
      %290 = vmatmul.f32.gmra.mxu0 %v190
      %v291 = vpop.f32.mrf.mxu0
      %v292 = vadd.f32 %v224, %v291
      %293 = vmatmul.f32.gmra.mxu0 %v191
      %v294 = vpop.f32.mrf.mxu0
      %v295 = vadd.f32 %v224, %v294
      %296 = vmatmul.f32.gmra.mxu0 %v192
      %v297 = vpop.f32.mrf.mxu0
      %v298 = vadd.f32 %v224, %v297
      %299 = vmatmul.f32.gmra.mxu0 %v193
      %v300 = vpop.f32.mrf.mxu0
      %v301 = vadd.f32 %v224, %v300
      %302 = vmatmul.f32.gmra.mxu0 %v194
      %v303 = vpop.f32.mrf.mxu0
      %v304 = vadd.f32 %v224, %v303
      %305 = vmatmul.f32.gmra.mxu0 %v195
      %v306 = vpop.f32.mrf.mxu0
      %v307 = vadd.f32 %v224, %v306
      %308 = vmatmul.f32.gmra.mxu0 %v196
      %v309 = vpop.f32.mrf.mxu0
      %v310 = vadd.f32 %v224, %v309
      %311 = vmatmul.f32.gmra.mxu0 %v197
      %v312 = vpop.f32.mrf.mxu0
      %v313 = vadd.f32 %v224, %v312
      %314 = vmatmul.f32.gmra.mxu0 %v198
      %v315 = vpop.f32.mrf.mxu0
      %v316 = vadd.f32 %v224, %v315
      %317 = vmatmul.f32.gmra.mxu0 %v199
      %v318 = vpop.f32.mrf.mxu0
      %v319 = vadd.f32 %v224, %v318
      %320 = vmatmul.f32.gmra.mxu0 %v200
      %v321 = vpop.f32.mrf.mxu0
      %v322 = vadd.f32 %v224, %v321
      %323 = vmatmul.f32.gmra.mxu0 %v201
      %v324 = vpop.f32.mrf.mxu0
      %v325 = vadd.f32 %v224, %v324
      %326 = vmatmul.f32.gmra.mxu0 %v202
      %v327 = vpop.f32.mrf.mxu0
      %v328 = vadd.f32 %v224, %v327
      %329 = vmatmul.f32.gmra.mxu0 %v203
      %v330 = vpop.f32.mrf.mxu0
      %v331 = vadd.f32 %v224, %v330
      %332 = vmatmul.f32.gmra.mxu0 %v204
      %v333 = vpop.f32.mrf.mxu0
      %v334 = vadd.f32 %v224, %v333
      %335 = vmatmul.f32.gmra.mxu0 %v205
      %v336 = vpop.f32.mrf.mxu0
      %v337 = vadd.f32 %v224, %v336
      %338 = vdwg.mxu0
      %vm339 = vcmp.gt.f32.partialorder %v244, 0.0
      %vm340 = vcmp.gt.f32.partialorder %v247, 0.0
      %vm341 = vcmp.gt.f32.partialorder %v250, 0.0
      %vm342 = vcmp.gt.f32.partialorder %v253, 0.0
      %vm343 = vcmp.gt.f32.partialorder %v256, 0.0
      %vm344 = vcmp.gt.f32.partialorder %v259, 0.0
      %vm345 = vcmp.gt.f32.partialorder %v262, 0.0
      %vm346 = vcmp.gt.f32.partialorder %v265, 0.0
      %vm347 = vcmp.gt.f32.partialorder %v268, 0.0
      %vm348 = vcmp.gt.f32.partialorder %v271, 0.0
      %vm349 = vcmp.gt.f32.partialorder %v274, 0.0
      %vm350 = vcmp.gt.f32.partialorder %v277, 0.0
      %vm351 = vcmp.gt.f32.partialorder %v280, 0.0
      %vm352 = vcmp.gt.f32.partialorder %v283, 0.0
      %vm353 = vcmp.gt.f32.partialorder %v286, 0.0
      %vm354 = vcmp.gt.f32.partialorder %v289, 0.0
      %vm355 = vcmp.gt.f32.partialorder %v292, 0.0
      %vm356 = vcmp.gt.f32.partialorder %v295, 0.0
      %vm357 = vcmp.gt.f32.partialorder %v298, 0.0
      %vm358 = vcmp.gt.f32.partialorder %v301, 0.0
      %vm359 = vcmp.gt.f32.partialorder %v304, 0.0
      %vm360 = vcmp.gt.f32.partialorder %v307, 0.0
      %vm361 = vcmp.gt.f32.partialorder %v310, 0.0
      %vm362 = vcmp.gt.f32.partialorder %v313, 0.0
      %vm363 = vcmp.gt.f32.partialorder %v316, 0.0
      %vm364 = vcmp.gt.f32.partialorder %v319, 0.0
      %vm365 = vcmp.gt.f32.partialorder %v322, 0.0
      %vm366 = vcmp.gt.f32.partialorder %v325, 0.0
      %vm367 = vcmp.gt.f32.partialorder %v328, 0.0
      %vm368 = vcmp.gt.f32.partialorder %v331, 0.0
      %vm369 = vcmp.gt.f32.partialorder %v334, 0.0
      %vm370 = vcmp.gt.f32.partialorder %v337, 0.0
      %v371 = vmul.f32 %v244, 0.2
      %v372 = vmul.f32 %v247, 0.2
      %v373 = vmul.f32 %v250, 0.2
      %v374 = vmul.f32 %v253, 0.2
      %v375 = vmul.f32 %v256, 0.2
      %v376 = vmul.f32 %v259, 0.2
      %v377 = vmul.f32 %v262, 0.2
      %v378 = vmul.f32 %v265, 0.2
      %v379 = vmul.f32 %v268, 0.2
      %v380 = vmul.f32 %v271, 0.2
      %v381 = vmul.f32 %v274, 0.2
      %v382 = vmul.f32 %v277, 0.2
      %v383 = vmul.f32 %v280, 0.2
      %v384 = vmul.f32 %v283, 0.2
      %v385 = vmul.f32 %v286, 0.2
      %v386 = vmul.f32 %v289, 0.2
      %v387 = vmul.f32 %v292, 0.2
      %v388 = vmul.f32 %v295, 0.2
      %v389 = vmul.f32 %v298, 0.2
      %v390 = vmul.f32 %v301, 0.2
      %v391 = vmul.f32 %v304, 0.2
      %v392 = vmul.f32 %v307, 0.2
      %v393 = vmul.f32 %v310, 0.2
      %v394 = vmul.f32 %v313, 0.2
      %v395 = vmul.f32 %v316, 0.2
      %v396 = vmul.f32 %v319, 0.2
      %v397 = vmul.f32 %v322, 0.2
      %v398 = vmul.f32 %v325, 0.2
      %v399 = vmul.f32 %v328, 0.2
      %v400 = vmul.f32 %v331, 0.2
      %v401 = vmul.f32 %v334, 0.2
      %v402 = vmul.f32 %v337, 0.2
      %v403 = vsel %vm339, %v244, %v371
      %v404 = vsel %vm340, %v247, %v372
      %v405 = vsel %vm341, %v250, %v373
      %v406 = vsel %vm342, %v253, %v374
      %v407 = vsel %vm343, %v256, %v375
      %v408 = vsel %vm344, %v259, %v376
      %v409 = vsel %vm345, %v262, %v377
      %v410 = vsel %vm346, %v265, %v378
      %v411 = vsel %vm347, %v268, %v379
      %v412 = vsel %vm348, %v271, %v380
      %v413 = vsel %vm349, %v274, %v381
      %v414 = vsel %vm350, %v277, %v382
      %v415 = vsel %vm351, %v280, %v383
      %v416 = vsel %vm352, %v283, %v384
      %v417 = vsel %vm353, %v286, %v385
      %v418 = vsel %vm354, %v289, %v386
      %v419 = vsel %vm355, %v292, %v387
      %v420 = vsel %vm356, %v295, %v388
      %v421 = vsel %vm357, %v298, %v389
      %v422 = vsel %vm358, %v301, %v390
      %v423 = vsel %vm359, %v304, %v391
      %v424 = vsel %vm360, %v307, %v392
      %v425 = vsel %vm361, %v310, %v393
      %v426 = vsel %vm362, %v313, %v394
      %v427 = vsel %vm363, %v316, %v395
      %v428 = vsel %vm364, %v319, %v396
      %v429 = vsel %vm365, %v322, %v397
      %v430 = vsel %vm366, %v325, %v398
      %v431 = vsel %vm367, %v328, %v399
      %v432 = vsel %vm368, %v331, %v400
      %v433 = vsel %vm369, %v334, %v401
      %v434 = vsel %vm370, %v337, %v402
      %435 = vst [vmem:[%s172] sm:$0xff] %v403
      %436 = vst [vmem:[%s172 + $0x8] sm:$0xff] %v404
      %437 = vst [vmem:[%s172 + $0x10] sm:$0xff] %v405
      %438 = vst [vmem:[%s172 + $0x18] sm:$0xff] %v406
      %439 = vst [vmem:[%s172 + $0x20] sm:$0xff] %v407
      %440 = vst [vmem:[%s172 + $0x28] sm:$0xff] %v408
      %441 = vst [vmem:[%s172 + $0x30] sm:$0xff] %v409
      %442 = vst [vmem:[%s172 + $0x38] sm:$0xff] %v410
      %443 = vst [vmem:[%s172 + $0x40] sm:$0xff] %v411
      %444 = vst [vmem:[%s172 + $0x48] sm:$0xff] %v412
      %445 = vst [vmem:[%s172 + $0x50] sm:$0xff] %v413
      %446 = vst [vmem:[%s172 + $0x58] sm:$0xff] %v414
      %447 = vst [vmem:[%s172 + $0x60] sm:$0xff] %v415
      %448 = vst [vmem:[%s172 + $0x68] sm:$0xff] %v416
      %449 = vst [vmem:[%s172 + $0x70] sm:$0xff] %v417
      %450 = vst [vmem:[%s172 + $0x78] sm:$0xff] %v418
      %451 = vst [vmem:[%s172 + $0x80] sm:$0xff] %v419
      %452 = vst [vmem:[%s172 + $0x88] sm:$0xff] %v420
      %453 = vst [vmem:[%s172 + $0x90] sm:$0xff] %v421
      %454 = vst [vmem:[%s172 + $0x98] sm:$0xff] %v422
      %455 = vst [vmem:[%s172 + $0xa0] sm:$0xff] %v423
      %456 = vst [vmem:[%s172 + $0xa8] sm:$0xff] %v424
      %457 = vst [vmem:[%s172 + $0xb0] sm:$0xff] %v425
      %458 = vst [vmem:[%s172 + $0xb8] sm:$0xff] %v426
      %459 = vst [vmem:[%s172 + $0xc0] sm:$0xff] %v427
      %460 = vst [vmem:[%s172 + $0xc8] sm:$0xff] %v428
      %461 = vst [vmem:[%s172 + $0xd0] sm:$0xff] %v429
      %462 = vst [vmem:[%s172 + $0xd8] sm:$0xff] %v430
      %463 = vst [vmem:[%s172 + $0xe0] sm:$0xff] %v431
      %464 = vst [vmem:[%s172 + $0xe8] sm:$0xff] %v432
      %465 = vst [vmem:[%s172 + $0xf0] sm:$0xff] %v433
      %466 = vst [vmem:[%s172 + $0xf8] sm:$0xff] %v434
      %s467 = smul.u32 32, %s14
      %p468 = scmp.lt.s32.totalorder %s467, 63
      %s469 = scalar_select %p468, %s467, 63
      %s470 = smul.addr %s469, 8
      %s471 = scalar_lea.vmem %s3, %s470
      // Predicated region
      $region33: #{_lambda_.6} parent=31 // pred_check
        %p472 = pneg %p100
      $region34: #{_lambda_.6} parent=31 // pred_check_branch
        %474 = sbr.rel (%p472) target = $region36
      $region35: #{_lambda_.6} parent=31 // pred_region
        %s475 = smul.u32 32, %s14
      $region36: #{_lambda_.6} parent=31 // pred_fallthru
        _
    $region32: #{_lambda_.6} parent=5 // pred_fallthru
      _
    %p476 = scmp.le.s32.totalorder 2, %s9
    // Predicated region
    $region37: #{_lambda_.6} parent=5 // pred_check
      %p477 = pneg %p476
    $region38: #{_lambda_.6} parent=5 // pred_check_branch
      %479 = sbr.rel (%p477) target = $region40
    $region39: #{_lambda_.6} parent=5 // pred_region
      %s480 = ssub.s32 %s9, 2
      // Predicated region
      $region41: #{_lambda_.6} parent=39 // pred_check
        %p481 = pneg %p106
      $region42: #{_lambda_.6} parent=39 // pred_check_branch
        %483 = sbr.rel (%p481) target = $region44
      $region43: #{_lambda_.6} parent=39 // pred_region
        %s484 = smul.u32 32, %s15
        %p485 = scmp.lt.s32.totalorder %s484, 63
        %s486 = scalar_select %p485, %s484, 63
        %s487 = smul.addr %s486, 8
        %s488 = scalar_lea.vmem %s3, %s487
      $region44: #{_lambda_.6} parent=39 // pred_fallthru
        _
    $region40: #{_lambda_.6} parent=5 // pred_fallthru
      _
  $region6: #{_lambda_.6} parent=0 // loop_footer
    %s13 = sadd.s32 1, %s9
  $region7: #{_lambda_.6} parent=0 // loop_footer_branch
    %8 = sbr.rel target = $region3
  $region8: #{_lambda_.6} parent=0 // loop_exit
    _

// kernel: _lambda_.7
$region0: #{_lambda_.7}
  #allocation0 [shape = 'u32[]', space=smem, size = 0x4, offset = 0x4, fixed_abs, tag = 'smem constant byte address 0x4 - core index']
  #allocation1 [shape = 'u32[72,128]{1,0:T(1,128)}', space=vmem, size = 0x9000, scoped, tag = 'internal scratch']
  %s0 = inlined_call_operand.vmem [shape: f32[128,384], index: 0, kind: input, shape index: {}]
  %s1 = inlined_call_operand.vmem [shape: f32[384,128], index: 1, kind: input, shape index: {}]
  %s2 = inlined_call_operand.vmem [shape: f32[1,128], index: 2, kind: input, shape index: {}]
  %s3 = inlined_call_operand.vmem [shape: f32[128,128], index: 3, kind: output, shape index: {}]
  %s4 = sld [smem:[#allocation0]]
  $region45: #{_lambda_.7} parent=0
    _
  %s6 = ssub.s32 1, %s4
  %s7 = scalar_select 0, %s6, %s4
  loop: start=0, step=1, limit=4
  $region2: #{_lambda_.7} parent=0 // loop_pre_header
    _
  $region3: #{_lambda_.7} parent=0 // loop_header
    %s9 = sphi 0, %s13
    %p10 = scmp.ge.s32.totalorder %s9, 4
    %s19 = sphi 0, %s21
    %s22 = sphi 0, %s19
    %s23 = sphi 0, %s22
    %s39 = sphi 0, %s23
    %s43 = sphi 0, %s43
    %s45 = sphi 0, %s43
    %s46 = sphi 0, %s45
    %s60 = sphi 0, %s46
    %s64 = sphi 0, %s64
    %s66 = sphi 0, %s64
    %s67 = sphi 0, %s66
    %s81 = sphi 0, %s67
    %s87 = sphi 0, %s89
    %s90 = sphi 0, %s87
    %s91 = sphi 0, %s90
    %s107 = sphi 0, %s91
  $region4: #{_lambda_.7} parent=0 // loop_header_branch
    %12 = sbr.rel (%p10) target = $region8
  $region5: #{_lambda_.7} parent=0 // loop_body
    %s14 = ssub.s32 %s9, 1
    %s15 = ssub.s32 %s9, 2
    %s16 = sadd.s32 %s9, 1
    %s17 = ssub.s32 %s9, %s16
    %p18 = scmp.eq.s32.totalorder %s17, 0
    %s20 = sadd.s32 %s19, 1
    %s21 = scalar_select %p18, %s19, %s20
    %p24 = pneg %p18
    %p25 = scmp.eq.s32.totalorder %s9, 1
    %p26 = por %p24, %p25
    %p27 = scmp.ne.s32.totalorder %s19, %s22
    %p28 = scmp.eq.s32.totalorder %s9, 0
    %p29 = por %p27, %p28
    %p30 = scmp.ne.s32.totalorder %s19, %s22
    %p31 = scmp.eq.s32.totalorder %s14, 1
    %p32 = por %p30, %p31
    %p33 = scmp.ne.s32.totalorder %s22, %s23
    %p34 = scmp.eq.s32.totalorder %s14, 0
    %p35 = por %p33, %p34
    %p36 = scmp.ne.s32.totalorder %s22, %s23
    %p37 = scmp.eq.s32.totalorder %s15, 1
    %p38 = por %p36, %p37
    %p40 = scmp.ne.s32.totalorder %s23, %s39
    %p41 = scmp.eq.s32.totalorder %s15, 0
    %p42 = por %p40, %p41
    %s44 = sadd.s32 %s43, 1
    %p47 = scmp.eq.s32.totalorder %s9, 1
    %p48 = scmp.ne.s32.totalorder %s43, %s45
    %p49 = scmp.eq.s32.totalorder %s9, 0
    %p50 = por %p48, %p49
    %p51 = scmp.ne.s32.totalorder %s43, %s45
    %p52 = scmp.eq.s32.totalorder %s14, 1
    %p53 = por %p51, %p52
    %p54 = scmp.ne.s32.totalorder %s45, %s46
    %p55 = scmp.eq.s32.totalorder %s14, 0
    %p56 = por %p54, %p55
    %p57 = scmp.ne.s32.totalorder %s45, %s46
    %p58 = scmp.eq.s32.totalorder %s15, 1
    %p59 = por %p57, %p58
    %p61 = scmp.ne.s32.totalorder %s46, %s60
    %p62 = scmp.eq.s32.totalorder %s15, 0
    %p63 = por %p61, %p62
    %s65 = sadd.s32 %s64, 1
    %p68 = scmp.eq.s32.totalorder %s9, 1
    %p69 = scmp.ne.s32.totalorder %s64, %s66
    %p70 = scmp.eq.s32.totalorder %s9, 0
    %p71 = por %p69, %p70
    %p72 = scmp.ne.s32.totalorder %s64, %s66
    %p73 = scmp.eq.s32.totalorder %s14, 1
    %p74 = por %p72, %p73
    %p75 = scmp.ne.s32.totalorder %s66, %s67
    %p76 = scmp.eq.s32.totalorder %s14, 0
    %p77 = por %p75, %p76
    %p78 = scmp.ne.s32.totalorder %s66, %s67
    %p79 = scmp.eq.s32.totalorder %s15, 1
    %p80 = por %p78, %p79
    %p82 = scmp.ne.s32.totalorder %s67, %s81
    %p83 = scmp.eq.s32.totalorder %s15, 0
    %p84 = por %p82, %p83
    %s85 = ssub.s32 %s9, %s16
    %p86 = scmp.eq.s32.totalorder %s85, 0
    %s88 = sadd.s32 %s87, 1
    %s89 = scalar_select %p86, %s87, %s88
    %p92 = pneg %p86
    %p93 = scmp.eq.s32.totalorder %s9, 1
    %p94 = por %p92, %p93
    %p95 = scmp.ne.s32.totalorder %s87, %s90
    %p96 = scmp.eq.s32.totalorder %s9, 0
    %p97 = por %p95, %p96
    %p98 = scmp.ne.s32.totalorder %s87, %s90
    %p99 = scmp.eq.s32.totalorder %s14, 1
    %p100 = por %p98, %p99
    %p101 = scmp.ne.s32.totalorder %s90, %s91
    %p102 = scmp.eq.s32.totalorder %s14, 0
    %p103 = por %p101, %p102
    %p104 = scmp.ne.s32.totalorder %s90, %s91
    %p105 = scmp.eq.s32.totalorder %s15, 1
    %p106 = por %p104, %p105
    %p108 = scmp.ne.s32.totalorder %s91, %s107
    %p109 = scmp.eq.s32.totalorder %s15, 0
    %p110 = por %p108, %p109
    %p111 = scmp.le.s32.totalorder 1, %s9
    %p112 = scmp.lt.s32.totalorder %s9, 3
    %p113 = pnand %p111, %p112
    %p114 = pneg %p113
    // Predicated region
    $region9: #{_lambda_.7} parent=5 // pred_check
      _
    $region10: #{_lambda_.7} parent=5 // pred_check_branch
      %116 = sbr.rel (%p113) target = $region12
    $region11: #{_lambda_.7} parent=5 // pred_region
      %s117 = ssub.s32 %s9, 1
      // Predicated region
      $region13: #{_lambda_.7} parent=11 // pred_check
        %p118 = pneg %p56
      $region14: #{_lambda_.7} parent=11 // pred_check_branch
        %120 = sbr.rel (%p118) target = $region16
      $region15: #{_lambda_.7} parent=11 // pred_region
        _
      $region16: #{_lambda_.7} parent=11 // pred_fallthru
        _
      // Predicated region
      $region17: #{_lambda_.7} parent=11 // pred_check
        %p121 = pneg %p77
      $region18: #{_lambda_.7} parent=11 // pred_check_branch
        %123 = sbr.rel (%p121) target = $region20
      $region19: #{_lambda_.7} parent=11 // pred_region
        _
      $region20: #{_lambda_.7} parent=11 // pred_fallthru
        _
    $region12: #{_lambda_.7} parent=5 // pred_fallthru
      _
    %p124 = scmp.lt.s32.totalorder %s9, 2
    // Predicated region
    $region21: #{_lambda_.7} parent=5 // pred_check
      %p125 = pneg %p124
    $region22: #{_lambda_.7} parent=5 // pred_check_branch
      %127 = sbr.rel (%p125) target = $region24
    $region23: #{_lambda_.7} parent=5 // pred_region
      // Predicated region
      $region25: #{_lambda_.7} parent=23 // pred_check
        %p128 = pneg %p29
      $region26: #{_lambda_.7} parent=23 // pred_check_branch
        %130 = sbr.rel (%p128) target = $region28
      $region27: #{_lambda_.7} parent=23 // pred_region
        %s131 = smul.u32 8, %s9
        %p132 = scmp.lt.s32.totalorder %s131, 15
        %s133 = scalar_select %p132, %s131, 15
        %s134 = smul.addr %s133, 3
        %s135 = smul.addr %s134, 8
        %s136 = scalar_lea.vmem %s0, %s135
        %s137 = smul.u32 8, %s9
      $region28: #{_lambda_.7} parent=23 // pred_fallthru
        _
    $region24: #{_lambda_.7} parent=5 // pred_fallthru
      _
    %p138 = scmp.le.s32.totalorder 1, %s9
    %p139 = scmp.lt.s32.totalorder %s9, 3
    %p140 = pnand %p138, %p139
    %p141 = pneg %p140
    // Predicated region
    $region29: #{_lambda_.7} parent=5 // pred_check
      _
    $region30: #{_lambda_.7} parent=5 // pred_check_branch
      %143 = sbr.rel (%p140) target = $region32
    $region31: #{_lambda_.7} parent=5 // pred_region
      %s144 = ssub.s32 %s9, 1
      %s145 = smul.u32 8, %s14
      %p146 = scmp.lt.s32.totalorder %s145, 15
      %s147 = scalar_select %p146, %s145, 15
      %s148 = smul.addr %s147, 3
      %s149 = smul.addr %s148, 8
      %s150 = scalar_lea.vmem %s0, %s149
      %p151 = pneg %p35
      %p152 = pneg %p32
      %p153 = pneg %p56
      %p154 = pneg %p53
      %p155 = pneg %p77
      %p156 = pneg %p74
      %p157 = pneg %p103
      %p158 = pneg %p100
      %s159 = smul.u32 8, %s14
      %p160 = scmp.lt.s32.totalorder %s159, 15
      %s161 = scalar_select %p160, %s159, 15
      %s162 = smul.addr %s161, 8
      %s163 = scalar_lea.vmem %s3, %s162
      %s164 = smul.u32 8, %s14
      %p165 = scmp.lt.s32.totalorder %s164, 15
      %s166 = scalar_select %p165, %s164, 15
      %s167 = smul.addr %s166, 3
      %s168 = smul.addr %s167, 8
      %s169 = scalar_lea.vmem %s0, %s168
      %s170 = smul.u32 8, %s14
      %s171 = smul.u32 8, %s14
      %p172 = scmp.lt.s32.totalorder %s171, 15
      %s173 = scalar_select %p172, %s171, 15
      %s174 = smul.addr %s173, 8
      %s175 = scalar_lea.vmem %s3, %s174
      %s176 = smul.u32 8, %s14
      %v177 = vld [vmem:[%s169] sm:$0xff]
      %v178 = vld [vmem:[%s169 + $0x8] sm:$0xff]
      %v179 = vld [vmem:[%s169 + $0x10] sm:$0xff]
      %v180 = vld [vmem:[%s169 + $0x18] sm:$0xff]
      %v181 = vld [vmem:[%s169 + $0x20] sm:$0xff]
      %v182 = vld [vmem:[%s169 + $0x28] sm:$0xff]
      %v183 = vld [vmem:[%s169 + $0x30] sm:$0xff]
      %v184 = vld [vmem:[%s169 + $0x38] sm:$0xff]
      %v185 = vld [vmem:[%s169 + $0x40] sm:$0xff]
      %v186 = vld [vmem:[%s169 + $0x48] sm:$0xff]
      %v187 = vld [vmem:[%s169 + $0x50] sm:$0xff]
      %v188 = vld [vmem:[%s169 + $0x58] sm:$0xff]
      %v189 = vld [vmem:[%s169 + $0x60] sm:$0xff]
      %v190 = vld [vmem:[%s169 + $0x68] sm:$0xff]
      %v191 = vld [vmem:[%s169 + $0x70] sm:$0xff]
      %v192 = vld [vmem:[%s169 + $0x78] sm:$0xff]
      %v193 = vld [vmem:[%s169 + $0x80] sm:$0xff]
      %v194 = vld [vmem:[%s169 + $0x88] sm:$0xff]
      %v195 = vld [vmem:[%s169 + $0x90] sm:$0xff]
      %v196 = vld [vmem:[%s169 + $0x98] sm:$0xff]
      %v197 = vld [vmem:[%s169 + $0xa0] sm:$0xff]
      %v198 = vld [vmem:[%s169 + $0xa8] sm:$0xff]
      %v199 = vld [vmem:[%s169 + $0xb0] sm:$0xff]
      %v200 = vld [vmem:[%s169 + $0xb8] sm:$0xff]
      %v201 = vld [vmem:[%s1] sm:$0xff]
      %v202 = vld [vmem:[%s1 + $0x8] sm:$0xff]
      %v203 = vld [vmem:[%s1 + $0x10] sm:$0xff]
      %v204 = vld [vmem:[%s1 + $0x18] sm:$0xff]
      %v205 = vld [vmem:[%s1 + $0x20] sm:$0xff]
      %v206 = vld [vmem:[%s1 + $0x28] sm:$0xff]
      %v207 = vld [vmem:[%s1 + $0x30] sm:$0xff]
      %v208 = vld [vmem:[%s1 + $0x38] sm:$0xff]
      %v209 = vld [vmem:[%s1 + $0x40] sm:$0xff]
      %v210 = vld [vmem:[%s1 + $0x48] sm:$0xff]
      %v211 = vld [vmem:[%s1 + $0x50] sm:$0xff]
      %v212 = vld [vmem:[%s1 + $0x58] sm:$0xff]
      %v213 = vld [vmem:[%s1 + $0x60] sm:$0xff]
      %v214 = vld [vmem:[%s1 + $0x68] sm:$0xff]
      %v215 = vld [vmem:[%s1 + $0x70] sm:$0xff]
      %v216 = vld [vmem:[%s1 + $0x78] sm:$0xff]
      %v217 = vld [vmem:[%s1 + $0x80] sm:$0xff]
      %v218 = vld [vmem:[%s1 + $0x88] sm:$0xff]
      %v219 = vld [vmem:[%s1 + $0x90] sm:$0xff]
      %v220 = vld [vmem:[%s1 + $0x98] sm:$0xff]
      %v221 = vld [vmem:[%s1 + $0xa0] sm:$0xff]
      %v222 = vld [vmem:[%s1 + $0xa8] sm:$0xff]
      %v223 = vld [vmem:[%s1 + $0xb0] sm:$0xff]
      %v224 = vld [vmem:[%s1 + $0xb8] sm:$0xff]
      %v225 = vld [vmem:[%s1 + $0xc0] sm:$0xff]
      %v226 = vld [vmem:[%s1 + $0xc8] sm:$0xff]
      %v227 = vld [vmem:[%s1 + $0xd0] sm:$0xff]
      %v228 = vld [vmem:[%s1 + $0xd8] sm:$0xff]
      %v229 = vld [vmem:[%s1 + $0xe0] sm:$0xff]
      %v230 = vld [vmem:[%s1 + $0xe8] sm:$0xff]
      %v231 = vld [vmem:[%s1 + $0xf0] sm:$0xff]
      %v232 = vld [vmem:[%s1 + $0xf8] sm:$0xff]
      %v233 = vld [vmem:[%s1 + $0x100] sm:$0xff]
      %v234 = vld [vmem:[%s1 + $0x108] sm:$0xff]
      %v235 = vld [vmem:[%s1 + $0x110] sm:$0xff]
      %v236 = vld [vmem:[%s1 + $0x118] sm:$0xff]
      %v237 = vld [vmem:[%s1 + $0x120] sm:$0xff]
      %v238 = vld [vmem:[%s1 + $0x128] sm:$0xff]
      %v239 = vld [vmem:[%s1 + $0x130] sm:$0xff]
      %v240 = vld [vmem:[%s1 + $0x138] sm:$0xff]
      %v241 = vld [vmem:[%s1 + $0x140] sm:$0xff]
      %v242 = vld [vmem:[%s1 + $0x148] sm:$0xff]
      %v243 = vld [vmem:[%s1 + $0x150] sm:$0xff]
      %v244 = vld [vmem:[%s1 + $0x158] sm:$0xff]
      %v245 = vld [vmem:[%s1 + $0x160] sm:$0xff]
      %v246 = vld [vmem:[%s1 + $0x168] sm:$0xff]
      %v247 = vld [vmem:[%s1 + $0x170] sm:$0xff]
      %v248 = vld [vmem:[%s1 + $0x178] sm:$0xff]
      %v249 = vld [vmem:[%s2] sm:$0x1]
      %v251 = vperm.slane %v249, 0
      %253 = vmatpush.msra.mxu0 %v216
      %254 = vmatpush.msra.mxu0 %v215
      %255 = vmatpush.msra.mxu0 %v214
      %256 = vmatpush.msra.mxu0 %v213
      %257 = vmatpush.msra.mxu0 %v212
      %258 = vmatpush.msra.mxu0 %v211
      %259 = vmatpush.msra.mxu0 %v210
      %260 = vmatpush.msra.mxu0 %v209
      %261 = vmatpush.msra.mxu0 %v208
      %262 = vmatpush.msra.mxu0 %v207
      %263 = vmatpush.msra.mxu0 %v206
      %264 = vmatpush.msra.mxu0 %v205
      %265 = vmatpush.msra.mxu0 %v204
      %266 = vmatpush.msra.mxu0 %v203
      %267 = vmatpush.msra.mxu0 %v202
      %268 = vmatpush.msra.mxu0 %v201
      %269 = vmatmul.f32.gmra.mxu0 %v177
      %v270 = vpop.f32.mrf.mxu0
      %v271 = vadd.f32 %v251, %v270
      %272 = vmatmul.f32.gmra.mxu0 %v180
      %v273 = vpop.f32.mrf.mxu0
      %v274 = vadd.f32 %v251, %v273
      %275 = vmatmul.f32.gmra.mxu0 %v183
      %v276 = vpop.f32.mrf.mxu0
      %v277 = vadd.f32 %v251, %v276
      %278 = vmatmul.f32.gmra.mxu0 %v186
      %v279 = vpop.f32.mrf.mxu0
      %v280 = vadd.f32 %v251, %v279
      %281 = vmatmul.f32.gmra.mxu0 %v189
      %v282 = vpop.f32.mrf.mxu0
      %v283 = vadd.f32 %v251, %v282
      %284 = vmatmul.f32.gmra.mxu0 %v192
      %v285 = vpop.f32.mrf.mxu0
      %v286 = vadd.f32 %v251, %v285
      %287 = vmatmul.f32.gmra.mxu0 %v195
      %v288 = vpop.f32.mrf.mxu0
      %v289 = vadd.f32 %v251, %v288
      %290 = vmatmul.f32.gmra.mxu0 %v198
      %v291 = vpop.f32.mrf.mxu0
      %v292 = vadd.f32 %v251, %v291
      %293 = vdwg.mxu0
      %294 = vmatpush.msra.mxu0 %v232
      %295 = vmatpush.msra.mxu0 %v231
      %296 = vmatpush.msra.mxu0 %v230
      %297 = vmatpush.msra.mxu0 %v229
      %298 = vmatpush.msra.mxu0 %v228
      %299 = vmatpush.msra.mxu0 %v227
      %300 = vmatpush.msra.mxu0 %v226
      %301 = vmatpush.msra.mxu0 %v225
      %302 = vmatpush.msra.mxu0 %v224
      %303 = vmatpush.msra.mxu0 %v223
      %304 = vmatpush.msra.mxu0 %v222
      %305 = vmatpush.msra.mxu0 %v221
      %306 = vmatpush.msra.mxu0 %v220
      %307 = vmatpush.msra.mxu0 %v219
      %308 = vmatpush.msra.mxu0 %v218
      %309 = vmatpush.msra.mxu0 %v217
      %310 = vmatmul.f32.gmra.mxu0 %v178
      %v311 = vpop.f32.mrf.mxu0
      %v312 = vadd.f32 %v271, %v311
      %313 = vmatmul.f32.gmra.mxu0 %v181
      %v314 = vpop.f32.mrf.mxu0
      %v315 = vadd.f32 %v274, %v314
      %316 = vmatmul.f32.gmra.mxu0 %v184
      %v317 = vpop.f32.mrf.mxu0
      %v318 = vadd.f32 %v277, %v317
      %319 = vmatmul.f32.gmra.mxu0 %v187
      %v320 = vpop.f32.mrf.mxu0
      %v321 = vadd.f32 %v280, %v320
      %322 = vmatmul.f32.gmra.mxu0 %v190
      %v323 = vpop.f32.mrf.mxu0
      %v324 = vadd.f32 %v283, %v323
      %325 = vmatmul.f32.gmra.mxu0 %v193
      %v326 = vpop.f32.mrf.mxu0
      %v327 = vadd.f32 %v286, %v326
      %328 = vmatmul.f32.gmra.mxu0 %v196
      %v329 = vpop.f32.mrf.mxu0
      %v330 = vadd.f32 %v289, %v329
      %331 = vmatmul.f32.gmra.mxu0 %v199
      %v332 = vpop.f32.mrf.mxu0
      %v333 = vadd.f32 %v292, %v332
      %334 = vdwg.mxu0
      %335 = vmatpush.msra.mxu0 %v248
      %336 = vmatpush.msra.mxu0 %v247
      %337 = vmatpush.msra.mxu0 %v246
      %338 = vmatpush.msra.mxu0 %v245
      %339 = vmatpush.msra.mxu0 %v244
      %340 = vmatpush.msra.mxu0 %v243
      %341 = vmatpush.msra.mxu0 %v242
      %342 = vmatpush.msra.mxu0 %v241
      %343 = vmatpush.msra.mxu0 %v240
      %344 = vmatpush.msra.mxu0 %v239
      %345 = vmatpush.msra.mxu0 %v238
      %346 = vmatpush.msra.mxu0 %v237
      %347 = vmatpush.msra.mxu0 %v236
      %348 = vmatpush.msra.mxu0 %v235
      %349 = vmatpush.msra.mxu0 %v234
      %350 = vmatpush.msra.mxu0 %v233
      %351 = vmatmul.f32.gmra.mxu0 %v179
      %v352 = vpop.f32.mrf.mxu0
      %v353 = vadd.f32 %v312, %v352
      %354 = vmatmul.f32.gmra.mxu0 %v182
      %v355 = vpop.f32.mrf.mxu0
      %v356 = vadd.f32 %v315, %v355
      %357 = vmatmul.f32.gmra.mxu0 %v185
      %v358 = vpop.f32.mrf.mxu0
      %v359 = vadd.f32 %v318, %v358
      %360 = vmatmul.f32.gmra.mxu0 %v188
      %v361 = vpop.f32.mrf.mxu0
      %v362 = vadd.f32 %v321, %v361
      %363 = vmatmul.f32.gmra.mxu0 %v191
      %v364 = vpop.f32.mrf.mxu0
      %v365 = vadd.f32 %v324, %v364
      %366 = vmatmul.f32.gmra.mxu0 %v194
      %v367 = vpop.f32.mrf.mxu0
      %v368 = vadd.f32 %v327, %v367
      %369 = vmatmul.f32.gmra.mxu0 %v197
      %v370 = vpop.f32.mrf.mxu0
      %v371 = vadd.f32 %v330, %v370
      %372 = vmatmul.f32.gmra.mxu0 %v200
      %v373 = vpop.f32.mrf.mxu0
      %v374 = vadd.f32 %v333, %v373
      %375 = vdwg.mxu0
      %vm376 = vcmp.gt.f32.partialorder %v353, 0.0
      %vm377 = vcmp.gt.f32.partialorder %v356, 0.0
      %vm378 = vcmp.gt.f32.partialorder %v359, 0.0
      %vm379 = vcmp.gt.f32.partialorder %v362, 0.0
      %vm380 = vcmp.gt.f32.partialorder %v365, 0.0
      %vm381 = vcmp.gt.f32.partialorder %v368, 0.0
      %vm382 = vcmp.gt.f32.partialorder %v371, 0.0
      %vm383 = vcmp.gt.f32.partialorder %v374, 0.0
      %v384 = vmul.f32 %v353, 0.2
      %v385 = vmul.f32 %v356, 0.2
      %v386 = vmul.f32 %v359, 0.2
      %v387 = vmul.f32 %v362, 0.2
      %v388 = vmul.f32 %v365, 0.2
      %v389 = vmul.f32 %v368, 0.2
      %v390 = vmul.f32 %v371, 0.2
      %v391 = vmul.f32 %v374, 0.2
      %v392 = vsel %vm376, %v353, %v384
      %v393 = vsel %vm377, %v356, %v385
      %v394 = vsel %vm378, %v359, %v386
      %v395 = vsel %vm379, %v362, %v387
      %v396 = vsel %vm380, %v365, %v388
      %v397 = vsel %vm381, %v368, %v389
      %v398 = vsel %vm382, %v371, %v390
      %v399 = vsel %vm383, %v374, %v391
      %400 = vst [vmem:[%s175] sm:$0xff] %v392
      %401 = vst [vmem:[%s175 + $0x8] sm:$0xff] %v393
      %402 = vst [vmem:[%s175 + $0x10] sm:$0xff] %v394
      %403 = vst [vmem:[%s175 + $0x18] sm:$0xff] %v395
      %404 = vst [vmem:[%s175 + $0x20] sm:$0xff] %v396
      %405 = vst [vmem:[%s175 + $0x28] sm:$0xff] %v397
      %406 = vst [vmem:[%s175 + $0x30] sm:$0xff] %v398
      %407 = vst [vmem:[%s175 + $0x38] sm:$0xff] %v399
      %s408 = smul.u32 8, %s14
      %p409 = scmp.lt.s32.totalorder %s408, 15
      %s410 = scalar_select %p409, %s408, 15
      %s411 = smul.addr %s410, 8
      %s412 = scalar_lea.vmem %s3, %s411
      // Predicated region
      $region33: #{_lambda_.7} parent=31 // pred_check
        %p413 = pneg %p100
      $region34: #{_lambda_.7} parent=31 // pred_check_branch
        %415 = sbr.rel (%p413) target = $region36
      $region35: #{_lambda_.7} parent=31 // pred_region
        %s416 = smul.u32 8, %s14
      $region36: #{_lambda_.7} parent=31 // pred_fallthru
        _
    $region32: #{_lambda_.7} parent=5 // pred_fallthru
      _
    %p417 = scmp.le.s32.totalorder 2, %s9
    // Predicated region
    $region37: #{_lambda_.7} parent=5 // pred_check
      %p418 = pneg %p417
    $region38: #{_lambda_.7} parent=5 // pred_check_branch
      %420 = sbr.rel (%p418) target = $region40
    $region39: #{_lambda_.7} parent=5 // pred_region
      %s421 = ssub.s32 %s9, 2
      // Predicated region
      $region41: #{_lambda_.7} parent=39 // pred_check
        %p422 = pneg %p106
      $region42: #{_lambda_.7} parent=39 // pred_check_branch
        %424 = sbr.rel (%p422) target = $region44
      $region43: #{_lambda_.7} parent=39 // pred_region
        %s425 = smul.u32 8, %s15
        %p426 = scmp.lt.s32.totalorder %s425, 15
        %s427 = scalar_select %p426, %s425, 15
        %s428 = smul.addr %s427, 8
        %s429 = scalar_lea.vmem %s3, %s428
      $region44: #{_lambda_.7} parent=39 // pred_fallthru
        _
    $region40: #{_lambda_.7} parent=5 // pred_fallthru
      _
  $region6: #{_lambda_.7} parent=0 // loop_footer
    %s13 = sadd.s32 1, %s9
  $region7: #{_lambda_.7} parent=0 // loop_footer_branch
    %8 = sbr.rel target = $region3
  $region8: #{_lambda_.7} parent=0 // loop_exit
    _

// kernel: _lambda_.9
$region0: #{_lambda_.9}
  #allocation0 [shape = 'u32[]', space=smem, size = 0x4, offset = 0x4, fixed_abs, tag = 'smem constant byte address 0x4 - core index']
  #allocation1 [shape = 'u32[72,128]{1,0:T(1,128)}', space=vmem, size = 0x9000, scoped, tag = 'internal scratch']
  %s0 = inlined_call_operand.vmem [shape: f32[32,256], index: 0, kind: input, shape index: {}]
  %s1 = inlined_call_operand.vmem [shape: f32[256,256], index: 1, kind: input, shape index: {}]
  %s2 = inlined_call_operand.vmem [shape: f32[1,256], index: 2, kind: input, shape index: {}]
  %s3 = inlined_call_operand.vmem [shape: f32[32,256], index: 3, kind: output, shape index: {}]
  %s4 = sld [smem:[#allocation0]]
  $region45: #{_lambda_.9} parent=0
    _
  %s6 = ssub.s32 1, %s4
  %s7 = scalar_select 0, %s6, %s4
  loop: start=0, step=1, limit=4
  $region2: #{_lambda_.9} parent=0 // loop_pre_header
    _
  $region3: #{_lambda_.9} parent=0 // loop_header
    %s9 = sphi 0, %s13
    %p10 = scmp.ge.s32.totalorder %s9, 4
    %s19 = sphi 0, %s21
    %s22 = sphi 0, %s19
    %s23 = sphi 0, %s22
    %s39 = sphi 0, %s23
    %s43 = sphi 0, %s43
    %s45 = sphi 0, %s43
    %s46 = sphi 0, %s45
    %s60 = sphi 0, %s46
    %s64 = sphi 0, %s64
    %s66 = sphi 0, %s64
    %s67 = sphi 0, %s66
    %s81 = sphi 0, %s67
    %s87 = sphi 0, %s89
    %s90 = sphi 0, %s87
    %s91 = sphi 0, %s90
    %s107 = sphi 0, %s91
  $region4: #{_lambda_.9} parent=0 // loop_header_branch
    %12 = sbr.rel (%p10) target = $region8
  $region5: #{_lambda_.9} parent=0 // loop_body
    %s14 = ssub.s32 %s9, 1
    %s15 = ssub.s32 %s9, 2
    %s16 = sadd.s32 %s9, 1
    %s17 = ssub.s32 %s9, %s16
    %p18 = scmp.eq.s32.totalorder %s17, 0
    %s20 = sadd.s32 %s19, 1
    %s21 = scalar_select %p18, %s19, %s20
    %p24 = pneg %p18
    %p25 = scmp.eq.s32.totalorder %s9, 1
    %p26 = por %p24, %p25
    %p27 = scmp.ne.s32.totalorder %s19, %s22
    %p28 = scmp.eq.s32.totalorder %s9, 0
    %p29 = por %p27, %p28
    %p30 = scmp.ne.s32.totalorder %s19, %s22
    %p31 = scmp.eq.s32.totalorder %s14, 1
    %p32 = por %p30, %p31
    %p33 = scmp.ne.s32.totalorder %s22, %s23
    %p34 = scmp.eq.s32.totalorder %s14, 0
    %p35 = por %p33, %p34
    %p36 = scmp.ne.s32.totalorder %s22, %s23
    %p37 = scmp.eq.s32.totalorder %s15, 1
    %p38 = por %p36, %p37
    %p40 = scmp.ne.s32.totalorder %s23, %s39
    %p41 = scmp.eq.s32.totalorder %s15, 0
    %p42 = por %p40, %p41
    %s44 = sadd.s32 %s43, 1
    %p47 = scmp.eq.s32.totalorder %s9, 1
    %p48 = scmp.ne.s32.totalorder %s43, %s45
    %p49 = scmp.eq.s32.totalorder %s9, 0
    %p50 = por %p48, %p49
    %p51 = scmp.ne.s32.totalorder %s43, %s45
    %p52 = scmp.eq.s32.totalorder %s14, 1
    %p53 = por %p51, %p52
    %p54 = scmp.ne.s32.totalorder %s45, %s46
    %p55 = scmp.eq.s32.totalorder %s14, 0
    %p56 = por %p54, %p55
    %p57 = scmp.ne.s32.totalorder %s45, %s46
    %p58 = scmp.eq.s32.totalorder %s15, 1
    %p59 = por %p57, %p58
    %p61 = scmp.ne.s32.totalorder %s46, %s60
    %p62 = scmp.eq.s32.totalorder %s15, 0
    %p63 = por %p61, %p62
    %s65 = sadd.s32 %s64, 1
    %p68 = scmp.eq.s32.totalorder %s9, 1
    %p69 = scmp.ne.s32.totalorder %s64, %s66
    %p70 = scmp.eq.s32.totalorder %s9, 0
    %p71 = por %p69, %p70
    %p72 = scmp.ne.s32.totalorder %s64, %s66
    %p73 = scmp.eq.s32.totalorder %s14, 1
    %p74 = por %p72, %p73
    %p75 = scmp.ne.s32.totalorder %s66, %s67
    %p76 = scmp.eq.s32.totalorder %s14, 0
    %p77 = por %p75, %p76
    %p78 = scmp.ne.s32.totalorder %s66, %s67
    %p79 = scmp.eq.s32.totalorder %s15, 1
    %p80 = por %p78, %p79
    %p82 = scmp.ne.s32.totalorder %s67, %s81
    %p83 = scmp.eq.s32.totalorder %s15, 0
    %p84 = por %p82, %p83
    %s85 = ssub.s32 %s9, %s16
    %p86 = scmp.eq.s32.totalorder %s85, 0
    %s88 = sadd.s32 %s87, 1
    %s89 = scalar_select %p86, %s87, %s88
    %p92 = pneg %p86
    %p93 = scmp.eq.s32.totalorder %s9, 1
    %p94 = por %p92, %p93
    %p95 = scmp.ne.s32.totalorder %s87, %s90
    %p96 = scmp.eq.s32.totalorder %s9, 0
    %p97 = por %p95, %p96
    %p98 = scmp.ne.s32.totalorder %s87, %s90
    %p99 = scmp.eq.s32.totalorder %s14, 1
    %p100 = por %p98, %p99
    %p101 = scmp.ne.s32.totalorder %s90, %s91
    %p102 = scmp.eq.s32.totalorder %s14, 0
    %p103 = por %p101, %p102
    %p104 = scmp.ne.s32.totalorder %s90, %s91
    %p105 = scmp.eq.s32.totalorder %s15, 1
    %p106 = por %p104, %p105
    %p108 = scmp.ne.s32.totalorder %s91, %s107
    %p109 = scmp.eq.s32.totalorder %s15, 0
    %p110 = por %p108, %p109
    %p111 = scmp.le.s32.totalorder 1, %s9
    %p112 = scmp.lt.s32.totalorder %s9, 3
    %p113 = pnand %p111, %p112
    %p114 = pneg %p113
    // Predicated region
    $region9: #{_lambda_.9} parent=5 // pred_check
      _
    $region10: #{_lambda_.9} parent=5 // pred_check_branch
      %116 = sbr.rel (%p113) target = $region12
    $region11: #{_lambda_.9} parent=5 // pred_region
      %s117 = ssub.s32 %s9, 1
      // Predicated region
      $region13: #{_lambda_.9} parent=11 // pred_check
        %p118 = pneg %p56
      $region14: #{_lambda_.9} parent=11 // pred_check_branch
        %120 = sbr.rel (%p118) target = $region16
      $region15: #{_lambda_.9} parent=11 // pred_region
        _
      $region16: #{_lambda_.9} parent=11 // pred_fallthru
        _
      // Predicated region
      $region17: #{_lambda_.9} parent=11 // pred_check
        %p121 = pneg %p77
      $region18: #{_lambda_.9} parent=11 // pred_check_branch
        %123 = sbr.rel (%p121) target = $region20
      $region19: #{_lambda_.9} parent=11 // pred_region
        _
      $region20: #{_lambda_.9} parent=11 // pred_fallthru
        _
    $region12: #{_lambda_.9} parent=5 // pred_fallthru
      _
    %p124 = scmp.lt.s32.totalorder %s9, 2
    // Predicated region
    $region21: #{_lambda_.9} parent=5 // pred_check
      %p125 = pneg %p124
    $region22: #{_lambda_.9} parent=5 // pred_check_branch
      %127 = sbr.rel (%p125) target = $region24
    $region23: #{_lambda_.9} parent=5 // pred_region
      // Predicated region
      $region25: #{_lambda_.9} parent=23 // pred_check
        %p128 = pneg %p29
      $region26: #{_lambda_.9} parent=23 // pred_check_branch
        %130 = sbr.rel (%p128) target = $region28
      $region27: #{_lambda_.9} parent=23 // pred_region
        %s131 = smul.u32 2, %s9
        %p132 = scmp.lt.s32.totalorder %s131, 3
        %s133 = scalar_select %p132, %s131, 3
        %s134 = smul.addr %s133, 2
        %s135 = smul.addr %s134, 8
        %s136 = scalar_lea.vmem %s0, %s135
        %s137 = smul.u32 2, %s9
      $region28: #{_lambda_.9} parent=23 // pred_fallthru
        _
    $region24: #{_lambda_.9} parent=5 // pred_fallthru
      _
    %p138 = scmp.le.s32.totalorder 1, %s9
    %p139 = scmp.lt.s32.totalorder %s9, 3
    %p140 = pnand %p138, %p139
    %p141 = pneg %p140
    // Predicated region
    $region29: #{_lambda_.9} parent=5 // pred_check
      _
    $region30: #{_lambda_.9} parent=5 // pred_check_branch
      %143 = sbr.rel (%p140) target = $region32
    $region31: #{_lambda_.9} parent=5 // pred_region
      %s144 = ssub.s32 %s9, 1
      %s145 = smul.u32 2, %s14
      %p146 = scmp.lt.s32.totalorder %s145, 3
      %s147 = scalar_select %p146, %s145, 3
      %s148 = smul.addr %s147, 2
      %s149 = smul.addr %s148, 8
      %s150 = scalar_lea.vmem %s0, %s149
      %p151 = pneg %p35
      %p152 = pneg %p32
      %p153 = pneg %p56
      %p154 = pneg %p53
      %p155 = pneg %p77
      %p156 = pneg %p74
      %p157 = pneg %p103
      %p158 = pneg %p100
      %s159 = smul.u32 2, %s14
      %p160 = scmp.lt.s32.totalorder %s159, 3
      %s161 = scalar_select %p160, %s159, 3
      %s162 = smul.addr %s161, 2
      %s163 = smul.addr %s162, 8
      %s164 = scalar_lea.vmem %s3, %s163
      %s165 = smul.u32 2, %s14
      %p166 = scmp.lt.s32.totalorder %s165, 3
      %s167 = scalar_select %p166, %s165, 3
      %s168 = smul.addr %s167, 2
      %s169 = smul.addr %s168, 8
      %s170 = scalar_lea.vmem %s0, %s169
      %s171 = smul.u32 2, %s14
      %s172 = smul.u32 2, %s14
      %p173 = scmp.lt.s32.totalorder %s172, 3
      %s174 = scalar_select %p173, %s172, 3
      %s175 = smul.addr %s174, 2
      %s176 = smul.addr %s175, 8
      %s177 = scalar_lea.vmem %s3, %s176
      %s178 = smul.u32 2, %s14
      %v179 = vld [vmem:[%s170] sm:$0xff]
      %v180 = vld [vmem:[%s170 + $0x8] sm:$0xff]
      %v181 = vld [vmem:[%s170 + $0x10] sm:$0xff]
      %v182 = vld [vmem:[%s170 + $0x18] sm:$0xff]
      %v183 = vld [vmem:[%s1] sm:$0xff]
      %v184 = vld [vmem:[%s1 + $0x8] sm:$0xff]
      %v185 = vld [vmem:[%s1 + $0x10] sm:$0xff]
      %v186 = vld [vmem:[%s1 + $0x18] sm:$0xff]
      %v187 = vld [vmem:[%s1 + $0x20] sm:$0xff]
      %v188 = vld [vmem:[%s1 + $0x28] sm:$0xff]
      %v189 = vld [vmem:[%s1 + $0x30] sm:$0xff]
      %v190 = vld [vmem:[%s1 + $0x38] sm:$0xff]
      %v191 = vld [vmem:[%s1 + $0x40] sm:$0xff]
      %v192 = vld [vmem:[%s1 + $0x48] sm:$0xff]
      %v193 = vld [vmem:[%s1 + $0x50] sm:$0xff]
      %v194 = vld [vmem:[%s1 + $0x58] sm:$0xff]
      %v195 = vld [vmem:[%s1 + $0x60] sm:$0xff]
      %v196 = vld [vmem:[%s1 + $0x68] sm:$0xff]
      %v197 = vld [vmem:[%s1 + $0x70] sm:$0xff]
      %v198 = vld [vmem:[%s1 + $0x78] sm:$0xff]
      %v199 = vld [vmem:[%s1 + $0x80] sm:$0xff]
      %v200 = vld [vmem:[%s1 + $0x88] sm:$0xff]
      %v201 = vld [vmem:[%s1 + $0x90] sm:$0xff]
      %v202 = vld [vmem:[%s1 + $0x98] sm:$0xff]
      %v203 = vld [vmem:[%s1 + $0xa0] sm:$0xff]
      %v204 = vld [vmem:[%s1 + $0xa8] sm:$0xff]
      %v205 = vld [vmem:[%s1 + $0xb0] sm:$0xff]
      %v206 = vld [vmem:[%s1 + $0xb8] sm:$0xff]
      %v207 = vld [vmem:[%s1 + $0xc0] sm:$0xff]
      %v208 = vld [vmem:[%s1 + $0xc8] sm:$0xff]
      %v209 = vld [vmem:[%s1 + $0xd0] sm:$0xff]
      %v210 = vld [vmem:[%s1 + $0xd8] sm:$0xff]
      %v211 = vld [vmem:[%s1 + $0xe0] sm:$0xff]
      %v212 = vld [vmem:[%s1 + $0xe8] sm:$0xff]
      %v213 = vld [vmem:[%s1 + $0xf0] sm:$0xff]
      %v214 = vld [vmem:[%s1 + $0xf8] sm:$0xff]
      %v215 = vld [vmem:[%s1 + $0x100] sm:$0xff]
      %v216 = vld [vmem:[%s1 + $0x108] sm:$0xff]
      %v217 = vld [vmem:[%s1 + $0x110] sm:$0xff]
      %v218 = vld [vmem:[%s1 + $0x118] sm:$0xff]
      %v219 = vld [vmem:[%s1 + $0x120] sm:$0xff]
      %v220 = vld [vmem:[%s1 + $0x128] sm:$0xff]
      %v221 = vld [vmem:[%s1 + $0x130] sm:$0xff]
      %v222 = vld [vmem:[%s1 + $0x138] sm:$0xff]
      %v223 = vld [vmem:[%s1 + $0x140] sm:$0xff]
      %v224 = vld [vmem:[%s1 + $0x148] sm:$0xff]
      %v225 = vld [vmem:[%s1 + $0x150] sm:$0xff]
      %v226 = vld [vmem:[%s1 + $0x158] sm:$0xff]
      %v227 = vld [vmem:[%s1 + $0x160] sm:$0xff]
      %v228 = vld [vmem:[%s1 + $0x168] sm:$0xff]
      %v229 = vld [vmem:[%s1 + $0x170] sm:$0xff]
      %v230 = vld [vmem:[%s1 + $0x178] sm:$0xff]
      %v231 = vld [vmem:[%s1 + $0x180] sm:$0xff]
      %v232 = vld [vmem:[%s1 + $0x188] sm:$0xff]
      %v233 = vld [vmem:[%s1 + $0x190] sm:$0xff]
      %v234 = vld [vmem:[%s1 + $0x198] sm:$0xff]
      %v235 = vld [vmem:[%s1 + $0x1a0] sm:$0xff]
      %v236 = vld [vmem:[%s1 + $0x1a8] sm:$0xff]
      %v237 = vld [vmem:[%s1 + $0x1b0] sm:$0xff]
      %v238 = vld [vmem:[%s1 + $0x1b8] sm:$0xff]
      %v239 = vld [vmem:[%s1 + $0x1c0] sm:$0xff]
      %v240 = vld [vmem:[%s1 + $0x1c8] sm:$0xff]
      %v241 = vld [vmem:[%s1 + $0x1d0] sm:$0xff]
      %v242 = vld [vmem:[%s1 + $0x1d8] sm:$0xff]
      %v243 = vld [vmem:[%s1 + $0x1e0] sm:$0xff]
      %v244 = vld [vmem:[%s1 + $0x1e8] sm:$0xff]
      %v245 = vld [vmem:[%s1 + $0x1f0] sm:$0xff]
      %v246 = vld [vmem:[%s1 + $0x1f8] sm:$0xff]
      %v247 = vld [vmem:[%s2] sm:$0x3]
      %v249 = vperm.slane %v247, 0
      %v250 = vperm.slane %v247, 1
      %253 = vmatpush.msra.mxu0 %v213
      %254 = vmatpush.msra.mxu0 %v211
      %255 = vmatpush.msra.mxu0 %v209
      %256 = vmatpush.msra.mxu0 %v207
      %257 = vmatpush.msra.mxu0 %v205
      %258 = vmatpush.msra.mxu0 %v203
      %259 = vmatpush.msra.mxu0 %v201
      %260 = vmatpush.msra.mxu0 %v199
      %261 = vmatpush.msra.mxu0 %v197
      %262 = vmatpush.msra.mxu0 %v195
      %263 = vmatpush.msra.mxu0 %v193
      %264 = vmatpush.msra.mxu0 %v191
      %265 = vmatpush.msra.mxu0 %v189
      %266 = vmatpush.msra.mxu0 %v187
      %267 = vmatpush.msra.mxu0 %v185
      %268 = vmatpush.msra.mxu0 %v183
      %269 = vmatmul.f32.gmra.mxu0 %v179
      %v270 = vpop.f32.mrf.mxu0
      %v271 = vadd.f32 %v249, %v270
      %272 = vmatmul.f32.gmra.mxu0 %v181
      %v273 = vpop.f32.mrf.mxu0
      %v274 = vadd.f32 %v249, %v273
      %275 = vdwg.mxu0
      %276 = vmatpush.msra.mxu0 %v245
      %277 = vmatpush.msra.mxu0 %v243
      %278 = vmatpush.msra.mxu0 %v241
      %279 = vmatpush.msra.mxu0 %v239
      %280 = vmatpush.msra.mxu0 %v237
      %281 = vmatpush.msra.mxu0 %v235
      %282 = vmatpush.msra.mxu0 %v233
      %283 = vmatpush.msra.mxu0 %v231
      %284 = vmatpush.msra.mxu0 %v229
      %285 = vmatpush.msra.mxu0 %v227
      %286 = vmatpush.msra.mxu0 %v225
      %287 = vmatpush.msra.mxu0 %v223
      %288 = vmatpush.msra.mxu0 %v221
      %289 = vmatpush.msra.mxu0 %v219
      %290 = vmatpush.msra.mxu0 %v217
      %291 = vmatpush.msra.mxu0 %v215
      %292 = vmatmul.f32.gmra.mxu0 %v180
      %v293 = vpop.f32.mrf.mxu0
      %v294 = vadd.f32 %v271, %v293
      %295 = vmatmul.f32.gmra.mxu0 %v182
      %v296 = vpop.f32.mrf.mxu0
      %v297 = vadd.f32 %v274, %v296
      %298 = vdwg.mxu0
      %299 = vmatpush.msra.mxu0 %v214
      %300 = vmatpush.msra.mxu0 %v212
      %301 = vmatpush.msra.mxu0 %v210
      %302 = vmatpush.msra.mxu0 %v208
      %303 = vmatpush.msra.mxu0 %v206
      %304 = vmatpush.msra.mxu0 %v204
      %305 = vmatpush.msra.mxu0 %v202
      %306 = vmatpush.msra.mxu0 %v200
      %307 = vmatpush.msra.mxu0 %v198
      %308 = vmatpush.msra.mxu0 %v196
      %309 = vmatpush.msra.mxu0 %v194
      %310 = vmatpush.msra.mxu0 %v192
      %311 = vmatpush.msra.mxu0 %v190
      %312 = vmatpush.msra.mxu0 %v188
      %313 = vmatpush.msra.mxu0 %v186
      %314 = vmatpush.msra.mxu0 %v184
      %315 = vmatmul.f32.gmra.mxu0 %v179
      %v316 = vpop.f32.mrf.mxu0
      %v317 = vadd.f32 %v250, %v316
      %318 = vmatmul.f32.gmra.mxu0 %v181
      %v319 = vpop.f32.mrf.mxu0
      %v320 = vadd.f32 %v250, %v319
      %321 = vdwg.mxu0
      %322 = vmatpush.msra.mxu0 %v246
      %323 = vmatpush.msra.mxu0 %v244
      %324 = vmatpush.msra.mxu0 %v242
      %325 = vmatpush.msra.mxu0 %v240
      %326 = vmatpush.msra.mxu0 %v238
      %327 = vmatpush.msra.mxu0 %v236
      %328 = vmatpush.msra.mxu0 %v234
      %329 = vmatpush.msra.mxu0 %v232
      %330 = vmatpush.msra.mxu0 %v230
      %331 = vmatpush.msra.mxu0 %v228
      %332 = vmatpush.msra.mxu0 %v226
      %333 = vmatpush.msra.mxu0 %v224
      %334 = vmatpush.msra.mxu0 %v222
      %335 = vmatpush.msra.mxu0 %v220
      %336 = vmatpush.msra.mxu0 %v218
      %337 = vmatpush.msra.mxu0 %v216
      %338 = vmatmul.f32.gmra.mxu0 %v180
      %v339 = vpop.f32.mrf.mxu0
      %v340 = vadd.f32 %v317, %v339
      %341 = vmatmul.f32.gmra.mxu0 %v182
      %v342 = vpop.f32.mrf.mxu0
      %v343 = vadd.f32 %v320, %v342
      %344 = vdwg.mxu0
      %vm345 = vcmp.gt.f32.partialorder %v294, 0.0
      %vm346 = vcmp.gt.f32.partialorder %v340, 0.0
      %vm347 = vcmp.gt.f32.partialorder %v297, 0.0
      %vm348 = vcmp.gt.f32.partialorder %v343, 0.0
      %v349 = vmul.f32 %v294, 0.2
      %v350 = vmul.f32 %v340, 0.2
      %v351 = vmul.f32 %v297, 0.2
      %v352 = vmul.f32 %v343, 0.2
      %v353 = vsel %vm345, %v294, %v349
      %v354 = vsel %vm346, %v340, %v350
      %v355 = vsel %vm347, %v297, %v351
      %v356 = vsel %vm348, %v343, %v352
      %357 = vst [vmem:[%s177] sm:$0xff] %v353
      %358 = vst [vmem:[%s177 + $0x8] sm:$0xff] %v354
      %359 = vst [vmem:[%s177 + $0x10] sm:$0xff] %v355
      %360 = vst [vmem:[%s177 + $0x18] sm:$0xff] %v356
      %s361 = smul.u32 2, %s14
      %p362 = scmp.lt.s32.totalorder %s361, 3
      %s363 = scalar_select %p362, %s361, 3
      %s364 = smul.addr %s363, 2
      %s365 = smul.addr %s364, 8
      %s366 = scalar_lea.vmem %s3, %s365
      // Predicated region
      $region33: #{_lambda_.9} parent=31 // pred_check
        %p367 = pneg %p100
      $region34: #{_lambda_.9} parent=31 // pred_check_branch
        %369 = sbr.rel (%p367) target = $region36
      $region35: #{_lambda_.9} parent=31 // pred_region
        %s370 = smul.u32 2, %s14
      $region36: #{_lambda_.9} parent=31 // pred_fallthru
        _
    $region32: #{_lambda_.9} parent=5 // pred_fallthru
      _
    %p371 = scmp.le.s32.totalorder 2, %s9
    // Predicated region
    $region37: #{_lambda_.9} parent=5 // pred_check
      %p372 = pneg %p371
    $region38: #{_lambda_.9} parent=5 // pred_check_branch
      %374 = sbr.rel (%p372) target = $region40
    $region39: #{_lambda_.9} parent=5 // pred_region
      %s375 = ssub.s32 %s9, 2
      // Predicated region
      $region41: #{_lambda_.9} parent=39 // pred_check
        %p376 = pneg %p106
      $region42: #{_lambda_.9} parent=39 // pred_check_branch
        %378 = sbr.rel (%p376) target = $region44
      $region43: #{_lambda_.9} parent=39 // pred_region
        %s379 = smul.u32 2, %s15
        %p380 = scmp.lt.s32.totalorder %s379, 3
        %s381 = scalar_select %p380, %s379, 3
        %s382 = smul.addr %s381, 2
        %s383 = smul.addr %s382, 8
        %s384 = scalar_lea.vmem %s3, %s383
      $region44: #{_lambda_.9} parent=39 // pred_fallthru
        _
    $region40: #{_lambda_.9} parent=5 // pred_fallthru
      _
  $region6: #{_lambda_.9} parent=0 // loop_footer
    %s13 = sadd.s32 1, %s9
  $region7: #{_lambda_.9} parent=0 // loop_footer_branch
    %8 = sbr.rel target = $region3
  $region8: #{_lambda_.9} parent=0 // loop_exit
    _

// kernel: _lambda_.8
$region0: #{_lambda_.8}
  #allocation0 [shape = 'u32[]', space=smem, size = 0x4, offset = 0x4, fixed_abs, tag = 'smem constant byte address 0x4 - core index']
  #allocation1 [shape = 'u32[72,128]{1,0:T(1,128)}', space=vmem, size = 0x9000, scoped, tag = 'internal scratch']
  %s0 = inlined_call_operand.vmem [shape: f32[32,640], index: 0, kind: input, shape index: {}]
  %s1 = inlined_call_operand.vmem [shape: f32[640,128], index: 1, kind: input, shape index: {}]
  %s2 = inlined_call_operand.vmem [shape: f32[1,128], index: 2, kind: input, shape index: {}]
  %s3 = inlined_call_operand.vmem [shape: f32[32,128], index: 3, kind: output, shape index: {}]
  %s4 = sld [smem:[#allocation0]]
  $region45: #{_lambda_.8} parent=0
    _
  %s6 = ssub.s32 1, %s4
  %s7 = scalar_select 0, %s6, %s4
  loop: start=0, step=1, limit=4
  $region2: #{_lambda_.8} parent=0 // loop_pre_header
    _
  $region3: #{_lambda_.8} parent=0 // loop_header
    %s9 = sphi 0, %s13
    %p10 = scmp.ge.s32.totalorder %s9, 4
    %s19 = sphi 0, %s21
    %s22 = sphi 0, %s19
    %s23 = sphi 0, %s22
    %s39 = sphi 0, %s23
    %s43 = sphi 0, %s43
    %s45 = sphi 0, %s43
    %s46 = sphi 0, %s45
    %s60 = sphi 0, %s46
    %s64 = sphi 0, %s64
    %s66 = sphi 0, %s64
    %s67 = sphi 0, %s66
    %s81 = sphi 0, %s67
    %s87 = sphi 0, %s89
    %s90 = sphi 0, %s87
    %s91 = sphi 0, %s90
    %s107 = sphi 0, %s91
  $region4: #{_lambda_.8} parent=0 // loop_header_branch
    %12 = sbr.rel (%p10) target = $region8
  $region5: #{_lambda_.8} parent=0 // loop_body
    %s14 = ssub.s32 %s9, 1
    %s15 = ssub.s32 %s9, 2
    %s16 = sadd.s32 %s9, 1
    %s17 = ssub.s32 %s9, %s16
    %p18 = scmp.eq.s32.totalorder %s17, 0
    %s20 = sadd.s32 %s19, 1
    %s21 = scalar_select %p18, %s19, %s20
    %p24 = pneg %p18
    %p25 = scmp.eq.s32.totalorder %s9, 1
    %p26 = por %p24, %p25
    %p27 = scmp.ne.s32.totalorder %s19, %s22
    %p28 = scmp.eq.s32.totalorder %s9, 0
    %p29 = por %p27, %p28
    %p30 = scmp.ne.s32.totalorder %s19, %s22
    %p31 = scmp.eq.s32.totalorder %s14, 1
    %p32 = por %p30, %p31
    %p33 = scmp.ne.s32.totalorder %s22, %s23
    %p34 = scmp.eq.s32.totalorder %s14, 0
    %p35 = por %p33, %p34
    %p36 = scmp.ne.s32.totalorder %s22, %s23
    %p37 = scmp.eq.s32.totalorder %s15, 1
    %p38 = por %p36, %p37
    %p40 = scmp.ne.s32.totalorder %s23, %s39
    %p41 = scmp.eq.s32.totalorder %s15, 0
    %p42 = por %p40, %p41
    %s44 = sadd.s32 %s43, 1
    %p47 = scmp.eq.s32.totalorder %s9, 1
    %p48 = scmp.ne.s32.totalorder %s43, %s45
    %p49 = scmp.eq.s32.totalorder %s9, 0
    %p50 = por %p48, %p49
    %p51 = scmp.ne.s32.totalorder %s43, %s45
    %p52 = scmp.eq.s32.totalorder %s14, 1
    %p53 = por %p51, %p52
    %p54 = scmp.ne.s32.totalorder %s45, %s46
    %p55 = scmp.eq.s32.totalorder %s14, 0
    %p56 = por %p54, %p55
    %p57 = scmp.ne.s32.totalorder %s45, %s46
    %p58 = scmp.eq.s32.totalorder %s15, 1
    %p59 = por %p57, %p58
    %p61 = scmp.ne.s32.totalorder %s46, %s60
    %p62 = scmp.eq.s32.totalorder %s15, 0
    %p63 = por %p61, %p62
    %s65 = sadd.s32 %s64, 1
    %p68 = scmp.eq.s32.totalorder %s9, 1
    %p69 = scmp.ne.s32.totalorder %s64, %s66
    %p70 = scmp.eq.s32.totalorder %s9, 0
    %p71 = por %p69, %p70
    %p72 = scmp.ne.s32.totalorder %s64, %s66
    %p73 = scmp.eq.s32.totalorder %s14, 1
    %p74 = por %p72, %p73
    %p75 = scmp.ne.s32.totalorder %s66, %s67
    %p76 = scmp.eq.s32.totalorder %s14, 0
    %p77 = por %p75, %p76
    %p78 = scmp.ne.s32.totalorder %s66, %s67
    %p79 = scmp.eq.s32.totalorder %s15, 1
    %p80 = por %p78, %p79
    %p82 = scmp.ne.s32.totalorder %s67, %s81
    %p83 = scmp.eq.s32.totalorder %s15, 0
    %p84 = por %p82, %p83
    %s85 = ssub.s32 %s9, %s16
    %p86 = scmp.eq.s32.totalorder %s85, 0
    %s88 = sadd.s32 %s87, 1
    %s89 = scalar_select %p86, %s87, %s88
    %p92 = pneg %p86
    %p93 = scmp.eq.s32.totalorder %s9, 1
    %p94 = por %p92, %p93
    %p95 = scmp.ne.s32.totalorder %s87, %s90
    %p96 = scmp.eq.s32.totalorder %s9, 0
    %p97 = por %p95, %p96
    %p98 = scmp.ne.s32.totalorder %s87, %s90
    %p99 = scmp.eq.s32.totalorder %s14, 1
    %p100 = por %p98, %p99
    %p101 = scmp.ne.s32.totalorder %s90, %s91
    %p102 = scmp.eq.s32.totalorder %s14, 0
    %p103 = por %p101, %p102
    %p104 = scmp.ne.s32.totalorder %s90, %s91
    %p105 = scmp.eq.s32.totalorder %s15, 1
    %p106 = por %p104, %p105
    %p108 = scmp.ne.s32.totalorder %s91, %s107
    %p109 = scmp.eq.s32.totalorder %s15, 0
    %p110 = por %p108, %p109
    %p111 = scmp.le.s32.totalorder 1, %s9
    %p112 = scmp.lt.s32.totalorder %s9, 3
    %p113 = pnand %p111, %p112
    %p114 = pneg %p113
    // Predicated region
    $region9: #{_lambda_.8} parent=5 // pred_check
      _
    $region10: #{_lambda_.8} parent=5 // pred_check_branch
      %116 = sbr.rel (%p113) target = $region12
    $region11: #{_lambda_.8} parent=5 // pred_region
      %s117 = ssub.s32 %s9, 1
      // Predicated region
      $region13: #{_lambda_.8} parent=11 // pred_check
        %p118 = pneg %p56
      $region14: #{_lambda_.8} parent=11 // pred_check_branch
        %120 = sbr.rel (%p118) target = $region16
      $region15: #{_lambda_.8} parent=11 // pred_region
        _
      $region16: #{_lambda_.8} parent=11 // pred_fallthru
        _
      // Predicated region
      $region17: #{_lambda_.8} parent=11 // pred_check
        %p121 = pneg %p77
      $region18: #{_lambda_.8} parent=11 // pred_check_branch
        %123 = sbr.rel (%p121) target = $region20
      $region19: #{_lambda_.8} parent=11 // pred_region
        _
      $region20: #{_lambda_.8} parent=11 // pred_fallthru
        _
    $region12: #{_lambda_.8} parent=5 // pred_fallthru
      _
    %p124 = scmp.lt.s32.totalorder %s9, 2
    // Predicated region
    $region21: #{_lambda_.8} parent=5 // pred_check
      %p125 = pneg %p124
    $region22: #{_lambda_.8} parent=5 // pred_check_branch
      %127 = sbr.rel (%p125) target = $region24
    $region23: #{_lambda_.8} parent=5 // pred_region
      // Predicated region
      $region25: #{_lambda_.8} parent=23 // pred_check
        %p128 = pneg %p29
      $region26: #{_lambda_.8} parent=23 // pred_check_branch
        %130 = sbr.rel (%p128) target = $region28
      $region27: #{_lambda_.8} parent=23 // pred_region
        %s131 = smul.u32 2, %s9
        %p132 = scmp.lt.s32.totalorder %s131, 3
        %s133 = scalar_select %p132, %s131, 3
        %s134 = smul.addr %s133, 5
        %s135 = smul.addr %s134, 8
        %s136 = scalar_lea.vmem %s0, %s135
        %s137 = smul.u32 2, %s9
      $region28: #{_lambda_.8} parent=23 // pred_fallthru
        _
    $region24: #{_lambda_.8} parent=5 // pred_fallthru
      _
    %p138 = scmp.le.s32.totalorder 1, %s9
    %p139 = scmp.lt.s32.totalorder %s9, 3
    %p140 = pnand %p138, %p139
    %p141 = pneg %p140
    // Predicated region
    $region29: #{_lambda_.8} parent=5 // pred_check
      _
    $region30: #{_lambda_.8} parent=5 // pred_check_branch
      %143 = sbr.rel (%p140) target = $region32
    $region31: #{_lambda_.8} parent=5 // pred_region
      %s144 = ssub.s32 %s9, 1
      %s145 = smul.u32 2, %s14
      %p146 = scmp.lt.s32.totalorder %s145, 3
      %s147 = scalar_select %p146, %s145, 3
      %s148 = smul.addr %s147, 5
      %s149 = smul.addr %s148, 8
      %s150 = scalar_lea.vmem %s0, %s149
      %p151 = pneg %p35
      %p152 = pneg %p32
      %p153 = pneg %p56
      %p154 = pneg %p53
      %p155 = pneg %p77
      %p156 = pneg %p74
      %p157 = pneg %p103
      %p158 = pneg %p100
      %s159 = smul.u32 2, %s14
      %p160 = scmp.lt.s32.totalorder %s159, 3
      %s161 = scalar_select %p160, %s159, 3
      %s162 = smul.addr %s161, 8
      %s163 = scalar_lea.vmem %s3, %s162
      %s164 = smul.u32 2, %s14
      %p165 = scmp.lt.s32.totalorder %s164, 3
      %s166 = scalar_select %p165, %s164, 3
      %s167 = smul.addr %s166, 5
      %s168 = smul.addr %s167, 8
      %s169 = scalar_lea.vmem %s0, %s168
      %s170 = smul.u32 2, %s14
      %s171 = smul.u32 2, %s14
      %p172 = scmp.lt.s32.totalorder %s171, 3
      %s173 = scalar_select %p172, %s171, 3
      %s174 = smul.addr %s173, 8
      %s175 = scalar_lea.vmem %s3, %s174
      %s176 = smul.u32 2, %s14
      %v177 = vld [vmem:[%s169] sm:$0xff]
      %v178 = vld [vmem:[%s169 + $0x8] sm:$0xff]
      %v179 = vld [vmem:[%s169 + $0x10] sm:$0xff]
      %v180 = vld [vmem:[%s169 + $0x18] sm:$0xff]
      %v181 = vld [vmem:[%s169 + $0x20] sm:$0xff]
      %v182 = vld [vmem:[%s169 + $0x28] sm:$0xff]
      %v183 = vld [vmem:[%s169 + $0x30] sm:$0xff]
      %v184 = vld [vmem:[%s169 + $0x38] sm:$0xff]
      %v185 = vld [vmem:[%s169 + $0x40] sm:$0xff]
      %v186 = vld [vmem:[%s169 + $0x48] sm:$0xff]
      %v187 = vld [vmem:[%s1] sm:$0xff]
      %v188 = vld [vmem:[%s1 + $0x8] sm:$0xff]
      %v189 = vld [vmem:[%s1 + $0x10] sm:$0xff]
      %v190 = vld [vmem:[%s1 + $0x18] sm:$0xff]
      %v191 = vld [vmem:[%s1 + $0x20] sm:$0xff]
      %v192 = vld [vmem:[%s1 + $0x28] sm:$0xff]
      %v193 = vld [vmem:[%s1 + $0x30] sm:$0xff]
      %v194 = vld [vmem:[%s1 + $0x38] sm:$0xff]
      %v195 = vld [vmem:[%s1 + $0x40] sm:$0xff]
      %v196 = vld [vmem:[%s1 + $0x48] sm:$0xff]
      %v197 = vld [vmem:[%s1 + $0x50] sm:$0xff]
      %v198 = vld [vmem:[%s1 + $0x58] sm:$0xff]
      %v199 = vld [vmem:[%s1 + $0x60] sm:$0xff]
      %v200 = vld [vmem:[%s1 + $0x68] sm:$0xff]
      %v201 = vld [vmem:[%s1 + $0x70] sm:$0xff]
      %v202 = vld [vmem:[%s1 + $0x78] sm:$0xff]
      %v203 = vld [vmem:[%s1 + $0x80] sm:$0xff]
      %v204 = vld [vmem:[%s1 + $0x88] sm:$0xff]
      %v205 = vld [vmem:[%s1 + $0x90] sm:$0xff]
      %v206 = vld [vmem:[%s1 + $0x98] sm:$0xff]
      %v207 = vld [vmem:[%s1 + $0xa0] sm:$0xff]
      %v208 = vld [vmem:[%s1 + $0xa8] sm:$0xff]
      %v209 = vld [vmem:[%s1 + $0xb0] sm:$0xff]
      %v210 = vld [vmem:[%s1 + $0xb8] sm:$0xff]
      %v211 = vld [vmem:[%s1 + $0xc0] sm:$0xff]
      %v212 = vld [vmem:[%s1 + $0xc8] sm:$0xff]
      %v213 = vld [vmem:[%s1 + $0xd0] sm:$0xff]
      %v214 = vld [vmem:[%s1 + $0xd8] sm:$0xff]
      %v215 = vld [vmem:[%s1 + $0xe0] sm:$0xff]
      %v216 = vld [vmem:[%s1 + $0xe8] sm:$0xff]
      %v217 = vld [vmem:[%s1 + $0xf0] sm:$0xff]
      %v218 = vld [vmem:[%s1 + $0xf8] sm:$0xff]
      %v219 = vld [vmem:[%s1 + $0x100] sm:$0xff]
      %v220 = vld [vmem:[%s1 + $0x108] sm:$0xff]
      %v221 = vld [vmem:[%s1 + $0x110] sm:$0xff]
      %v222 = vld [vmem:[%s1 + $0x118] sm:$0xff]
      %v223 = vld [vmem:[%s1 + $0x120] sm:$0xff]
      %v224 = vld [vmem:[%s1 + $0x128] sm:$0xff]
      %v225 = vld [vmem:[%s1 + $0x130] sm:$0xff]
      %v226 = vld [vmem:[%s1 + $0x138] sm:$0xff]
      %v227 = vld [vmem:[%s1 + $0x140] sm:$0xff]
      %v228 = vld [vmem:[%s1 + $0x148] sm:$0xff]
      %v229 = vld [vmem:[%s1 + $0x150] sm:$0xff]
      %v230 = vld [vmem:[%s1 + $0x158] sm:$0xff]
      %v231 = vld [vmem:[%s1 + $0x160] sm:$0xff]
      %v232 = vld [vmem:[%s1 + $0x168] sm:$0xff]
      %v233 = vld [vmem:[%s1 + $0x170] sm:$0xff]
      %v234 = vld [vmem:[%s1 + $0x178] sm:$0xff]
      %v235 = vld [vmem:[%s1 + $0x180] sm:$0xff]
      %v236 = vld [vmem:[%s1 + $0x188] sm:$0xff]
      %v237 = vld [vmem:[%s1 + $0x190] sm:$0xff]
      %v238 = vld [vmem:[%s1 + $0x198] sm:$0xff]
      %v239 = vld [vmem:[%s1 + $0x1a0] sm:$0xff]
      %v240 = vld [vmem:[%s1 + $0x1a8] sm:$0xff]
      %v241 = vld [vmem:[%s1 + $0x1b0] sm:$0xff]
      %v242 = vld [vmem:[%s1 + $0x1b8] sm:$0xff]
      %v243 = vld [vmem:[%s1 + $0x1c0] sm:$0xff]
      %v244 = vld [vmem:[%s1 + $0x1c8] sm:$0xff]
      %v245 = vld [vmem:[%s1 + $0x1d0] sm:$0xff]
      %v246 = vld [vmem:[%s1 + $0x1d8] sm:$0xff]
      %v247 = vld [vmem:[%s1 + $0x1e0] sm:$0xff]
      %v248 = vld [vmem:[%s1 + $0x1e8] sm:$0xff]
      %v249 = vld [vmem:[%s1 + $0x1f0] sm:$0xff]
      %v250 = vld [vmem:[%s1 + $0x1f8] sm:$0xff]
      %v251 = vld [vmem:[%s1 + $0x200] sm:$0xff]
      %v252 = vld [vmem:[%s1 + $0x208] sm:$0xff]
      %v253 = vld [vmem:[%s1 + $0x210] sm:$0xff]
      %v254 = vld [vmem:[%s1 + $0x218] sm:$0xff]
      %v255 = vld [vmem:[%s1 + $0x220] sm:$0xff]
      %v256 = vld [vmem:[%s1 + $0x228] sm:$0xff]
      %v257 = vld [vmem:[%s1 + $0x230] sm:$0xff]
      %v258 = vld [vmem:[%s1 + $0x238] sm:$0xff]
      %v259 = vld [vmem:[%s1 + $0x240] sm:$0xff]
      %v260 = vld [vmem:[%s1 + $0x248] sm:$0xff]
      %v261 = vld [vmem:[%s1 + $0x250] sm:$0xff]
      %v262 = vld [vmem:[%s1 + $0x258] sm:$0xff]
      %v263 = vld [vmem:[%s1 + $0x260] sm:$0xff]
      %v264 = vld [vmem:[%s1 + $0x268] sm:$0xff]
      %v265 = vld [vmem:[%s1 + $0x270] sm:$0xff]
      %v266 = vld [vmem:[%s1 + $0x278] sm:$0xff]
      %v267 = vld [vmem:[%s2] sm:$0x1]
      %v269 = vperm.slane %v267, 0
      %271 = vmatpush.msra.mxu0 %v202
      %272 = vmatpush.msra.mxu0 %v201
      %273 = vmatpush.msra.mxu0 %v200
      %274 = vmatpush.msra.mxu0 %v199
      %275 = vmatpush.msra.mxu0 %v198
      %276 = vmatpush.msra.mxu0 %v197
      %277 = vmatpush.msra.mxu0 %v196
      %278 = vmatpush.msra.mxu0 %v195
      %279 = vmatpush.msra.mxu0 %v194
      %280 = vmatpush.msra.mxu0 %v193
      %281 = vmatpush.msra.mxu0 %v192
      %282 = vmatpush.msra.mxu0 %v191
      %283 = vmatpush.msra.mxu0 %v190
      %284 = vmatpush.msra.mxu0 %v189
      %285 = vmatpush.msra.mxu0 %v188
      %286 = vmatpush.msra.mxu0 %v187
      %287 = vmatmul.f32.gmra.mxu0 %v177
      %v288 = vpop.f32.mrf.mxu0
      %v289 = vadd.f32 %v269, %v288
      %290 = vmatmul.f32.gmra.mxu0 %v182
      %v291 = vpop.f32.mrf.mxu0
      %v292 = vadd.f32 %v269, %v291
      %293 = vdwg.mxu0
      %294 = vmatpush.msra.mxu0 %v218
      %295 = vmatpush.msra.mxu0 %v217
      %296 = vmatpush.msra.mxu0 %v216
      %297 = vmatpush.msra.mxu0 %v215
      %298 = vmatpush.msra.mxu0 %v214
      %299 = vmatpush.msra.mxu0 %v213
      %300 = vmatpush.msra.mxu0 %v212
      %301 = vmatpush.msra.mxu0 %v211
      %302 = vmatpush.msra.mxu0 %v210
      %303 = vmatpush.msra.mxu0 %v209
      %304 = vmatpush.msra.mxu0 %v208
      %305 = vmatpush.msra.mxu0 %v207
      %306 = vmatpush.msra.mxu0 %v206
      %307 = vmatpush.msra.mxu0 %v205
      %308 = vmatpush.msra.mxu0 %v204
      %309 = vmatpush.msra.mxu0 %v203
      %310 = vmatmul.f32.gmra.mxu0 %v178
      %v311 = vpop.f32.mrf.mxu0
      %v312 = vadd.f32 %v289, %v311
      %313 = vmatmul.f32.gmra.mxu0 %v183
      %v314 = vpop.f32.mrf.mxu0
      %v315 = vadd.f32 %v292, %v314
      %316 = vdwg.mxu0
      %317 = vmatpush.msra.mxu0 %v234
      %318 = vmatpush.msra.mxu0 %v233
      %319 = vmatpush.msra.mxu0 %v232
      %320 = vmatpush.msra.mxu0 %v231
      %321 = vmatpush.msra.mxu0 %v230
      %322 = vmatpush.msra.mxu0 %v229
      %323 = vmatpush.msra.mxu0 %v228
      %324 = vmatpush.msra.mxu0 %v227
      %325 = vmatpush.msra.mxu0 %v226
      %326 = vmatpush.msra.mxu0 %v225
      %327 = vmatpush.msra.mxu0 %v224
      %328 = vmatpush.msra.mxu0 %v223
      %329 = vmatpush.msra.mxu0 %v222
      %330 = vmatpush.msra.mxu0 %v221
      %331 = vmatpush.msra.mxu0 %v220
      %332 = vmatpush.msra.mxu0 %v219
      %333 = vmatmul.f32.gmra.mxu0 %v179
      %v334 = vpop.f32.mrf.mxu0
      %v335 = vadd.f32 %v312, %v334
      %336 = vmatmul.f32.gmra.mxu0 %v184
      %v337 = vpop.f32.mrf.mxu0
      %v338 = vadd.f32 %v315, %v337
      %339 = vdwg.mxu0
      %340 = vmatpush.msra.mxu0 %v250
      %341 = vmatpush.msra.mxu0 %v249
      %342 = vmatpush.msra.mxu0 %v248
      %343 = vmatpush.msra.mxu0 %v247
      %344 = vmatpush.msra.mxu0 %v246
      %345 = vmatpush.msra.mxu0 %v245
      %346 = vmatpush.msra.mxu0 %v244
      %347 = vmatpush.msra.mxu0 %v243
      %348 = vmatpush.msra.mxu0 %v242
      %349 = vmatpush.msra.mxu0 %v241
      %350 = vmatpush.msra.mxu0 %v240
      %351 = vmatpush.msra.mxu0 %v239
      %352 = vmatpush.msra.mxu0 %v238
      %353 = vmatpush.msra.mxu0 %v237
      %354 = vmatpush.msra.mxu0 %v236
      %355 = vmatpush.msra.mxu0 %v235
      %356 = vmatmul.f32.gmra.mxu0 %v180
      %v357 = vpop.f32.mrf.mxu0
      %v358 = vadd.f32 %v335, %v357
      %359 = vmatmul.f32.gmra.mxu0 %v185
      %v360 = vpop.f32.mrf.mxu0
      %v361 = vadd.f32 %v338, %v360
      %362 = vdwg.mxu0
      %363 = vmatpush.msra.mxu0 %v266
      %364 = vmatpush.msra.mxu0 %v265
      %365 = vmatpush.msra.mxu0 %v264
      %366 = vmatpush.msra.mxu0 %v263
      %367 = vmatpush.msra.mxu0 %v262
      %368 = vmatpush.msra.mxu0 %v261
      %369 = vmatpush.msra.mxu0 %v260
      %370 = vmatpush.msra.mxu0 %v259
      %371 = vmatpush.msra.mxu0 %v258
      %372 = vmatpush.msra.mxu0 %v257
      %373 = vmatpush.msra.mxu0 %v256
      %374 = vmatpush.msra.mxu0 %v255
      %375 = vmatpush.msra.mxu0 %v254
      %376 = vmatpush.msra.mxu0 %v253
      %377 = vmatpush.msra.mxu0 %v252
      %378 = vmatpush.msra.mxu0 %v251
      %379 = vmatmul.f32.gmra.mxu0 %v181
      %v380 = vpop.f32.mrf.mxu0
      %v381 = vadd.f32 %v358, %v380
      %382 = vmatmul.f32.gmra.mxu0 %v186
      %v383 = vpop.f32.mrf.mxu0
      %v384 = vadd.f32 %v361, %v383
      %385 = vdwg.mxu0
      %vm386 = vcmp.gt.f32.partialorder %v381, 0.0
      %vm387 = vcmp.gt.f32.partialorder %v384, 0.0
      %v388 = vmul.f32 %v381, 0.2
      %v389 = vmul.f32 %v384, 0.2
      %v390 = vsel %vm386, %v381, %v388
      %v391 = vsel %vm387, %v384, %v389
      %392 = vst [vmem:[%s175] sm:$0xff] %v390
      %393 = vst [vmem:[%s175 + $0x8] sm:$0xff] %v391
      %s394 = smul.u32 2, %s14
      %p395 = scmp.lt.s32.totalorder %s394, 3
      %s396 = scalar_select %p395, %s394, 3
      %s397 = smul.addr %s396, 8
      %s398 = scalar_lea.vmem %s3, %s397
      // Predicated region
      $region33: #{_lambda_.8} parent=31 // pred_check
        %p399 = pneg %p100
      $region34: #{_lambda_.8} parent=31 // pred_check_branch
        %401 = sbr.rel (%p399) target = $region36
      $region35: #{_lambda_.8} parent=31 // pred_region
        %s402 = smul.u32 2, %s14
      $region36: #{_lambda_.8} parent=31 // pred_fallthru
        _
    $region32: #{_lambda_.8} parent=5 // pred_fallthru
      _
    %p403 = scmp.le.s32.totalorder 2, %s9
    // Predicated region
    $region37: #{_lambda_.8} parent=5 // pred_check
      %p404 = pneg %p403
    $region38: #{_lambda_.8} parent=5 // pred_check_branch
      %406 = sbr.rel (%p404) target = $region40
    $region39: #{_lambda_.8} parent=5 // pred_region
      %s407 = ssub.s32 %s9, 2
      // Predicated region
      $region41: #{_lambda_.8} parent=39 // pred_check
        %p408 = pneg %p106
      $region42: #{_lambda_.8} parent=39 // pred_check_branch
        %410 = sbr.rel (%p408) target = $region44
      $region43: #{_lambda_.8} parent=39 // pred_region
        %s411 = smul.u32 2, %s15
        %p412 = scmp.lt.s32.totalorder %s411, 3
        %s413 = scalar_select %p412, %s411, 3
        %s414 = smul.addr %s413, 8
        %s415 = scalar_lea.vmem %s3, %s414
      $region44: #{_lambda_.8} parent=39 // pred_fallthru
        _
    $region40: #{_lambda_.8} parent=5 // pred_fallthru
      _
  $region6: #{_lambda_.8} parent=0 // loop_footer
    %s13 = sadd.s32 1, %s9
  $region7: #{_lambda_.8} parent=0 // loop_footer_branch
    %8 = sbr.rel target = $region3
  $region8: #{_lambda_.8} parent=0 // loop_exit
    _

// kernel: _lambda_.10
$region0: #{_lambda_.10}
  #allocation0 [shape = 'u32[]', space=smem, size = 0x4, offset = 0x4, fixed_abs, tag = 'smem constant byte address 0x4 - core index']
  #allocation1 [shape = 'u32[72,128]{1,0:T(1,128)}', space=vmem, size = 0x9000, scoped, tag = 'internal scratch']
  %s0 = inlined_call_operand.vmem [shape: f32[128,256], index: 0, kind: input, shape index: {}]
  %s1 = inlined_call_operand.vmem [shape: f32[256,128], index: 1, kind: input, shape index: {}]
  %s2 = inlined_call_operand.vmem [shape: f32[1,128], index: 2, kind: input, shape index: {}]
  %s3 = inlined_call_operand.vmem [shape: f32[128,128], index: 3, kind: output, shape index: {}]
  %s4 = sld [smem:[#allocation0]]
  $region45: #{_lambda_.10} parent=0
    _
  %s6 = ssub.s32 1, %s4
  %s7 = scalar_select 0, %s6, %s4
  loop: start=0, step=1, limit=4
  $region2: #{_lambda_.10} parent=0 // loop_pre_header
    _
  $region3: #{_lambda_.10} parent=0 // loop_header
    %s9 = sphi 0, %s13
    %p10 = scmp.ge.s32.totalorder %s9, 4
    %s19 = sphi 0, %s21
    %s22 = sphi 0, %s19
    %s23 = sphi 0, %s22
    %s39 = sphi 0, %s23
    %s43 = sphi 0, %s43
    %s45 = sphi 0, %s43
    %s46 = sphi 0, %s45
    %s60 = sphi 0, %s46
    %s64 = sphi 0, %s64
    %s66 = sphi 0, %s64
    %s67 = sphi 0, %s66
    %s81 = sphi 0, %s67
    %s87 = sphi 0, %s89
    %s90 = sphi 0, %s87
    %s91 = sphi 0, %s90
    %s107 = sphi 0, %s91
  $region4: #{_lambda_.10} parent=0 // loop_header_branch
    %12 = sbr.rel (%p10) target = $region8
  $region5: #{_lambda_.10} parent=0 // loop_body
    %s14 = ssub.s32 %s9, 1
    %s15 = ssub.s32 %s9, 2
    %s16 = sadd.s32 %s9, 1
    %s17 = ssub.s32 %s9, %s16
    %p18 = scmp.eq.s32.totalorder %s17, 0
    %s20 = sadd.s32 %s19, 1
    %s21 = scalar_select %p18, %s19, %s20
    %p24 = pneg %p18
    %p25 = scmp.eq.s32.totalorder %s9, 1
    %p26 = por %p24, %p25
    %p27 = scmp.ne.s32.totalorder %s19, %s22
    %p28 = scmp.eq.s32.totalorder %s9, 0
    %p29 = por %p27, %p28
    %p30 = scmp.ne.s32.totalorder %s19, %s22
    %p31 = scmp.eq.s32.totalorder %s14, 1
    %p32 = por %p30, %p31
    %p33 = scmp.ne.s32.totalorder %s22, %s23
    %p34 = scmp.eq.s32.totalorder %s14, 0
    %p35 = por %p33, %p34
    %p36 = scmp.ne.s32.totalorder %s22, %s23
    %p37 = scmp.eq.s32.totalorder %s15, 1
    %p38 = por %p36, %p37
    %p40 = scmp.ne.s32.totalorder %s23, %s39
    %p41 = scmp.eq.s32.totalorder %s15, 0
    %p42 = por %p40, %p41
    %s44 = sadd.s32 %s43, 1
    %p47 = scmp.eq.s32.totalorder %s9, 1
    %p48 = scmp.ne.s32.totalorder %s43, %s45
    %p49 = scmp.eq.s32.totalorder %s9, 0
    %p50 = por %p48, %p49
    %p51 = scmp.ne.s32.totalorder %s43, %s45
    %p52 = scmp.eq.s32.totalorder %s14, 1
    %p53 = por %p51, %p52
    %p54 = scmp.ne.s32.totalorder %s45, %s46
    %p55 = scmp.eq.s32.totalorder %s14, 0
    %p56 = por %p54, %p55
    %p57 = scmp.ne.s32.totalorder %s45, %s46
    %p58 = scmp.eq.s32.totalorder %s15, 1
    %p59 = por %p57, %p58
    %p61 = scmp.ne.s32.totalorder %s46, %s60
    %p62 = scmp.eq.s32.totalorder %s15, 0
    %p63 = por %p61, %p62
    %s65 = sadd.s32 %s64, 1
    %p68 = scmp.eq.s32.totalorder %s9, 1
    %p69 = scmp.ne.s32.totalorder %s64, %s66
    %p70 = scmp.eq.s32.totalorder %s9, 0
    %p71 = por %p69, %p70
    %p72 = scmp.ne.s32.totalorder %s64, %s66
    %p73 = scmp.eq.s32.totalorder %s14, 1
    %p74 = por %p72, %p73
    %p75 = scmp.ne.s32.totalorder %s66, %s67
    %p76 = scmp.eq.s32.totalorder %s14, 0
    %p77 = por %p75, %p76
    %p78 = scmp.ne.s32.totalorder %s66, %s67
    %p79 = scmp.eq.s32.totalorder %s15, 1
    %p80 = por %p78, %p79
    %p82 = scmp.ne.s32.totalorder %s67, %s81
    %p83 = scmp.eq.s32.totalorder %s15, 0
    %p84 = por %p82, %p83
    %s85 = ssub.s32 %s9, %s16
    %p86 = scmp.eq.s32.totalorder %s85, 0
    %s88 = sadd.s32 %s87, 1
    %s89 = scalar_select %p86, %s87, %s88
    %p92 = pneg %p86
    %p93 = scmp.eq.s32.totalorder %s9, 1
    %p94 = por %p92, %p93
    %p95 = scmp.ne.s32.totalorder %s87, %s90
    %p96 = scmp.eq.s32.totalorder %s9, 0
    %p97 = por %p95, %p96
    %p98 = scmp.ne.s32.totalorder %s87, %s90
    %p99 = scmp.eq.s32.totalorder %s14, 1
    %p100 = por %p98, %p99
    %p101 = scmp.ne.s32.totalorder %s90, %s91
    %p102 = scmp.eq.s32.totalorder %s14, 0
    %p103 = por %p101, %p102
    %p104 = scmp.ne.s32.totalorder %s90, %s91
    %p105 = scmp.eq.s32.totalorder %s15, 1
    %p106 = por %p104, %p105
    %p108 = scmp.ne.s32.totalorder %s91, %s107
    %p109 = scmp.eq.s32.totalorder %s15, 0
    %p110 = por %p108, %p109
    %p111 = scmp.le.s32.totalorder 1, %s9
    %p112 = scmp.lt.s32.totalorder %s9, 3
    %p113 = pnand %p111, %p112
    %p114 = pneg %p113
    // Predicated region
    $region9: #{_lambda_.10} parent=5 // pred_check
      _
    $region10: #{_lambda_.10} parent=5 // pred_check_branch
      %116 = sbr.rel (%p113) target = $region12
    $region11: #{_lambda_.10} parent=5 // pred_region
      %s117 = ssub.s32 %s9, 1
      // Predicated region
      $region13: #{_lambda_.10} parent=11 // pred_check
        %p118 = pneg %p56
      $region14: #{_lambda_.10} parent=11 // pred_check_branch
        %120 = sbr.rel (%p118) target = $region16
      $region15: #{_lambda_.10} parent=11 // pred_region
        _
      $region16: #{_lambda_.10} parent=11 // pred_fallthru
        _
      // Predicated region
      $region17: #{_lambda_.10} parent=11 // pred_check
        %p121 = pneg %p77
      $region18: #{_lambda_.10} parent=11 // pred_check_branch
        %123 = sbr.rel (%p121) target = $region20
      $region19: #{_lambda_.10} parent=11 // pred_region
        _
      $region20: #{_lambda_.10} parent=11 // pred_fallthru
        _
    $region12: #{_lambda_.10} parent=5 // pred_fallthru
      _
    %p124 = scmp.lt.s32.totalorder %s9, 2
    // Predicated region
    $region21: #{_lambda_.10} parent=5 // pred_check
      %p125 = pneg %p124
    $region22: #{_lambda_.10} parent=5 // pred_check_branch
      %127 = sbr.rel (%p125) target = $region24
    $region23: #{_lambda_.10} parent=5 // pred_region
      // Predicated region
      $region25: #{_lambda_.10} parent=23 // pred_check
        %p128 = pneg %p29
      $region26: #{_lambda_.10} parent=23 // pred_check_branch
        %130 = sbr.rel (%p128) target = $region28
      $region27: #{_lambda_.10} parent=23 // pred_region
        %s131 = smul.u32 8, %s9
        %p132 = scmp.lt.s32.totalorder %s131, 15
        %s133 = scalar_select %p132, %s131, 15
        %s134 = smul.addr %s133, 2
        %s135 = smul.addr %s134, 8
        %s136 = scalar_lea.vmem %s0, %s135
        %s137 = smul.u32 8, %s9
      $region28: #{_lambda_.10} parent=23 // pred_fallthru
        _
    $region24: #{_lambda_.10} parent=5 // pred_fallthru
      _
    %p138 = scmp.le.s32.totalorder 1, %s9
    %p139 = scmp.lt.s32.totalorder %s9, 3
    %p140 = pnand %p138, %p139
    %p141 = pneg %p140
    // Predicated region
    $region29: #{_lambda_.10} parent=5 // pred_check
      _
    $region30: #{_lambda_.10} parent=5 // pred_check_branch
      %143 = sbr.rel (%p140) target = $region32
    $region31: #{_lambda_.10} parent=5 // pred_region
      %s144 = ssub.s32 %s9, 1
      %s145 = smul.u32 8, %s14
      %p146 = scmp.lt.s32.totalorder %s145, 15
      %s147 = scalar_select %p146, %s145, 15
      %s148 = smul.addr %s147, 2
      %s149 = smul.addr %s148, 8
      %s150 = scalar_lea.vmem %s0, %s149
      %p151 = pneg %p35
      %p152 = pneg %p32
      %p153 = pneg %p56
      %p154 = pneg %p53
      %p155 = pneg %p77
      %p156 = pneg %p74
      %p157 = pneg %p103
      %p158 = pneg %p100
      %s159 = smul.u32 8, %s14
      %p160 = scmp.lt.s32.totalorder %s159, 15
      %s161 = scalar_select %p160, %s159, 15
      %s162 = smul.addr %s161, 8
      %s163 = scalar_lea.vmem %s3, %s162
      %s164 = smul.u32 8, %s14
      %p165 = scmp.lt.s32.totalorder %s164, 15
      %s166 = scalar_select %p165, %s164, 15
      %s167 = smul.addr %s166, 2
      %s168 = smul.addr %s167, 8
      %s169 = scalar_lea.vmem %s0, %s168
      %s170 = smul.u32 8, %s14
      %s171 = smul.u32 8, %s14
      %p172 = scmp.lt.s32.totalorder %s171, 15
      %s173 = scalar_select %p172, %s171, 15
      %s174 = smul.addr %s173, 8
      %s175 = scalar_lea.vmem %s3, %s174
      %s176 = smul.u32 8, %s14
      %v177 = vld [vmem:[%s169] sm:$0xff]
      %v178 = vld [vmem:[%s169 + $0x8] sm:$0xff]
      %v179 = vld [vmem:[%s169 + $0x10] sm:$0xff]
      %v180 = vld [vmem:[%s169 + $0x18] sm:$0xff]
      %v181 = vld [vmem:[%s169 + $0x20] sm:$0xff]
      %v182 = vld [vmem:[%s169 + $0x28] sm:$0xff]
      %v183 = vld [vmem:[%s169 + $0x30] sm:$0xff]
      %v184 = vld [vmem:[%s169 + $0x38] sm:$0xff]
      %v185 = vld [vmem:[%s169 + $0x40] sm:$0xff]
      %v186 = vld [vmem:[%s169 + $0x48] sm:$0xff]
      %v187 = vld [vmem:[%s169 + $0x50] sm:$0xff]
      %v188 = vld [vmem:[%s169 + $0x58] sm:$0xff]
      %v189 = vld [vmem:[%s169 + $0x60] sm:$0xff]
      %v190 = vld [vmem:[%s169 + $0x68] sm:$0xff]
      %v191 = vld [vmem:[%s169 + $0x70] sm:$0xff]
      %v192 = vld [vmem:[%s169 + $0x78] sm:$0xff]
      %v193 = vld [vmem:[%s1] sm:$0xff]
      %v194 = vld [vmem:[%s1 + $0x8] sm:$0xff]
      %v195 = vld [vmem:[%s1 + $0x10] sm:$0xff]
      %v196 = vld [vmem:[%s1 + $0x18] sm:$0xff]
      %v197 = vld [vmem:[%s1 + $0x20] sm:$0xff]
      %v198 = vld [vmem:[%s1 + $0x28] sm:$0xff]
      %v199 = vld [vmem:[%s1 + $0x30] sm:$0xff]
      %v200 = vld [vmem:[%s1 + $0x38] sm:$0xff]
      %v201 = vld [vmem:[%s1 + $0x40] sm:$0xff]
      %v202 = vld [vmem:[%s1 + $0x48] sm:$0xff]
      %v203 = vld [vmem:[%s1 + $0x50] sm:$0xff]
      %v204 = vld [vmem:[%s1 + $0x58] sm:$0xff]
      %v205 = vld [vmem:[%s1 + $0x60] sm:$0xff]
      %v206 = vld [vmem:[%s1 + $0x68] sm:$0xff]
      %v207 = vld [vmem:[%s1 + $0x70] sm:$0xff]
      %v208 = vld [vmem:[%s1 + $0x78] sm:$0xff]
      %v209 = vld [vmem:[%s1 + $0x80] sm:$0xff]
      %v210 = vld [vmem:[%s1 + $0x88] sm:$0xff]
      %v211 = vld [vmem:[%s1 + $0x90] sm:$0xff]
      %v212 = vld [vmem:[%s1 + $0x98] sm:$0xff]
      %v213 = vld [vmem:[%s1 + $0xa0] sm:$0xff]
      %v214 = vld [vmem:[%s1 + $0xa8] sm:$0xff]
      %v215 = vld [vmem:[%s1 + $0xb0] sm:$0xff]
      %v216 = vld [vmem:[%s1 + $0xb8] sm:$0xff]
      %v217 = vld [vmem:[%s1 + $0xc0] sm:$0xff]
      %v218 = vld [vmem:[%s1 + $0xc8] sm:$0xff]
      %v219 = vld [vmem:[%s1 + $0xd0] sm:$0xff]
      %v220 = vld [vmem:[%s1 + $0xd8] sm:$0xff]
      %v221 = vld [vmem:[%s1 + $0xe0] sm:$0xff]
      %v222 = vld [vmem:[%s1 + $0xe8] sm:$0xff]
      %v223 = vld [vmem:[%s1 + $0xf0] sm:$0xff]
      %v224 = vld [vmem:[%s1 + $0xf8] sm:$0xff]
      %v225 = vld [vmem:[%s2] sm:$0x1]
      %v227 = vperm.slane %v225, 0
      %229 = vmatpush.msra.mxu0 %v208
      %230 = vmatpush.msra.mxu0 %v207
      %231 = vmatpush.msra.mxu0 %v206
      %232 = vmatpush.msra.mxu0 %v205
      %233 = vmatpush.msra.mxu0 %v204
      %234 = vmatpush.msra.mxu0 %v203
      %235 = vmatpush.msra.mxu0 %v202
      %236 = vmatpush.msra.mxu0 %v201
      %237 = vmatpush.msra.mxu0 %v200
      %238 = vmatpush.msra.mxu0 %v199
      %239 = vmatpush.msra.mxu0 %v198
      %240 = vmatpush.msra.mxu0 %v197
      %241 = vmatpush.msra.mxu0 %v196
      %242 = vmatpush.msra.mxu0 %v195
      %243 = vmatpush.msra.mxu0 %v194
      %244 = vmatpush.msra.mxu0 %v193
      %245 = vmatmul.f32.gmra.mxu0 %v177
      %v246 = vpop.f32.mrf.mxu0
      %v247 = vadd.f32 %v227, %v246
      %248 = vmatmul.f32.gmra.mxu0 %v179
      %v249 = vpop.f32.mrf.mxu0
      %v250 = vadd.f32 %v227, %v249
      %251 = vmatmul.f32.gmra.mxu0 %v181
      %v252 = vpop.f32.mrf.mxu0
      %v253 = vadd.f32 %v227, %v252
      %254 = vmatmul.f32.gmra.mxu0 %v183
      %v255 = vpop.f32.mrf.mxu0
      %v256 = vadd.f32 %v227, %v255
      %257 = vmatmul.f32.gmra.mxu0 %v185
      %v258 = vpop.f32.mrf.mxu0
      %v259 = vadd.f32 %v227, %v258
      %260 = vmatmul.f32.gmra.mxu0 %v187
      %v261 = vpop.f32.mrf.mxu0
      %v262 = vadd.f32 %v227, %v261
      %263 = vmatmul.f32.gmra.mxu0 %v189
      %v264 = vpop.f32.mrf.mxu0
      %v265 = vadd.f32 %v227, %v264
      %266 = vmatmul.f32.gmra.mxu0 %v191
      %v267 = vpop.f32.mrf.mxu0
      %v268 = vadd.f32 %v227, %v267
      %269 = vdwg.mxu0
      %270 = vmatpush.msra.mxu0 %v224
      %271 = vmatpush.msra.mxu0 %v223
      %272 = vmatpush.msra.mxu0 %v222
      %273 = vmatpush.msra.mxu0 %v221
      %274 = vmatpush.msra.mxu0 %v220
      %275 = vmatpush.msra.mxu0 %v219
      %276 = vmatpush.msra.mxu0 %v218
      %277 = vmatpush.msra.mxu0 %v217
      %278 = vmatpush.msra.mxu0 %v216
      %279 = vmatpush.msra.mxu0 %v215
      %280 = vmatpush.msra.mxu0 %v214
      %281 = vmatpush.msra.mxu0 %v213
      %282 = vmatpush.msra.mxu0 %v212
      %283 = vmatpush.msra.mxu0 %v211
      %284 = vmatpush.msra.mxu0 %v210
      %285 = vmatpush.msra.mxu0 %v209
      %286 = vmatmul.f32.gmra.mxu0 %v178
      %v287 = vpop.f32.mrf.mxu0
      %v288 = vadd.f32 %v247, %v287
      %289 = vmatmul.f32.gmra.mxu0 %v180
      %v290 = vpop.f32.mrf.mxu0
      %v291 = vadd.f32 %v250, %v290
      %292 = vmatmul.f32.gmra.mxu0 %v182
      %v293 = vpop.f32.mrf.mxu0
      %v294 = vadd.f32 %v253, %v293
      %295 = vmatmul.f32.gmra.mxu0 %v184
      %v296 = vpop.f32.mrf.mxu0
      %v297 = vadd.f32 %v256, %v296
      %298 = vmatmul.f32.gmra.mxu0 %v186
      %v299 = vpop.f32.mrf.mxu0
      %v300 = vadd.f32 %v259, %v299
      %301 = vmatmul.f32.gmra.mxu0 %v188
      %v302 = vpop.f32.mrf.mxu0
      %v303 = vadd.f32 %v262, %v302
      %304 = vmatmul.f32.gmra.mxu0 %v190
      %v305 = vpop.f32.mrf.mxu0
      %v306 = vadd.f32 %v265, %v305
      %307 = vmatmul.f32.gmra.mxu0 %v192
      %v308 = vpop.f32.mrf.mxu0
      %v309 = vadd.f32 %v268, %v308
      %310 = vdwg.mxu0
      %vm311 = vcmp.gt.f32.partialorder %v288, 0.0
      %vm312 = vcmp.gt.f32.partialorder %v291, 0.0
      %vm313 = vcmp.gt.f32.partialorder %v294, 0.0
      %vm314 = vcmp.gt.f32.partialorder %v297, 0.0
      %vm315 = vcmp.gt.f32.partialorder %v300, 0.0
      %vm316 = vcmp.gt.f32.partialorder %v303, 0.0
      %vm317 = vcmp.gt.f32.partialorder %v306, 0.0
      %vm318 = vcmp.gt.f32.partialorder %v309, 0.0
      %v319 = vmul.f32 %v288, 0.2
      %v320 = vmul.f32 %v291, 0.2
      %v321 = vmul.f32 %v294, 0.2
      %v322 = vmul.f32 %v297, 0.2
      %v323 = vmul.f32 %v300, 0.2
      %v324 = vmul.f32 %v303, 0.2
      %v325 = vmul.f32 %v306, 0.2
      %v326 = vmul.f32 %v309, 0.2
      %v327 = vsel %vm311, %v288, %v319
      %v328 = vsel %vm312, %v291, %v320
      %v329 = vsel %vm313, %v294, %v321
      %v330 = vsel %vm314, %v297, %v322
      %v331 = vsel %vm315, %v300, %v323
      %v332 = vsel %vm316, %v303, %v324
      %v333 = vsel %vm317, %v306, %v325
      %v334 = vsel %vm318, %v309, %v326
      %335 = vst [vmem:[%s175] sm:$0xff] %v327
      %336 = vst [vmem:[%s175 + $0x8] sm:$0xff] %v328
      %337 = vst [vmem:[%s175 + $0x10] sm:$0xff] %v329
      %338 = vst [vmem:[%s175 + $0x18] sm:$0xff] %v330
      %339 = vst [vmem:[%s175 + $0x20] sm:$0xff] %v331
      %340 = vst [vmem:[%s175 + $0x28] sm:$0xff] %v332
      %341 = vst [vmem:[%s175 + $0x30] sm:$0xff] %v333
      %342 = vst [vmem:[%s175 + $0x38] sm:$0xff] %v334
      %s343 = smul.u32 8, %s14
      %p344 = scmp.lt.s32.totalorder %s343, 15
      %s345 = scalar_select %p344, %s343, 15
      %s346 = smul.addr %s345, 8
      %s347 = scalar_lea.vmem %s3, %s346
      // Predicated region
      $region33: #{_lambda_.10} parent=31 // pred_check
        %p348 = pneg %p100
      $region34: #{_lambda_.10} parent=31 // pred_check_branch
        %350 = sbr.rel (%p348) target = $region36
      $region35: #{_lambda_.10} parent=31 // pred_region
        %s351 = smul.u32 8, %s14
      $region36: #{_lambda_.10} parent=31 // pred_fallthru
        _
    $region32: #{_lambda_.10} parent=5 // pred_fallthru
      _
    %p352 = scmp.le.s32.totalorder 2, %s9
    // Predicated region
    $region37: #{_lambda_.10} parent=5 // pred_check
      %p353 = pneg %p352
    $region38: #{_lambda_.10} parent=5 // pred_check_branch
      %355 = sbr.rel (%p353) target = $region40
    $region39: #{_lambda_.10} parent=5 // pred_region
      %s356 = ssub.s32 %s9, 2
      // Predicated region
      $region41: #{_lambda_.10} parent=39 // pred_check
        %p357 = pneg %p106
      $region42: #{_lambda_.10} parent=39 // pred_check_branch
        %359 = sbr.rel (%p357) target = $region44
      $region43: #{_lambda_.10} parent=39 // pred_region
        %s360 = smul.u32 8, %s15
        %p361 = scmp.lt.s32.totalorder %s360, 15
        %s362 = scalar_select %p361, %s360, 15
        %s363 = smul.addr %s362, 8
        %s364 = scalar_lea.vmem %s3, %s363
      $region44: #{_lambda_.10} parent=39 // pred_fallthru
        _
    $region40: #{_lambda_.10} parent=5 // pred_fallthru
      _
  $region6: #{_lambda_.10} parent=0 // loop_footer
    %s13 = sadd.s32 1, %s9
  $region7: #{_lambda_.10} parent=0 // loop_footer_branch
    %8 = sbr.rel target = $region3
  $region8: #{_lambda_.10} parent=0 // loop_exit
    _

// kernel: _lambda_.11
$region0: #{_lambda_.11}
  #allocation0 [shape = 'u32[]', space=smem, size = 0x4, offset = 0x4, fixed_abs, tag = 'smem constant byte address 0x4 - core index']
  #allocation1 [shape = 'u32[72,128]{1,0:T(1,128)}', space=vmem, size = 0x9000, scoped, tag = 'internal scratch']
  %s0 = inlined_call_operand.vmem [shape: f32[512,384], index: 0, kind: input, shape index: {}]
  %s1 = inlined_call_operand.vmem [shape: f32[384,128], index: 1, kind: input, shape index: {}]
  %s2 = inlined_call_operand.vmem [shape: f32[1,128], index: 2, kind: input, shape index: {}]
  %s3 = inlined_call_operand.vmem [shape: f32[512,128], index: 3, kind: output, shape index: {}]
  %s4 = sld [smem:[#allocation0]]
  $region45: #{_lambda_.11} parent=0
    _
  %s6 = ssub.s32 1, %s4
  %s7 = scalar_select 0, %s6, %s4
  loop: start=0, step=1, limit=4
  $region2: #{_lambda_.11} parent=0 // loop_pre_header
    _
  $region3: #{_lambda_.11} parent=0 // loop_header
    %s9 = sphi 0, %s13
    %p10 = scmp.ge.s32.totalorder %s9, 4
    %s19 = sphi 0, %s21
    %s22 = sphi 0, %s19
    %s23 = sphi 0, %s22
    %s39 = sphi 0, %s23
    %s43 = sphi 0, %s43
    %s45 = sphi 0, %s43
    %s46 = sphi 0, %s45
    %s60 = sphi 0, %s46
    %s64 = sphi 0, %s64
    %s66 = sphi 0, %s64
    %s67 = sphi 0, %s66
    %s81 = sphi 0, %s67
    %s87 = sphi 0, %s89
    %s90 = sphi 0, %s87
    %s91 = sphi 0, %s90
    %s107 = sphi 0, %s91
  $region4: #{_lambda_.11} parent=0 // loop_header_branch
    %12 = sbr.rel (%p10) target = $region8
  $region5: #{_lambda_.11} parent=0 // loop_body
    %s14 = ssub.s32 %s9, 1
    %s15 = ssub.s32 %s9, 2
    %s16 = sadd.s32 %s9, 1
    %s17 = ssub.s32 %s9, %s16
    %p18 = scmp.eq.s32.totalorder %s17, 0
    %s20 = sadd.s32 %s19, 1
    %s21 = scalar_select %p18, %s19, %s20
    %p24 = pneg %p18
    %p25 = scmp.eq.s32.totalorder %s9, 1
    %p26 = por %p24, %p25
    %p27 = scmp.ne.s32.totalorder %s19, %s22
    %p28 = scmp.eq.s32.totalorder %s9, 0
    %p29 = por %p27, %p28
    %p30 = scmp.ne.s32.totalorder %s19, %s22
    %p31 = scmp.eq.s32.totalorder %s14, 1
    %p32 = por %p30, %p31
    %p33 = scmp.ne.s32.totalorder %s22, %s23
    %p34 = scmp.eq.s32.totalorder %s14, 0
    %p35 = por %p33, %p34
    %p36 = scmp.ne.s32.totalorder %s22, %s23
    %p37 = scmp.eq.s32.totalorder %s15, 1
    %p38 = por %p36, %p37
    %p40 = scmp.ne.s32.totalorder %s23, %s39
    %p41 = scmp.eq.s32.totalorder %s15, 0
    %p42 = por %p40, %p41
    %s44 = sadd.s32 %s43, 1
    %p47 = scmp.eq.s32.totalorder %s9, 1
    %p48 = scmp.ne.s32.totalorder %s43, %s45
    %p49 = scmp.eq.s32.totalorder %s9, 0
    %p50 = por %p48, %p49
    %p51 = scmp.ne.s32.totalorder %s43, %s45
    %p52 = scmp.eq.s32.totalorder %s14, 1
    %p53 = por %p51, %p52
    %p54 = scmp.ne.s32.totalorder %s45, %s46
    %p55 = scmp.eq.s32.totalorder %s14, 0
    %p56 = por %p54, %p55
    %p57 = scmp.ne.s32.totalorder %s45, %s46
    %p58 = scmp.eq.s32.totalorder %s15, 1
    %p59 = por %p57, %p58
    %p61 = scmp.ne.s32.totalorder %s46, %s60
    %p62 = scmp.eq.s32.totalorder %s15, 0
    %p63 = por %p61, %p62
    %s65 = sadd.s32 %s64, 1
    %p68 = scmp.eq.s32.totalorder %s9, 1
    %p69 = scmp.ne.s32.totalorder %s64, %s66
    %p70 = scmp.eq.s32.totalorder %s9, 0
    %p71 = por %p69, %p70
    %p72 = scmp.ne.s32.totalorder %s64, %s66
    %p73 = scmp.eq.s32.totalorder %s14, 1
    %p74 = por %p72, %p73
    %p75 = scmp.ne.s32.totalorder %s66, %s67
    %p76 = scmp.eq.s32.totalorder %s14, 0
    %p77 = por %p75, %p76
    %p78 = scmp.ne.s32.totalorder %s66, %s67
    %p79 = scmp.eq.s32.totalorder %s15, 1
    %p80 = por %p78, %p79
    %p82 = scmp.ne.s32.totalorder %s67, %s81
    %p83 = scmp.eq.s32.totalorder %s15, 0
    %p84 = por %p82, %p83
    %s85 = ssub.s32 %s9, %s16
    %p86 = scmp.eq.s32.totalorder %s85, 0
    %s88 = sadd.s32 %s87, 1
    %s89 = scalar_select %p86, %s87, %s88
    %p92 = pneg %p86
    %p93 = scmp.eq.s32.totalorder %s9, 1
    %p94 = por %p92, %p93
    %p95 = scmp.ne.s32.totalorder %s87, %s90
    %p96 = scmp.eq.s32.totalorder %s9, 0
    %p97 = por %p95, %p96
    %p98 = scmp.ne.s32.totalorder %s87, %s90
    %p99 = scmp.eq.s32.totalorder %s14, 1
    %p100 = por %p98, %p99
    %p101 = scmp.ne.s32.totalorder %s90, %s91
    %p102 = scmp.eq.s32.totalorder %s14, 0
    %p103 = por %p101, %p102
    %p104 = scmp.ne.s32.totalorder %s90, %s91
    %p105 = scmp.eq.s32.totalorder %s15, 1
    %p106 = por %p104, %p105
    %p108 = scmp.ne.s32.totalorder %s91, %s107
    %p109 = scmp.eq.s32.totalorder %s15, 0
    %p110 = por %p108, %p109
    %p111 = scmp.le.s32.totalorder 1, %s9
    %p112 = scmp.lt.s32.totalorder %s9, 3
    %p113 = pnand %p111, %p112
    %p114 = pneg %p113
    // Predicated region
    $region9: #{_lambda_.11} parent=5 // pred_check
      _
    $region10: #{_lambda_.11} parent=5 // pred_check_branch
      %116 = sbr.rel (%p113) target = $region12
    $region11: #{_lambda_.11} parent=5 // pred_region
      %s117 = ssub.s32 %s9, 1
      // Predicated region
      $region13: #{_lambda_.11} parent=11 // pred_check
        %p118 = pneg %p56
      $region14: #{_lambda_.11} parent=11 // pred_check_branch
        %120 = sbr.rel (%p118) target = $region16
      $region15: #{_lambda_.11} parent=11 // pred_region
        _
      $region16: #{_lambda_.11} parent=11 // pred_fallthru
        _
      // Predicated region
      $region17: #{_lambda_.11} parent=11 // pred_check
        %p121 = pneg %p77
      $region18: #{_lambda_.11} parent=11 // pred_check_branch
        %123 = sbr.rel (%p121) target = $region20
      $region19: #{_lambda_.11} parent=11 // pred_region
        _
      $region20: #{_lambda_.11} parent=11 // pred_fallthru
        _
    $region12: #{_lambda_.11} parent=5 // pred_fallthru
      _
    %p124 = scmp.lt.s32.totalorder %s9, 2
    // Predicated region
    $region21: #{_lambda_.11} parent=5 // pred_check
      %p125 = pneg %p124
    $region22: #{_lambda_.11} parent=5 // pred_check_branch
      %127 = sbr.rel (%p125) target = $region24
    $region23: #{_lambda_.11} parent=5 // pred_region
      // Predicated region
      $region25: #{_lambda_.11} parent=23 // pred_check
        %p128 = pneg %p29
      $region26: #{_lambda_.11} parent=23 // pred_check_branch
        %130 = sbr.rel (%p128) target = $region28
      $region27: #{_lambda_.11} parent=23 // pred_region
        %s131 = smul.u32 32, %s9
        %p132 = scmp.lt.s32.totalorder %s131, 63
        %s133 = scalar_select %p132, %s131, 63
        %s134 = smul.addr %s133, 3
        %s135 = smul.addr %s134, 8
        %s136 = scalar_lea.vmem %s0, %s135
        %s137 = smul.u32 32, %s9
      $region28: #{_lambda_.11} parent=23 // pred_fallthru
        _
    $region24: #{_lambda_.11} parent=5 // pred_fallthru
      _
    %p138 = scmp.le.s32.totalorder 1, %s9
    %p139 = scmp.lt.s32.totalorder %s9, 3
    %p140 = pnand %p138, %p139
    %p141 = pneg %p140
    // Predicated region
    $region29: #{_lambda_.11} parent=5 // pred_check
      _
    $region30: #{_lambda_.11} parent=5 // pred_check_branch
      %143 = sbr.rel (%p140) target = $region32
    $region31: #{_lambda_.11} parent=5 // pred_region
      %s144 = ssub.s32 %s9, 1
      %s145 = smul.u32 32, %s14
      %p146 = scmp.lt.s32.totalorder %s145, 63
      %s147 = scalar_select %p146, %s145, 63
      %s148 = smul.addr %s147, 3
      %s149 = smul.addr %s148, 8
      %s150 = scalar_lea.vmem %s0, %s149
      %p151 = pneg %p35
      %p152 = pneg %p32
      %p153 = pneg %p56
      %p154 = pneg %p53
      %p155 = pneg %p77
      %p156 = pneg %p74
      %p157 = pneg %p103
      %p158 = pneg %p100
      %s159 = smul.u32 32, %s14
      %p160 = scmp.lt.s32.totalorder %s159, 63
      %s161 = scalar_select %p160, %s159, 63
      %s162 = smul.addr %s161, 8
      %s163 = scalar_lea.vmem %s3, %s162
      %s164 = smul.u32 32, %s14
      %p165 = scmp.lt.s32.totalorder %s164, 63
      %s166 = scalar_select %p165, %s164, 63
      %s167 = smul.addr %s166, 3
      %s168 = smul.addr %s167, 8
      %s169 = scalar_lea.vmem %s0, %s168
      %s170 = smul.u32 32, %s14
      %s171 = smul.u32 32, %s14
      %p172 = scmp.lt.s32.totalorder %s171, 63
      %s173 = scalar_select %p172, %s171, 63
      %s174 = smul.addr %s173, 8
      %s175 = scalar_lea.vmem %s3, %s174
      %s176 = smul.u32 32, %s14
      %v177 = vld [vmem:[%s169] sm:$0xff]
      %v178 = vld [vmem:[%s169 + $0x8] sm:$0xff]
      %v179 = vld [vmem:[%s169 + $0x10] sm:$0xff]
      %v180 = vld [vmem:[%s169 + $0x18] sm:$0xff]
      %v181 = vld [vmem:[%s169 + $0x20] sm:$0xff]
      %v182 = vld [vmem:[%s169 + $0x28] sm:$0xff]
      %v183 = vld [vmem:[%s169 + $0x30] sm:$0xff]
      %v184 = vld [vmem:[%s169 + $0x38] sm:$0xff]
      %v185 = vld [vmem:[%s169 + $0x40] sm:$0xff]
      %v186 = vld [vmem:[%s169 + $0x48] sm:$0xff]
      %v187 = vld [vmem:[%s169 + $0x50] sm:$0xff]
      %v188 = vld [vmem:[%s169 + $0x58] sm:$0xff]
      %v189 = vld [vmem:[%s169 + $0x60] sm:$0xff]
      %v190 = vld [vmem:[%s169 + $0x68] sm:$0xff]
      %v191 = vld [vmem:[%s169 + $0x70] sm:$0xff]
      %v192 = vld [vmem:[%s169 + $0x78] sm:$0xff]
      %v193 = vld [vmem:[%s169 + $0x80] sm:$0xff]
      %v194 = vld [vmem:[%s169 + $0x88] sm:$0xff]
      %v195 = vld [vmem:[%s169 + $0x90] sm:$0xff]
      %v196 = vld [vmem:[%s169 + $0x98] sm:$0xff]
      %v197 = vld [vmem:[%s169 + $0xa0] sm:$0xff]
      %v198 = vld [vmem:[%s169 + $0xa8] sm:$0xff]
      %v199 = vld [vmem:[%s169 + $0xb0] sm:$0xff]
      %v200 = vld [vmem:[%s169 + $0xb8] sm:$0xff]
      %v201 = vld [vmem:[%s169 + $0xc0] sm:$0xff]
      %v202 = vld [vmem:[%s169 + $0xc8] sm:$0xff]
      %v203 = vld [vmem:[%s169 + $0xd0] sm:$0xff]
      %v204 = vld [vmem:[%s169 + $0xd8] sm:$0xff]
      %v205 = vld [vmem:[%s169 + $0xe0] sm:$0xff]
      %v206 = vld [vmem:[%s169 + $0xe8] sm:$0xff]
      %v207 = vld [vmem:[%s169 + $0xf0] sm:$0xff]
      %v208 = vld [vmem:[%s169 + $0xf8] sm:$0xff]
      %v209 = vld [vmem:[%s169 + $0x100] sm:$0xff]
      %v210 = vld [vmem:[%s169 + $0x108] sm:$0xff]
      %v211 = vld [vmem:[%s169 + $0x110] sm:$0xff]
      %v212 = vld [vmem:[%s169 + $0x118] sm:$0xff]
      %v213 = vld [vmem:[%s169 + $0x120] sm:$0xff]
      %v214 = vld [vmem:[%s169 + $0x128] sm:$0xff]
      %v215 = vld [vmem:[%s169 + $0x130] sm:$0xff]
      %v216 = vld [vmem:[%s169 + $0x138] sm:$0xff]
      %v217 = vld [vmem:[%s169 + $0x140] sm:$0xff]
      %v218 = vld [vmem:[%s169 + $0x148] sm:$0xff]
      %v219 = vld [vmem:[%s169 + $0x150] sm:$0xff]
      %v220 = vld [vmem:[%s169 + $0x158] sm:$0xff]
      %v221 = vld [vmem:[%s169 + $0x160] sm:$0xff]
      %v222 = vld [vmem:[%s169 + $0x168] sm:$0xff]
      %v223 = vld [vmem:[%s169 + $0x170] sm:$0xff]
      %v224 = vld [vmem:[%s169 + $0x178] sm:$0xff]
      %v225 = vld [vmem:[%s169 + $0x180] sm:$0xff]
      %v226 = vld [vmem:[%s169 + $0x188] sm:$0xff]
      %v227 = vld [vmem:[%s169 + $0x190] sm:$0xff]
      %v228 = vld [vmem:[%s169 + $0x198] sm:$0xff]
      %v229 = vld [vmem:[%s169 + $0x1a0] sm:$0xff]
      %v230 = vld [vmem:[%s169 + $0x1a8] sm:$0xff]
      %v231 = vld [vmem:[%s169 + $0x1b0] sm:$0xff]
      %v232 = vld [vmem:[%s169 + $0x1b8] sm:$0xff]
      %v233 = vld [vmem:[%s169 + $0x1c0] sm:$0xff]
      %v234 = vld [vmem:[%s169 + $0x1c8] sm:$0xff]
      %v235 = vld [vmem:[%s169 + $0x1d0] sm:$0xff]
      %v236 = vld [vmem:[%s169 + $0x1d8] sm:$0xff]
      %v237 = vld [vmem:[%s169 + $0x1e0] sm:$0xff]
      %v238 = vld [vmem:[%s169 + $0x1e8] sm:$0xff]
      %v239 = vld [vmem:[%s169 + $0x1f0] sm:$0xff]
      %v240 = vld [vmem:[%s169 + $0x1f8] sm:$0xff]
      %v241 = vld [vmem:[%s169 + $0x200] sm:$0xff]
      %v242 = vld [vmem:[%s169 + $0x208] sm:$0xff]
      %v243 = vld [vmem:[%s169 + $0x210] sm:$0xff]
      %v244 = vld [vmem:[%s169 + $0x218] sm:$0xff]
      %v245 = vld [vmem:[%s169 + $0x220] sm:$0xff]
      %v246 = vld [vmem:[%s169 + $0x228] sm:$0xff]
      %v247 = vld [vmem:[%s169 + $0x230] sm:$0xff]
      %v248 = vld [vmem:[%s169 + $0x238] sm:$0xff]
      %v249 = vld [vmem:[%s169 + $0x240] sm:$0xff]
      %v250 = vld [vmem:[%s169 + $0x248] sm:$0xff]
      %v251 = vld [vmem:[%s169 + $0x250] sm:$0xff]
      %v252 = vld [vmem:[%s169 + $0x258] sm:$0xff]
      %v253 = vld [vmem:[%s169 + $0x260] sm:$0xff]
      %v254 = vld [vmem:[%s169 + $0x268] sm:$0xff]
      %v255 = vld [vmem:[%s169 + $0x270] sm:$0xff]
      %v256 = vld [vmem:[%s169 + $0x278] sm:$0xff]
      %v257 = vld [vmem:[%s169 + $0x280] sm:$0xff]
      %v258 = vld [vmem:[%s169 + $0x288] sm:$0xff]
      %v259 = vld [vmem:[%s169 + $0x290] sm:$0xff]
      %v260 = vld [vmem:[%s169 + $0x298] sm:$0xff]
      %v261 = vld [vmem:[%s169 + $0x2a0] sm:$0xff]
      %v262 = vld [vmem:[%s169 + $0x2a8] sm:$0xff]
      %v263 = vld [vmem:[%s169 + $0x2b0] sm:$0xff]
      %v264 = vld [vmem:[%s169 + $0x2b8] sm:$0xff]
      %v265 = vld [vmem:[%s169 + $0x2c0] sm:$0xff]
      %v266 = vld [vmem:[%s169 + $0x2c8] sm:$0xff]
      %v267 = vld [vmem:[%s169 + $0x2d0] sm:$0xff]
      %v268 = vld [vmem:[%s169 + $0x2d8] sm:$0xff]
      %v269 = vld [vmem:[%s169 + $0x2e0] sm:$0xff]
      %v270 = vld [vmem:[%s169 + $0x2e8] sm:$0xff]
      %v271 = vld [vmem:[%s169 + $0x2f0] sm:$0xff]
      %v272 = vld [vmem:[%s169 + $0x2f8] sm:$0xff]
      %v273 = vld [vmem:[%s1] sm:$0xff]
      %v274 = vld [vmem:[%s1 + $0x8] sm:$0xff]
      %v275 = vld [vmem:[%s1 + $0x10] sm:$0xff]
      %v276 = vld [vmem:[%s1 + $0x18] sm:$0xff]
      %v277 = vld [vmem:[%s1 + $0x20] sm:$0xff]
      %v278 = vld [vmem:[%s1 + $0x28] sm:$0xff]
      %v279 = vld [vmem:[%s1 + $0x30] sm:$0xff]
      %v280 = vld [vmem:[%s1 + $0x38] sm:$0xff]
      %v281 = vld [vmem:[%s1 + $0x40] sm:$0xff]
      %v282 = vld [vmem:[%s1 + $0x48] sm:$0xff]
      %v283 = vld [vmem:[%s1 + $0x50] sm:$0xff]
      %v284 = vld [vmem:[%s1 + $0x58] sm:$0xff]
      %v285 = vld [vmem:[%s1 + $0x60] sm:$0xff]
      %v286 = vld [vmem:[%s1 + $0x68] sm:$0xff]
      %v287 = vld [vmem:[%s1 + $0x70] sm:$0xff]
      %v288 = vld [vmem:[%s1 + $0x78] sm:$0xff]
      %v289 = vld [vmem:[%s1 + $0x80] sm:$0xff]
      %v290 = vld [vmem:[%s1 + $0x88] sm:$0xff]
      %v291 = vld [vmem:[%s1 + $0x90] sm:$0xff]
      %v292 = vld [vmem:[%s1 + $0x98] sm:$0xff]
      %v293 = vld [vmem:[%s1 + $0xa0] sm:$0xff]
      %v294 = vld [vmem:[%s1 + $0xa8] sm:$0xff]
      %v295 = vld [vmem:[%s1 + $0xb0] sm:$0xff]
      %v296 = vld [vmem:[%s1 + $0xb8] sm:$0xff]
      %v297 = vld [vmem:[%s1 + $0xc0] sm:$0xff]
      %v298 = vld [vmem:[%s1 + $0xc8] sm:$0xff]
      %v299 = vld [vmem:[%s1 + $0xd0] sm:$0xff]
      %v300 = vld [vmem:[%s1 + $0xd8] sm:$0xff]
      %v301 = vld [vmem:[%s1 + $0xe0] sm:$0xff]
      %v302 = vld [vmem:[%s1 + $0xe8] sm:$0xff]
      %v303 = vld [vmem:[%s1 + $0xf0] sm:$0xff]
      %v304 = vld [vmem:[%s1 + $0xf8] sm:$0xff]
      %v305 = vld [vmem:[%s1 + $0x100] sm:$0xff]
      %v306 = vld [vmem:[%s1 + $0x108] sm:$0xff]
      %v307 = vld [vmem:[%s1 + $0x110] sm:$0xff]
      %v308 = vld [vmem:[%s1 + $0x118] sm:$0xff]
      %v309 = vld [vmem:[%s1 + $0x120] sm:$0xff]
      %v310 = vld [vmem:[%s1 + $0x128] sm:$0xff]
      %v311 = vld [vmem:[%s1 + $0x130] sm:$0xff]
      %v312 = vld [vmem:[%s1 + $0x138] sm:$0xff]
      %v313 = vld [vmem:[%s1 + $0x140] sm:$0xff]
      %v314 = vld [vmem:[%s1 + $0x148] sm:$0xff]
      %v315 = vld [vmem:[%s1 + $0x150] sm:$0xff]
      %v316 = vld [vmem:[%s1 + $0x158] sm:$0xff]
      %v317 = vld [vmem:[%s1 + $0x160] sm:$0xff]
      %v318 = vld [vmem:[%s1 + $0x168] sm:$0xff]
      %v319 = vld [vmem:[%s1 + $0x170] sm:$0xff]
      %v320 = vld [vmem:[%s1 + $0x178] sm:$0xff]
      %v321 = vld [vmem:[%s2] sm:$0x1]
      %v323 = vperm.slane %v321, 0
      %325 = vmatpush.msra.mxu0 %v288
      %326 = vmatpush.msra.mxu0 %v287
      %327 = vmatpush.msra.mxu0 %v286
      %328 = vmatpush.msra.mxu0 %v285
      %329 = vmatpush.msra.mxu0 %v284
      %330 = vmatpush.msra.mxu0 %v283
      %331 = vmatpush.msra.mxu0 %v282
      %332 = vmatpush.msra.mxu0 %v281
      %333 = vmatpush.msra.mxu0 %v280
      %334 = vmatpush.msra.mxu0 %v279
      %335 = vmatpush.msra.mxu0 %v278
      %336 = vmatpush.msra.mxu0 %v277
      %337 = vmatpush.msra.mxu0 %v276
      %338 = vmatpush.msra.mxu0 %v275
      %339 = vmatpush.msra.mxu0 %v274
      %340 = vmatpush.msra.mxu0 %v273
      %341 = vmatmul.f32.gmra.mxu0 %v177
      %v342 = vpop.f32.mrf.mxu0
      %v343 = vadd.f32 %v323, %v342
      %344 = vmatmul.f32.gmra.mxu0 %v180
      %v345 = vpop.f32.mrf.mxu0
      %v346 = vadd.f32 %v323, %v345
      %347 = vmatmul.f32.gmra.mxu0 %v183
      %v348 = vpop.f32.mrf.mxu0
      %v349 = vadd.f32 %v323, %v348
      %350 = vmatmul.f32.gmra.mxu0 %v186
      %v351 = vpop.f32.mrf.mxu0
      %v352 = vadd.f32 %v323, %v351
      %353 = vmatmul.f32.gmra.mxu0 %v189
      %v354 = vpop.f32.mrf.mxu0
      %v355 = vadd.f32 %v323, %v354
      %356 = vmatmul.f32.gmra.mxu0 %v192
      %v357 = vpop.f32.mrf.mxu0
      %v358 = vadd.f32 %v323, %v357
      %359 = vmatmul.f32.gmra.mxu0 %v195
      %v360 = vpop.f32.mrf.mxu0
      %v361 = vadd.f32 %v323, %v360
      %362 = vmatmul.f32.gmra.mxu0 %v198
      %v363 = vpop.f32.mrf.mxu0
      %v364 = vadd.f32 %v323, %v363
      %365 = vmatmul.f32.gmra.mxu0 %v201
      %v366 = vpop.f32.mrf.mxu0
      %v367 = vadd.f32 %v323, %v366
      %368 = vmatmul.f32.gmra.mxu0 %v204
      %v369 = vpop.f32.mrf.mxu0
      %v370 = vadd.f32 %v323, %v369
      %371 = vmatmul.f32.gmra.mxu0 %v207
      %v372 = vpop.f32.mrf.mxu0
      %v373 = vadd.f32 %v323, %v372
      %374 = vmatmul.f32.gmra.mxu0 %v210
      %v375 = vpop.f32.mrf.mxu0
      %v376 = vadd.f32 %v323, %v375
      %377 = vmatmul.f32.gmra.mxu0 %v213
      %v378 = vpop.f32.mrf.mxu0
      %v379 = vadd.f32 %v323, %v378
      %380 = vmatmul.f32.gmra.mxu0 %v216
      %v381 = vpop.f32.mrf.mxu0
      %v382 = vadd.f32 %v323, %v381
      %383 = vmatmul.f32.gmra.mxu0 %v219
      %v384 = vpop.f32.mrf.mxu0
      %v385 = vadd.f32 %v323, %v384
      %386 = vmatmul.f32.gmra.mxu0 %v222
      %v387 = vpop.f32.mrf.mxu0
      %v388 = vadd.f32 %v323, %v387
      %389 = vmatmul.f32.gmra.mxu0 %v225
      %v390 = vpop.f32.mrf.mxu0
      %v391 = vadd.f32 %v323, %v390
      %392 = vmatmul.f32.gmra.mxu0 %v228
      %v393 = vpop.f32.mrf.mxu0
      %v394 = vadd.f32 %v323, %v393
      %395 = vmatmul.f32.gmra.mxu0 %v231
      %v396 = vpop.f32.mrf.mxu0
      %v397 = vadd.f32 %v323, %v396
      %398 = vmatmul.f32.gmra.mxu0 %v234
      %v399 = vpop.f32.mrf.mxu0
      %v400 = vadd.f32 %v323, %v399
      %401 = vmatmul.f32.gmra.mxu0 %v237
      %v402 = vpop.f32.mrf.mxu0
      %v403 = vadd.f32 %v323, %v402
      %404 = vmatmul.f32.gmra.mxu0 %v240
      %v405 = vpop.f32.mrf.mxu0
      %v406 = vadd.f32 %v323, %v405
      %407 = vmatmul.f32.gmra.mxu0 %v243
      %v408 = vpop.f32.mrf.mxu0
      %v409 = vadd.f32 %v323, %v408
      %410 = vmatmul.f32.gmra.mxu0 %v246
      %v411 = vpop.f32.mrf.mxu0
      %v412 = vadd.f32 %v323, %v411
      %413 = vmatmul.f32.gmra.mxu0 %v249
      %v414 = vpop.f32.mrf.mxu0
      %v415 = vadd.f32 %v323, %v414
      %416 = vmatmul.f32.gmra.mxu0 %v252
      %v417 = vpop.f32.mrf.mxu0
      %v418 = vadd.f32 %v323, %v417
      %419 = vmatmul.f32.gmra.mxu0 %v255
      %v420 = vpop.f32.mrf.mxu0
      %v421 = vadd.f32 %v323, %v420
      %422 = vmatmul.f32.gmra.mxu0 %v258
      %v423 = vpop.f32.mrf.mxu0
      %v424 = vadd.f32 %v323, %v423
      %425 = vmatmul.f32.gmra.mxu0 %v261
      %v426 = vpop.f32.mrf.mxu0
      %v427 = vadd.f32 %v323, %v426
      %428 = vmatmul.f32.gmra.mxu0 %v264
      %v429 = vpop.f32.mrf.mxu0
      %v430 = vadd.f32 %v323, %v429
      %431 = vmatmul.f32.gmra.mxu0 %v267
      %v432 = vpop.f32.mrf.mxu0
      %v433 = vadd.f32 %v323, %v432
      %434 = vmatmul.f32.gmra.mxu0 %v270
      %v435 = vpop.f32.mrf.mxu0
      %v436 = vadd.f32 %v323, %v435
      %437 = vdwg.mxu0
      %438 = vmatpush.msra.mxu0 %v304
      %439 = vmatpush.msra.mxu0 %v303
      %440 = vmatpush.msra.mxu0 %v302
      %441 = vmatpush.msra.mxu0 %v301
      %442 = vmatpush.msra.mxu0 %v300
      %443 = vmatpush.msra.mxu0 %v299
      %444 = vmatpush.msra.mxu0 %v298
      %445 = vmatpush.msra.mxu0 %v297
      %446 = vmatpush.msra.mxu0 %v296
      %447 = vmatpush.msra.mxu0 %v295
      %448 = vmatpush.msra.mxu0 %v294
      %449 = vmatpush.msra.mxu0 %v293
      %450 = vmatpush.msra.mxu0 %v292
      %451 = vmatpush.msra.mxu0 %v291
      %452 = vmatpush.msra.mxu0 %v290
      %453 = vmatpush.msra.mxu0 %v289
      %454 = vmatmul.f32.gmra.mxu0 %v178
      %v455 = vpop.f32.mrf.mxu0
      %v456 = vadd.f32 %v343, %v455
      %457 = vmatmul.f32.gmra.mxu0 %v181
      %v458 = vpop.f32.mrf.mxu0
      %v459 = vadd.f32 %v346, %v458
      %460 = vmatmul.f32.gmra.mxu0 %v184
      %v461 = vpop.f32.mrf.mxu0
      %v462 = vadd.f32 %v349, %v461
      %463 = vmatmul.f32.gmra.mxu0 %v187
      %v464 = vpop.f32.mrf.mxu0
      %v465 = vadd.f32 %v352, %v464
      %466 = vmatmul.f32.gmra.mxu0 %v190
      %v467 = vpop.f32.mrf.mxu0
      %v468 = vadd.f32 %v355, %v467
      %469 = vmatmul.f32.gmra.mxu0 %v193
      %v470 = vpop.f32.mrf.mxu0
      %v471 = vadd.f32 %v358, %v470
      %472 = vmatmul.f32.gmra.mxu0 %v196
      %v473 = vpop.f32.mrf.mxu0
      %v474 = vadd.f32 %v361, %v473
      %475 = vmatmul.f32.gmra.mxu0 %v199
      %v476 = vpop.f32.mrf.mxu0
      %v477 = vadd.f32 %v364, %v476
      %478 = vmatmul.f32.gmra.mxu0 %v202
      %v479 = vpop.f32.mrf.mxu0
      %v480 = vadd.f32 %v367, %v479
      %481 = vmatmul.f32.gmra.mxu0 %v205
      %v482 = vpop.f32.mrf.mxu0
      %v483 = vadd.f32 %v370, %v482
      %484 = vmatmul.f32.gmra.mxu0 %v208
      %v485 = vpop.f32.mrf.mxu0
      %v486 = vadd.f32 %v373, %v485
      %487 = vmatmul.f32.gmra.mxu0 %v211
      %v488 = vpop.f32.mrf.mxu0
      %v489 = vadd.f32 %v376, %v488
      %490 = vmatmul.f32.gmra.mxu0 %v214
      %v491 = vpop.f32.mrf.mxu0
      %v492 = vadd.f32 %v379, %v491
      %493 = vmatmul.f32.gmra.mxu0 %v217
      %v494 = vpop.f32.mrf.mxu0
      %v495 = vadd.f32 %v382, %v494
      %496 = vmatmul.f32.gmra.mxu0 %v220
      %v497 = vpop.f32.mrf.mxu0
      %v498 = vadd.f32 %v385, %v497
      %499 = vmatmul.f32.gmra.mxu0 %v223
      %v500 = vpop.f32.mrf.mxu0
      %v501 = vadd.f32 %v388, %v500
      %502 = vmatmul.f32.gmra.mxu0 %v226
      %v503 = vpop.f32.mrf.mxu0
      %v504 = vadd.f32 %v391, %v503
      %505 = vmatmul.f32.gmra.mxu0 %v229
      %v506 = vpop.f32.mrf.mxu0
      %v507 = vadd.f32 %v394, %v506
      %508 = vmatmul.f32.gmra.mxu0 %v232
      %v509 = vpop.f32.mrf.mxu0
      %v510 = vadd.f32 %v397, %v509
      %511 = vmatmul.f32.gmra.mxu0 %v235
      %v512 = vpop.f32.mrf.mxu0
      %v513 = vadd.f32 %v400, %v512
      %514 = vmatmul.f32.gmra.mxu0 %v238
      %v515 = vpop.f32.mrf.mxu0
      %v516 = vadd.f32 %v403, %v515
      %517 = vmatmul.f32.gmra.mxu0 %v241
      %v518 = vpop.f32.mrf.mxu0
      %v519 = vadd.f32 %v406, %v518
      %520 = vmatmul.f32.gmra.mxu0 %v244
      %v521 = vpop.f32.mrf.mxu0
      %v522 = vadd.f32 %v409, %v521
      %523 = vmatmul.f32.gmra.mxu0 %v247
      %v524 = vpop.f32.mrf.mxu0
      %v525 = vadd.f32 %v412, %v524
      %526 = vmatmul.f32.gmra.mxu0 %v250
      %v527 = vpop.f32.mrf.mxu0
      %v528 = vadd.f32 %v415, %v527
      %529 = vmatmul.f32.gmra.mxu0 %v253
      %v530 = vpop.f32.mrf.mxu0
      %v531 = vadd.f32 %v418, %v530
      %532 = vmatmul.f32.gmra.mxu0 %v256
      %v533 = vpop.f32.mrf.mxu0
      %v534 = vadd.f32 %v421, %v533
      %535 = vmatmul.f32.gmra.mxu0 %v259
      %v536 = vpop.f32.mrf.mxu0
      %v537 = vadd.f32 %v424, %v536
      %538 = vmatmul.f32.gmra.mxu0 %v262
      %v539 = vpop.f32.mrf.mxu0
      %v540 = vadd.f32 %v427, %v539
      %541 = vmatmul.f32.gmra.mxu0 %v265
      %v542 = vpop.f32.mrf.mxu0
      %v543 = vadd.f32 %v430, %v542
      %544 = vmatmul.f32.gmra.mxu0 %v268
      %v545 = vpop.f32.mrf.mxu0
      %v546 = vadd.f32 %v433, %v545
      %547 = vmatmul.f32.gmra.mxu0 %v271
      %v548 = vpop.f32.mrf.mxu0
      %v549 = vadd.f32 %v436, %v548
      %550 = vdwg.mxu0
      %551 = vmatpush.msra.mxu0 %v320
      %552 = vmatpush.msra.mxu0 %v319
      %553 = vmatpush.msra.mxu0 %v318
      %554 = vmatpush.msra.mxu0 %v317
      %555 = vmatpush.msra.mxu0 %v316
      %556 = vmatpush.msra.mxu0 %v315
      %557 = vmatpush.msra.mxu0 %v314
      %558 = vmatpush.msra.mxu0 %v313
      %559 = vmatpush.msra.mxu0 %v312
      %560 = vmatpush.msra.mxu0 %v311
      %561 = vmatpush.msra.mxu0 %v310
      %562 = vmatpush.msra.mxu0 %v309
      %563 = vmatpush.msra.mxu0 %v308
      %564 = vmatpush.msra.mxu0 %v307
      %565 = vmatpush.msra.mxu0 %v306
      %566 = vmatpush.msra.mxu0 %v305
      %567 = vmatmul.f32.gmra.mxu0 %v179
      %v568 = vpop.f32.mrf.mxu0
      %v569 = vadd.f32 %v456, %v568
      %570 = vmatmul.f32.gmra.mxu0 %v182
      %v571 = vpop.f32.mrf.mxu0
      %v572 = vadd.f32 %v459, %v571
      %573 = vmatmul.f32.gmra.mxu0 %v185
      %v574 = vpop.f32.mrf.mxu0
      %v575 = vadd.f32 %v462, %v574
      %576 = vmatmul.f32.gmra.mxu0 %v188
      %v577 = vpop.f32.mrf.mxu0
      %v578 = vadd.f32 %v465, %v577
      %579 = vmatmul.f32.gmra.mxu0 %v191
      %v580 = vpop.f32.mrf.mxu0
      %v581 = vadd.f32 %v468, %v580
      %582 = vmatmul.f32.gmra.mxu0 %v194
      %v583 = vpop.f32.mrf.mxu0
      %v584 = vadd.f32 %v471, %v583
      %585 = vmatmul.f32.gmra.mxu0 %v197
      %v586 = vpop.f32.mrf.mxu0
      %v587 = vadd.f32 %v474, %v586
      %588 = vmatmul.f32.gmra.mxu0 %v200
      %v589 = vpop.f32.mrf.mxu0
      %v590 = vadd.f32 %v477, %v589
      %591 = vmatmul.f32.gmra.mxu0 %v203
      %v592 = vpop.f32.mrf.mxu0
      %v593 = vadd.f32 %v480, %v592
      %594 = vmatmul.f32.gmra.mxu0 %v206
      %v595 = vpop.f32.mrf.mxu0
      %v596 = vadd.f32 %v483, %v595
      %597 = vmatmul.f32.gmra.mxu0 %v209
      %v598 = vpop.f32.mrf.mxu0
      %v599 = vadd.f32 %v486, %v598
      %600 = vmatmul.f32.gmra.mxu0 %v212
      %v601 = vpop.f32.mrf.mxu0
      %v602 = vadd.f32 %v489, %v601
      %603 = vmatmul.f32.gmra.mxu0 %v215
      %v604 = vpop.f32.mrf.mxu0
      %v605 = vadd.f32 %v492, %v604
      %606 = vmatmul.f32.gmra.mxu0 %v218
      %v607 = vpop.f32.mrf.mxu0
      %v608 = vadd.f32 %v495, %v607
      %609 = vmatmul.f32.gmra.mxu0 %v221
      %v610 = vpop.f32.mrf.mxu0
      %v611 = vadd.f32 %v498, %v610
      %612 = vmatmul.f32.gmra.mxu0 %v224
      %v613 = vpop.f32.mrf.mxu0
      %v614 = vadd.f32 %v501, %v613
      %615 = vmatmul.f32.gmra.mxu0 %v227
      %v616 = vpop.f32.mrf.mxu0
      %v617 = vadd.f32 %v504, %v616
      %618 = vmatmul.f32.gmra.mxu0 %v230
      %v619 = vpop.f32.mrf.mxu0
      %v620 = vadd.f32 %v507, %v619
      %621 = vmatmul.f32.gmra.mxu0 %v233
      %v622 = vpop.f32.mrf.mxu0
      %v623 = vadd.f32 %v510, %v622
      %624 = vmatmul.f32.gmra.mxu0 %v236
      %v625 = vpop.f32.mrf.mxu0
      %v626 = vadd.f32 %v513, %v625
      %627 = vmatmul.f32.gmra.mxu0 %v239
      %v628 = vpop.f32.mrf.mxu0
      %v629 = vadd.f32 %v516, %v628
      %630 = vmatmul.f32.gmra.mxu0 %v242
      %v631 = vpop.f32.mrf.mxu0
      %v632 = vadd.f32 %v519, %v631
      %633 = vmatmul.f32.gmra.mxu0 %v245
      %v634 = vpop.f32.mrf.mxu0
      %v635 = vadd.f32 %v522, %v634
      %636 = vmatmul.f32.gmra.mxu0 %v248
      %v637 = vpop.f32.mrf.mxu0
      %v638 = vadd.f32 %v525, %v637
      %639 = vmatmul.f32.gmra.mxu0 %v251
      %v640 = vpop.f32.mrf.mxu0
      %v641 = vadd.f32 %v528, %v640
      %642 = vmatmul.f32.gmra.mxu0 %v254
      %v643 = vpop.f32.mrf.mxu0
      %v644 = vadd.f32 %v531, %v643
      %645 = vmatmul.f32.gmra.mxu0 %v257
      %v646 = vpop.f32.mrf.mxu0
      %v647 = vadd.f32 %v534, %v646
      %648 = vmatmul.f32.gmra.mxu0 %v260
      %v649 = vpop.f32.mrf.mxu0
      %v650 = vadd.f32 %v537, %v649
      %651 = vmatmul.f32.gmra.mxu0 %v263
      %v652 = vpop.f32.mrf.mxu0
      %v653 = vadd.f32 %v540, %v652
      %654 = vmatmul.f32.gmra.mxu0 %v266
      %v655 = vpop.f32.mrf.mxu0
      %v656 = vadd.f32 %v543, %v655
      %657 = vmatmul.f32.gmra.mxu0 %v269
      %v658 = vpop.f32.mrf.mxu0
      %v659 = vadd.f32 %v546, %v658
      %660 = vmatmul.f32.gmra.mxu0 %v272
      %v661 = vpop.f32.mrf.mxu0
      %v662 = vadd.f32 %v549, %v661
      %663 = vdwg.mxu0
      %v664 = vxor.u32 %v569, 2147483648
      %v665 = vxor.u32 %v572, 2147483648
      %v666 = vxor.u32 %v575, 2147483648
      %v667 = vxor.u32 %v578, 2147483648
      %v668 = vxor.u32 %v581, 2147483648
      %v669 = vxor.u32 %v584, 2147483648
      %v670 = vxor.u32 %v587, 2147483648
      %v671 = vxor.u32 %v590, 2147483648
      %v672 = vxor.u32 %v593, 2147483648
      %v673 = vxor.u32 %v596, 2147483648
      %v674 = vxor.u32 %v599, 2147483648
      %v675 = vxor.u32 %v602, 2147483648
      %v676 = vxor.u32 %v605, 2147483648
      %v677 = vxor.u32 %v608, 2147483648
      %v678 = vxor.u32 %v611, 2147483648
      %v679 = vxor.u32 %v614, 2147483648
      %v680 = vxor.u32 %v617, 2147483648
      %v681 = vxor.u32 %v620, 2147483648
      %v682 = vxor.u32 %v623, 2147483648
      %v683 = vxor.u32 %v626, 2147483648
      %v684 = vxor.u32 %v629, 2147483648
      %v685 = vxor.u32 %v632, 2147483648
      %v686 = vxor.u32 %v635, 2147483648
      %v687 = vxor.u32 %v638, 2147483648
      %v688 = vxor.u32 %v641, 2147483648
      %v689 = vxor.u32 %v644, 2147483648
      %v690 = vxor.u32 %v647, 2147483648
      %v691 = vxor.u32 %v650, 2147483648
      %v692 = vxor.u32 %v653, 2147483648
      %v693 = vxor.u32 %v656, 2147483648
      %v694 = vxor.u32 %v659, 2147483648
      %v695 = vxor.u32 %v662, 2147483648
      %v696 = vmul.f32 %v664, 1.442695
      %v697 = vpow.pop %v696
      %v698 = vmul.f32 %v665, 1.442695
      %v699 = vpow.pop %v698
      %v700 = vmul.f32 %v666, 1.442695
      %v701 = vpow.pop %v700
      %v702 = vmul.f32 %v667, 1.442695
      %v703 = vpow.pop %v702
      %v704 = vmul.f32 %v668, 1.442695
      %v705 = vpow.pop %v704
      %v706 = vmul.f32 %v669, 1.442695
      %v707 = vpow.pop %v706
      %v708 = vmul.f32 %v670, 1.442695
      %v709 = vpow.pop %v708
      %v710 = vmul.f32 %v671, 1.442695
      %v711 = vpow.pop %v710
      %v712 = vmul.f32 %v672, 1.442695
      %v713 = vpow.pop %v712
      %v714 = vmul.f32 %v673, 1.442695
      %v715 = vpow.pop %v714
      %v716 = vmul.f32 %v674, 1.442695
      %v717 = vpow.pop %v716
      %v718 = vmul.f32 %v675, 1.442695
      %v719 = vpow.pop %v718
      %v720 = vmul.f32 %v676, 1.442695
      %v721 = vpow.pop %v720
      %v722 = vmul.f32 %v677, 1.442695
      %v723 = vpow.pop %v722
      %v724 = vmul.f32 %v678, 1.442695
      %v725 = vpow.pop %v724
      %v726 = vmul.f32 %v679, 1.442695
      %v727 = vpow.pop %v726
      %v728 = vmul.f32 %v680, 1.442695
      %v729 = vpow.pop %v728
      %v730 = vmul.f32 %v681, 1.442695
      %v731 = vpow.pop %v730
      %v732 = vmul.f32 %v682, 1.442695
      %v733 = vpow.pop %v732
      %v734 = vmul.f32 %v683, 1.442695
      %v735 = vpow.pop %v734
      %v736 = vmul.f32 %v684, 1.442695
      %v737 = vpow.pop %v736
      %v738 = vmul.f32 %v685, 1.442695
      %v739 = vpow.pop %v738
      %v740 = vmul.f32 %v686, 1.442695
      %v741 = vpow.pop %v740
      %v742 = vmul.f32 %v687, 1.442695
      %v743 = vpow.pop %v742
      %v744 = vmul.f32 %v688, 1.442695
      %v745 = vpow.pop %v744
      %v746 = vmul.f32 %v689, 1.442695
      %v747 = vpow.pop %v746
      %v748 = vmul.f32 %v690, 1.442695
      %v749 = vpow.pop %v748
      %v750 = vmul.f32 %v691, 1.442695
      %v751 = vpow.pop %v750
      %v752 = vmul.f32 %v692, 1.442695
      %v753 = vpow.pop %v752
      %v754 = vmul.f32 %v693, 1.442695
      %v755 = vpow.pop %v754
      %v756 = vmul.f32 %v694, 1.442695
      %v757 = vpow.pop %v756
      %v758 = vmul.f32 %v695, 1.442695
      %v759 = vpow.pop %v758
      %v760 = vadd.f32 %v697, 1.0
      %v761 = vadd.f32 %v699, 1.0
      %v762 = vadd.f32 %v701, 1.0
      %v763 = vadd.f32 %v703, 1.0
      %v764 = vadd.f32 %v705, 1.0
      %v765 = vadd.f32 %v707, 1.0
      %v766 = vadd.f32 %v709, 1.0
      %v767 = vadd.f32 %v711, 1.0
      %v768 = vadd.f32 %v713, 1.0
      %v769 = vadd.f32 %v715, 1.0
      %v770 = vadd.f32 %v717, 1.0
      %v771 = vadd.f32 %v719, 1.0
      %v772 = vadd.f32 %v721, 1.0
      %v773 = vadd.f32 %v723, 1.0
      %v774 = vadd.f32 %v725, 1.0
      %v775 = vadd.f32 %v727, 1.0
      %v776 = vadd.f32 %v729, 1.0
      %v777 = vadd.f32 %v731, 1.0
      %v778 = vadd.f32 %v733, 1.0
      %v779 = vadd.f32 %v735, 1.0
      %v780 = vadd.f32 %v737, 1.0
      %v781 = vadd.f32 %v739, 1.0
      %v782 = vadd.f32 %v741, 1.0
      %v783 = vadd.f32 %v743, 1.0
      %v784 = vadd.f32 %v745, 1.0
      %v785 = vadd.f32 %v747, 1.0
      %v786 = vadd.f32 %v749, 1.0
      %v787 = vadd.f32 %v751, 1.0
      %v788 = vadd.f32 %v753, 1.0
      %v789 = vadd.f32 %v755, 1.0
      %v790 = vadd.f32 %v757, 1.0
      %v791 = vadd.f32 %v759, 1.0
      %v792 = vrcp.pop %v760
      %v793 = vmul.f32 %v760, %v792
      %v794 = vsub.f32 1.0, %v793
      %v795 = vmul.f32 %v792, %v794
      %v796 = vadd.f32 %v792, %v795
      %vm797 = vweird.f32 %v760
      %vm798 = vweird.f32 %v792
      %vm799 = vmor %vm797, %vm798
      %v800 = vsel %vm799, %v792, %v796
      %v801 = vand.u32 2147483647, %v760
      %vm802 = vcmp.eq.f32.partialorder %v801, 8.507059e+37
      %v803 = vand.u32 %v760, 2147483648
      %v804 = vor.u32 1.1754944e-38, %v803
      %v805 = vsel %vm802, %v804, %v800
      %v806 = vmul.f32 1.0, %v805
      %v807 = vrcp.pop %v761
      %v808 = vmul.f32 %v761, %v807
      %v809 = vsub.f32 1.0, %v808
      %v810 = vmul.f32 %v807, %v809
      %v811 = vadd.f32 %v807, %v810
      %vm812 = vweird.f32 %v761
      %vm813 = vweird.f32 %v807
      %vm814 = vmor %vm812, %vm813
      %v815 = vsel %vm814, %v807, %v811
      %v816 = vand.u32 2147483647, %v761
      %vm817 = vcmp.eq.f32.partialorder %v816, 8.507059e+37
      %v818 = vand.u32 %v761, 2147483648
      %v819 = vor.u32 1.1754944e-38, %v818
      %v820 = vsel %vm817, %v819, %v815
      %v821 = vmul.f32 1.0, %v820
      %v822 = vrcp.pop %v762
      %v823 = vmul.f32 %v762, %v822
      %v824 = vsub.f32 1.0, %v823
      %v825 = vmul.f32 %v822, %v824
      %v826 = vadd.f32 %v822, %v825
      %vm827 = vweird.f32 %v762
      %vm828 = vweird.f32 %v822
      %vm829 = vmor %vm827, %vm828
      %v830 = vsel %vm829, %v822, %v826
      %v831 = vand.u32 2147483647, %v762
      %vm832 = vcmp.eq.f32.partialorder %v831, 8.507059e+37
      %v833 = vand.u32 %v762, 2147483648
      %v834 = vor.u32 1.1754944e-38, %v833
      %v835 = vsel %vm832, %v834, %v830
      %v836 = vmul.f32 1.0, %v835
      %v837 = vrcp.pop %v763
      %v838 = vmul.f32 %v763, %v837
      %v839 = vsub.f32 1.0, %v838
      %v840 = vmul.f32 %v837, %v839
      %v841 = vadd.f32 %v837, %v840
      %vm842 = vweird.f32 %v763
      %vm843 = vweird.f32 %v837
      %vm844 = vmor %vm842, %vm843
      %v845 = vsel %vm844, %v837, %v841
      %v846 = vand.u32 2147483647, %v763
      %vm847 = vcmp.eq.f32.partialorder %v846, 8.507059e+37
      %v848 = vand.u32 %v763, 2147483648
      %v849 = vor.u32 1.1754944e-38, %v848
      %v850 = vsel %vm847, %v849, %v845
      %v851 = vmul.f32 1.0, %v850
      %v852 = vrcp.pop %v764
      %v853 = vmul.f32 %v764, %v852
      %v854 = vsub.f32 1.0, %v853
      %v855 = vmul.f32 %v852, %v854
      %v856 = vadd.f32 %v852, %v855
      %vm857 = vweird.f32 %v764
      %vm858 = vweird.f32 %v852
      %vm859 = vmor %vm857, %vm858
      %v860 = vsel %vm859, %v852, %v856
      %v861 = vand.u32 2147483647, %v764
      %vm862 = vcmp.eq.f32.partialorder %v861, 8.507059e+37
      %v863 = vand.u32 %v764, 2147483648
      %v864 = vor.u32 1.1754944e-38, %v863
      %v865 = vsel %vm862, %v864, %v860
      %v866 = vmul.f32 1.0, %v865
      %v867 = vrcp.pop %v765
      %v868 = vmul.f32 %v765, %v867
      %v869 = vsub.f32 1.0, %v868
      %v870 = vmul.f32 %v867, %v869
      %v871 = vadd.f32 %v867, %v870
      %vm872 = vweird.f32 %v765
      %vm873 = vweird.f32 %v867
      %vm874 = vmor %vm872, %vm873
      %v875 = vsel %vm874, %v867, %v871
      %v876 = vand.u32 2147483647, %v765
      %vm877 = vcmp.eq.f32.partialorder %v876, 8.507059e+37
      %v878 = vand.u32 %v765, 2147483648
      %v879 = vor.u32 1.1754944e-38, %v878
      %v880 = vsel %vm877, %v879, %v875
      %v881 = vmul.f32 1.0, %v880
      %v882 = vrcp.pop %v766
      %v883 = vmul.f32 %v766, %v882
      %v884 = vsub.f32 1.0, %v883
      %v885 = vmul.f32 %v882, %v884
      %v886 = vadd.f32 %v882, %v885
      %vm887 = vweird.f32 %v766
      %vm888 = vweird.f32 %v882
      %vm889 = vmor %vm887, %vm888
      %v890 = vsel %vm889, %v882, %v886
      %v891 = vand.u32 2147483647, %v766
      %vm892 = vcmp.eq.f32.partialorder %v891, 8.507059e+37
      %v893 = vand.u32 %v766, 2147483648
      %v894 = vor.u32 1.1754944e-38, %v893
      %v895 = vsel %vm892, %v894, %v890
      %v896 = vmul.f32 1.0, %v895
      %v897 = vrcp.pop %v767
      %v898 = vmul.f32 %v767, %v897
      %v899 = vsub.f32 1.0, %v898
      %v900 = vmul.f32 %v897, %v899
      %v901 = vadd.f32 %v897, %v900
      %vm902 = vweird.f32 %v767
      %vm903 = vweird.f32 %v897
      %vm904 = vmor %vm902, %vm903
      %v905 = vsel %vm904, %v897, %v901
      %v906 = vand.u32 2147483647, %v767
      %vm907 = vcmp.eq.f32.partialorder %v906, 8.507059e+37
      %v908 = vand.u32 %v767, 2147483648
      %v909 = vor.u32 1.1754944e-38, %v908
      %v910 = vsel %vm907, %v909, %v905
      %v911 = vmul.f32 1.0, %v910
      %v912 = vrcp.pop %v768
      %v913 = vmul.f32 %v768, %v912
      %v914 = vsub.f32 1.0, %v913
      %v915 = vmul.f32 %v912, %v914
      %v916 = vadd.f32 %v912, %v915
      %vm917 = vweird.f32 %v768
      %vm918 = vweird.f32 %v912
      %vm919 = vmor %vm917, %vm918
      %v920 = vsel %vm919, %v912, %v916
      %v921 = vand.u32 2147483647, %v768
      %vm922 = vcmp.eq.f32.partialorder %v921, 8.507059e+37
      %v923 = vand.u32 %v768, 2147483648
      %v924 = vor.u32 1.1754944e-38, %v923
      %v925 = vsel %vm922, %v924, %v920
      %v926 = vmul.f32 1.0, %v925
      %v927 = vrcp.pop %v769
      %v928 = vmul.f32 %v769, %v927
      %v929 = vsub.f32 1.0, %v928
      %v930 = vmul.f32 %v927, %v929
      %v931 = vadd.f32 %v927, %v930
      %vm932 = vweird.f32 %v769
      %vm933 = vweird.f32 %v927
      %vm934 = vmor %vm932, %vm933
      %v935 = vsel %vm934, %v927, %v931
      %v936 = vand.u32 2147483647, %v769
      %vm937 = vcmp.eq.f32.partialorder %v936, 8.507059e+37
      %v938 = vand.u32 %v769, 2147483648
      %v939 = vor.u32 1.1754944e-38, %v938
      %v940 = vsel %vm937, %v939, %v935
      %v941 = vmul.f32 1.0, %v940
      %v942 = vrcp.pop %v770
      %v943 = vmul.f32 %v770, %v942
      %v944 = vsub.f32 1.0, %v943
      %v945 = vmul.f32 %v942, %v944
      %v946 = vadd.f32 %v942, %v945
      %vm947 = vweird.f32 %v770
      %vm948 = vweird.f32 %v942
      %vm949 = vmor %vm947, %vm948
      %v950 = vsel %vm949, %v942, %v946
      %v951 = vand.u32 2147483647, %v770
      %vm952 = vcmp.eq.f32.partialorder %v951, 8.507059e+37
      %v953 = vand.u32 %v770, 2147483648
      %v954 = vor.u32 1.1754944e-38, %v953
      %v955 = vsel %vm952, %v954, %v950
      %v956 = vmul.f32 1.0, %v955
      %v957 = vrcp.pop %v771
      %v958 = vmul.f32 %v771, %v957
      %v959 = vsub.f32 1.0, %v958
      %v960 = vmul.f32 %v957, %v959
      %v961 = vadd.f32 %v957, %v960
      %vm962 = vweird.f32 %v771
      %vm963 = vweird.f32 %v957
      %vm964 = vmor %vm962, %vm963
      %v965 = vsel %vm964, %v957, %v961
      %v966 = vand.u32 2147483647, %v771
      %vm967 = vcmp.eq.f32.partialorder %v966, 8.507059e+37
      %v968 = vand.u32 %v771, 2147483648
      %v969 = vor.u32 1.1754944e-38, %v968
      %v970 = vsel %vm967, %v969, %v965
      %v971 = vmul.f32 1.0, %v970
      %v972 = vrcp.pop %v772
      %v973 = vmul.f32 %v772, %v972
      %v974 = vsub.f32 1.0, %v973
      %v975 = vmul.f32 %v972, %v974
      %v976 = vadd.f32 %v972, %v975
      %vm977 = vweird.f32 %v772
      %vm978 = vweird.f32 %v972
      %vm979 = vmor %vm977, %vm978
      %v980 = vsel %vm979, %v972, %v976
      %v981 = vand.u32 2147483647, %v772
      %vm982 = vcmp.eq.f32.partialorder %v981, 8.507059e+37
      %v983 = vand.u32 %v772, 2147483648
      %v984 = vor.u32 1.1754944e-38, %v983
      %v985 = vsel %vm982, %v984, %v980
      %v986 = vmul.f32 1.0, %v985
      %v987 = vrcp.pop %v773
      %v988 = vmul.f32 %v773, %v987
      %v989 = vsub.f32 1.0, %v988
      %v990 = vmul.f32 %v987, %v989
      %v991 = vadd.f32 %v987, %v990
      %vm992 = vweird.f32 %v773
      %vm993 = vweird.f32 %v987
      %vm994 = vmor %vm992, %vm993
      %v995 = vsel %vm994, %v987, %v991
      %v996 = vand.u32 2147483647, %v773
      %vm997 = vcmp.eq.f32.partialorder %v996, 8.507059e+37
      %v998 = vand.u32 %v773, 2147483648
      %v999 = vor.u32 1.1754944e-38, %v998
      %v1000 = vsel %vm997, %v999, %v995
      %v1001 = vmul.f32 1.0, %v1000
      %v1002 = vrcp.pop %v774
      %v1003 = vmul.f32 %v774, %v1002
      %v1004 = vsub.f32 1.0, %v1003
      %v1005 = vmul.f32 %v1002, %v1004
      %v1006 = vadd.f32 %v1002, %v1005
      %vm1007 = vweird.f32 %v774
      %vm1008 = vweird.f32 %v1002
      %vm1009 = vmor %vm1007, %vm1008
      %v1010 = vsel %vm1009, %v1002, %v1006
      %v1011 = vand.u32 2147483647, %v774
      %vm1012 = vcmp.eq.f32.partialorder %v1011, 8.507059e+37
      %v1013 = vand.u32 %v774, 2147483648
      %v1014 = vor.u32 1.1754944e-38, %v1013
      %v1015 = vsel %vm1012, %v1014, %v1010
      %v1016 = vmul.f32 1.0, %v1015
      %v1017 = vrcp.pop %v775
      %v1018 = vmul.f32 %v775, %v1017
      %v1019 = vsub.f32 1.0, %v1018
      %v1020 = vmul.f32 %v1017, %v1019
      %v1021 = vadd.f32 %v1017, %v1020
      %vm1022 = vweird.f32 %v775
      %vm1023 = vweird.f32 %v1017
      %vm1024 = vmor %vm1022, %vm1023
      %v1025 = vsel %vm1024, %v1017, %v1021
      %v1026 = vand.u32 2147483647, %v775
      %vm1027 = vcmp.eq.f32.partialorder %v1026, 8.507059e+37
      %v1028 = vand.u32 %v775, 2147483648
      %v1029 = vor.u32 1.1754944e-38, %v1028
      %v1030 = vsel %vm1027, %v1029, %v1025
      %v1031 = vmul.f32 1.0, %v1030
      %v1032 = vrcp.pop %v776
      %v1033 = vmul.f32 %v776, %v1032
      %v1034 = vsub.f32 1.0, %v1033
      %v1035 = vmul.f32 %v1032, %v1034
      %v1036 = vadd.f32 %v1032, %v1035
      %vm1037 = vweird.f32 %v776
      %vm1038 = vweird.f32 %v1032
      %vm1039 = vmor %vm1037, %vm1038
      %v1040 = vsel %vm1039, %v1032, %v1036
      %v1041 = vand.u32 2147483647, %v776
      %vm1042 = vcmp.eq.f32.partialorder %v1041, 8.507059e+37
      %v1043 = vand.u32 %v776, 2147483648
      %v1044 = vor.u32 1.1754944e-38, %v1043
      %v1045 = vsel %vm1042, %v1044, %v1040
      %v1046 = vmul.f32 1.0, %v1045
      %v1047 = vrcp.pop %v777
      %v1048 = vmul.f32 %v777, %v1047
      %v1049 = vsub.f32 1.0, %v1048
      %v1050 = vmul.f32 %v1047, %v1049
      %v1051 = vadd.f32 %v1047, %v1050
      %vm1052 = vweird.f32 %v777
      %vm1053 = vweird.f32 %v1047
      %vm1054 = vmor %vm1052, %vm1053
      %v1055 = vsel %vm1054, %v1047, %v1051
      %v1056 = vand.u32 2147483647, %v777
      %vm1057 = vcmp.eq.f32.partialorder %v1056, 8.507059e+37
      %v1058 = vand.u32 %v777, 2147483648
      %v1059 = vor.u32 1.1754944e-38, %v1058
      %v1060 = vsel %vm1057, %v1059, %v1055
      %v1061 = vmul.f32 1.0, %v1060
      %v1062 = vrcp.pop %v778
      %v1063 = vmul.f32 %v778, %v1062
      %v1064 = vsub.f32 1.0, %v1063
      %v1065 = vmul.f32 %v1062, %v1064
      %v1066 = vadd.f32 %v1062, %v1065
      %vm1067 = vweird.f32 %v778
      %vm1068 = vweird.f32 %v1062
      %vm1069 = vmor %vm1067, %vm1068
      %v1070 = vsel %vm1069, %v1062, %v1066
      %v1071 = vand.u32 2147483647, %v778
      %vm1072 = vcmp.eq.f32.partialorder %v1071, 8.507059e+37
      %v1073 = vand.u32 %v778, 2147483648
      %v1074 = vor.u32 1.1754944e-38, %v1073
      %v1075 = vsel %vm1072, %v1074, %v1070
      %v1076 = vmul.f32 1.0, %v1075
      %v1077 = vrcp.pop %v779
      %v1078 = vmul.f32 %v779, %v1077
      %v1079 = vsub.f32 1.0, %v1078
      %v1080 = vmul.f32 %v1077, %v1079
      %v1081 = vadd.f32 %v1077, %v1080
      %vm1082 = vweird.f32 %v779
      %vm1083 = vweird.f32 %v1077
      %vm1084 = vmor %vm1082, %vm1083
      %v1085 = vsel %vm1084, %v1077, %v1081
      %v1086 = vand.u32 2147483647, %v779
      %vm1087 = vcmp.eq.f32.partialorder %v1086, 8.507059e+37
      %v1088 = vand.u32 %v779, 2147483648
      %v1089 = vor.u32 1.1754944e-38, %v1088
      %v1090 = vsel %vm1087, %v1089, %v1085
      %v1091 = vmul.f32 1.0, %v1090
      %v1092 = vrcp.pop %v780
      %v1093 = vmul.f32 %v780, %v1092
      %v1094 = vsub.f32 1.0, %v1093
      %v1095 = vmul.f32 %v1092, %v1094
      %v1096 = vadd.f32 %v1092, %v1095
      %vm1097 = vweird.f32 %v780
      %vm1098 = vweird.f32 %v1092
      %vm1099 = vmor %vm1097, %vm1098
      %v1100 = vsel %vm1099, %v1092, %v1096
      %v1101 = vand.u32 2147483647, %v780
      %vm1102 = vcmp.eq.f32.partialorder %v1101, 8.507059e+37
      %v1103 = vand.u32 %v780, 2147483648
      %v1104 = vor.u32 1.1754944e-38, %v1103
      %v1105 = vsel %vm1102, %v1104, %v1100
      %v1106 = vmul.f32 1.0, %v1105
      %v1107 = vrcp.pop %v781
      %v1108 = vmul.f32 %v781, %v1107
      %v1109 = vsub.f32 1.0, %v1108
      %v1110 = vmul.f32 %v1107, %v1109
      %v1111 = vadd.f32 %v1107, %v1110
      %vm1112 = vweird.f32 %v781
      %vm1113 = vweird.f32 %v1107
      %vm1114 = vmor %vm1112, %vm1113
      %v1115 = vsel %vm1114, %v1107, %v1111
      %v1116 = vand.u32 2147483647, %v781
      %vm1117 = vcmp.eq.f32.partialorder %v1116, 8.507059e+37
      %v1118 = vand.u32 %v781, 2147483648
      %v1119 = vor.u32 1.1754944e-38, %v1118
      %v1120 = vsel %vm1117, %v1119, %v1115
      %v1121 = vmul.f32 1.0, %v1120
      %v1122 = vrcp.pop %v782
      %v1123 = vmul.f32 %v782, %v1122
      %v1124 = vsub.f32 1.0, %v1123
      %v1125 = vmul.f32 %v1122, %v1124
      %v1126 = vadd.f32 %v1122, %v1125
      %vm1127 = vweird.f32 %v782
      %vm1128 = vweird.f32 %v1122
      %vm1129 = vmor %vm1127, %vm1128
      %v1130 = vsel %vm1129, %v1122, %v1126
      %v1131 = vand.u32 2147483647, %v782
      %vm1132 = vcmp.eq.f32.partialorder %v1131, 8.507059e+37
      %v1133 = vand.u32 %v782, 2147483648
      %v1134 = vor.u32 1.1754944e-38, %v1133
      %v1135 = vsel %vm1132, %v1134, %v1130
      %v1136 = vmul.f32 1.0, %v1135
      %v1137 = vrcp.pop %v783
      %v1138 = vmul.f32 %v783, %v1137
      %v1139 = vsub.f32 1.0, %v1138
      %v1140 = vmul.f32 %v1137, %v1139
      %v1141 = vadd.f32 %v1137, %v1140
      %vm1142 = vweird.f32 %v783
      %vm1143 = vweird.f32 %v1137
      %vm1144 = vmor %vm1142, %vm1143
      %v1145 = vsel %vm1144, %v1137, %v1141
      %v1146 = vand.u32 2147483647, %v783
      %vm1147 = vcmp.eq.f32.partialorder %v1146, 8.507059e+37
      %v1148 = vand.u32 %v783, 2147483648
      %v1149 = vor.u32 1.1754944e-38, %v1148
      %v1150 = vsel %vm1147, %v1149, %v1145
      %v1151 = vmul.f32 1.0, %v1150
      %v1152 = vrcp.pop %v784
      %v1153 = vmul.f32 %v784, %v1152
      %v1154 = vsub.f32 1.0, %v1153
      %v1155 = vmul.f32 %v1152, %v1154
      %v1156 = vadd.f32 %v1152, %v1155
      %vm1157 = vweird.f32 %v784
      %vm1158 = vweird.f32 %v1152
      %vm1159 = vmor %vm1157, %vm1158
      %v1160 = vsel %vm1159, %v1152, %v1156
      %v1161 = vand.u32 2147483647, %v784
      %vm1162 = vcmp.eq.f32.partialorder %v1161, 8.507059e+37
      %v1163 = vand.u32 %v784, 2147483648
      %v1164 = vor.u32 1.1754944e-38, %v1163
      %v1165 = vsel %vm1162, %v1164, %v1160
      %v1166 = vmul.f32 1.0, %v1165
      %v1167 = vrcp.pop %v785
      %v1168 = vmul.f32 %v785, %v1167
      %v1169 = vsub.f32 1.0, %v1168
      %v1170 = vmul.f32 %v1167, %v1169
      %v1171 = vadd.f32 %v1167, %v1170
      %vm1172 = vweird.f32 %v785
      %vm1173 = vweird.f32 %v1167
      %vm1174 = vmor %vm1172, %vm1173
      %v1175 = vsel %vm1174, %v1167, %v1171
      %v1176 = vand.u32 2147483647, %v785
      %vm1177 = vcmp.eq.f32.partialorder %v1176, 8.507059e+37
      %v1178 = vand.u32 %v785, 2147483648
      %v1179 = vor.u32 1.1754944e-38, %v1178
      %v1180 = vsel %vm1177, %v1179, %v1175
      %v1181 = vmul.f32 1.0, %v1180
      %v1182 = vrcp.pop %v786
      %v1183 = vmul.f32 %v786, %v1182
      %v1184 = vsub.f32 1.0, %v1183
      %v1185 = vmul.f32 %v1182, %v1184
      %v1186 = vadd.f32 %v1182, %v1185
      %vm1187 = vweird.f32 %v786
      %vm1188 = vweird.f32 %v1182
      %vm1189 = vmor %vm1187, %vm1188
      %v1190 = vsel %vm1189, %v1182, %v1186
      %v1191 = vand.u32 2147483647, %v786
      %vm1192 = vcmp.eq.f32.partialorder %v1191, 8.507059e+37
      %v1193 = vand.u32 %v786, 2147483648
      %v1194 = vor.u32 1.1754944e-38, %v1193
      %v1195 = vsel %vm1192, %v1194, %v1190
      %v1196 = vmul.f32 1.0, %v1195
      %v1197 = vrcp.pop %v787
      %v1198 = vmul.f32 %v787, %v1197
      %v1199 = vsub.f32 1.0, %v1198
      %v1200 = vmul.f32 %v1197, %v1199
      %v1201 = vadd.f32 %v1197, %v1200
      %vm1202 = vweird.f32 %v787
      %vm1203 = vweird.f32 %v1197
      %vm1204 = vmor %vm1202, %vm1203
      %v1205 = vsel %vm1204, %v1197, %v1201
      %v1206 = vand.u32 2147483647, %v787
      %vm1207 = vcmp.eq.f32.partialorder %v1206, 8.507059e+37
      %v1208 = vand.u32 %v787, 2147483648
      %v1209 = vor.u32 1.1754944e-38, %v1208
      %v1210 = vsel %vm1207, %v1209, %v1205
      %v1211 = vmul.f32 1.0, %v1210
      %v1212 = vrcp.pop %v788
      %v1213 = vmul.f32 %v788, %v1212
      %v1214 = vsub.f32 1.0, %v1213
      %v1215 = vmul.f32 %v1212, %v1214
      %v1216 = vadd.f32 %v1212, %v1215
      %vm1217 = vweird.f32 %v788
      %vm1218 = vweird.f32 %v1212
      %vm1219 = vmor %vm1217, %vm1218
      %v1220 = vsel %vm1219, %v1212, %v1216
      %v1221 = vand.u32 2147483647, %v788
      %vm1222 = vcmp.eq.f32.partialorder %v1221, 8.507059e+37
      %v1223 = vand.u32 %v788, 2147483648
      %v1224 = vor.u32 1.1754944e-38, %v1223
      %v1225 = vsel %vm1222, %v1224, %v1220
      %v1226 = vmul.f32 1.0, %v1225
      %v1227 = vrcp.pop %v789
      %v1228 = vmul.f32 %v789, %v1227
      %v1229 = vsub.f32 1.0, %v1228
      %v1230 = vmul.f32 %v1227, %v1229
      %v1231 = vadd.f32 %v1227, %v1230
      %vm1232 = vweird.f32 %v789
      %vm1233 = vweird.f32 %v1227
      %vm1234 = vmor %vm1232, %vm1233
      %v1235 = vsel %vm1234, %v1227, %v1231
      %v1236 = vand.u32 2147483647, %v789
      %vm1237 = vcmp.eq.f32.partialorder %v1236, 8.507059e+37
      %v1238 = vand.u32 %v789, 2147483648
      %v1239 = vor.u32 1.1754944e-38, %v1238
      %v1240 = vsel %vm1237, %v1239, %v1235
      %v1241 = vmul.f32 1.0, %v1240
      %v1242 = vrcp.pop %v790
      %v1243 = vmul.f32 %v790, %v1242
      %v1244 = vsub.f32 1.0, %v1243
      %v1245 = vmul.f32 %v1242, %v1244
      %v1246 = vadd.f32 %v1242, %v1245
      %vm1247 = vweird.f32 %v790
      %vm1248 = vweird.f32 %v1242
      %vm1249 = vmor %vm1247, %vm1248
      %v1250 = vsel %vm1249, %v1242, %v1246
      %v1251 = vand.u32 2147483647, %v790
      %vm1252 = vcmp.eq.f32.partialorder %v1251, 8.507059e+37
      %v1253 = vand.u32 %v790, 2147483648
      %v1254 = vor.u32 1.1754944e-38, %v1253
      %v1255 = vsel %vm1252, %v1254, %v1250
      %v1256 = vmul.f32 1.0, %v1255
      %v1257 = vrcp.pop %v791
      %v1258 = vmul.f32 %v791, %v1257
      %v1259 = vsub.f32 1.0, %v1258
      %v1260 = vmul.f32 %v1257, %v1259
      %v1261 = vadd.f32 %v1257, %v1260
      %vm1262 = vweird.f32 %v791
      %vm1263 = vweird.f32 %v1257
      %vm1264 = vmor %vm1262, %vm1263
      %v1265 = vsel %vm1264, %v1257, %v1261
      %v1266 = vand.u32 2147483647, %v791
      %vm1267 = vcmp.eq.f32.partialorder %v1266, 8.507059e+37
      %v1268 = vand.u32 %v791, 2147483648
      %v1269 = vor.u32 1.1754944e-38, %v1268
      %v1270 = vsel %vm1267, %v1269, %v1265
      %v1271 = vmul.f32 1.0, %v1270
      %1272 = vst [vmem:[%s175] sm:$0xff] %v806
      %1273 = vst [vmem:[%s175 + $0x8] sm:$0xff] %v821
      %1274 = vst [vmem:[%s175 + $0x10] sm:$0xff] %v836
      %1275 = vst [vmem:[%s175 + $0x18] sm:$0xff] %v851
      %1276 = vst [vmem:[%s175 + $0x20] sm:$0xff] %v866
      %1277 = vst [vmem:[%s175 + $0x28] sm:$0xff] %v881
      %1278 = vst [vmem:[%s175 + $0x30] sm:$0xff] %v896
      %1279 = vst [vmem:[%s175 + $0x38] sm:$0xff] %v911
      %1280 = vst [vmem:[%s175 + $0x40] sm:$0xff] %v926
      %1281 = vst [vmem:[%s175 + $0x48] sm:$0xff] %v941
      %1282 = vst [vmem:[%s175 + $0x50] sm:$0xff] %v956
      %1283 = vst [vmem:[%s175 + $0x58] sm:$0xff] %v971
      %1284 = vst [vmem:[%s175 + $0x60] sm:$0xff] %v986
      %1285 = vst [vmem:[%s175 + $0x68] sm:$0xff] %v1001
      %1286 = vst [vmem:[%s175 + $0x70] sm:$0xff] %v1016
      %1287 = vst [vmem:[%s175 + $0x78] sm:$0xff] %v1031
      %1288 = vst [vmem:[%s175 + $0x80] sm:$0xff] %v1046
      %1289 = vst [vmem:[%s175 + $0x88] sm:$0xff] %v1061
      %1290 = vst [vmem:[%s175 + $0x90] sm:$0xff] %v1076
      %1291 = vst [vmem:[%s175 + $0x98] sm:$0xff] %v1091
      %1292 = vst [vmem:[%s175 + $0xa0] sm:$0xff] %v1106
      %1293 = vst [vmem:[%s175 + $0xa8] sm:$0xff] %v1121
      %1294 = vst [vmem:[%s175 + $0xb0] sm:$0xff] %v1136
      %1295 = vst [vmem:[%s175 + $0xb8] sm:$0xff] %v1151
      %1296 = vst [vmem:[%s175 + $0xc0] sm:$0xff] %v1166
      %1297 = vst [vmem:[%s175 + $0xc8] sm:$0xff] %v1181
      %1298 = vst [vmem:[%s175 + $0xd0] sm:$0xff] %v1196
      %1299 = vst [vmem:[%s175 + $0xd8] sm:$0xff] %v1211
      %1300 = vst [vmem:[%s175 + $0xe0] sm:$0xff] %v1226
      %1301 = vst [vmem:[%s175 + $0xe8] sm:$0xff] %v1241
      %1302 = vst [vmem:[%s175 + $0xf0] sm:$0xff] %v1256
      %1303 = vst [vmem:[%s175 + $0xf8] sm:$0xff] %v1271
      %s1304 = smul.u32 32, %s14
      %p1305 = scmp.lt.s32.totalorder %s1304, 63
      %s1306 = scalar_select %p1305, %s1304, 63
      %s1307 = smul.addr %s1306, 8
      %s1308 = scalar_lea.vmem %s3, %s1307
      // Predicated region
      $region33: #{_lambda_.11} parent=31 // pred_check
        %p1309 = pneg %p100
      $region34: #{_lambda_.11} parent=31 // pred_check_branch
        %1311 = sbr.rel (%p1309) target = $region36
      $region35: #{_lambda_.11} parent=31 // pred_region
        %s1312 = smul.u32 32, %s14
      $region36: #{_lambda_.11} parent=31 // pred_fallthru
        _
    $region32: #{_lambda_.11} parent=5 // pred_fallthru
      _
    %p1313 = scmp.le.s32.totalorder 2, %s9
    // Predicated region
    $region37: #{_lambda_.11} parent=5 // pred_check
      %p1314 = pneg %p1313
    $region38: #{_lambda_.11} parent=5 // pred_check_branch
      %1316 = sbr.rel (%p1314) target = $region40
    $region39: #{_lambda_.11} parent=5 // pred_region
      %s1317 = ssub.s32 %s9, 2
      // Predicated region
      $region41: #{_lambda_.11} parent=39 // pred_check
        %p1318 = pneg %p106
      $region42: #{_lambda_.11} parent=39 // pred_check_branch
        %1320 = sbr.rel (%p1318) target = $region44
      $region43: #{_lambda_.11} parent=39 // pred_region
        %s1321 = smul.u32 32, %s15
        %p1322 = scmp.lt.s32.totalorder %s1321, 63
        %s1323 = scalar_select %p1322, %s1321, 63
        %s1324 = smul.addr %s1323, 8
        %s1325 = scalar_lea.vmem %s3, %s1324
      $region44: #{_lambda_.11} parent=39 // pred_fallthru
        _
    $region40: #{_lambda_.11} parent=5 // pred_fallthru
      _
  $region6: #{_lambda_.11} parent=0 // loop_footer
    %s13 = sadd.s32 1, %s9
  $region7: #{_lambda_.11} parent=0 // loop_footer_branch
    %8 = sbr.rel target = $region3
  $region8: #{_lambda_.11} parent=0 // loop_exit
    _

</llo_original>
